<compile_context>
chip_gen: v7x
topology: tpu7x:2x2x1
jax: 0.10.0
libtpu: 0.0.40
codegen_flags: <defaults>
</compile_context>

<pallas_src>
import functools

import jax
import jax.numpy as jnp
from jax import lax
from jax.experimental import pallas as pl
from jax.experimental.pallas import tpu as pltpu

C1 = 64             # init_channels (conv1 out channels, layer1 width)
K1 = 7              # conv1 kernel size
L_IN = 512          # input length (per module docstring)
L_MID = L_IN // 2   # 256 after conv1 stride 2
L_OUT = L_MID // 2  # 128 after maxpool stride 2
N_CONV = 6          # layer1 of resnet34: 3 BasicBlocks x 2 convs each
PAD_ROWS = 16       # bias row + zero pad -> contraction dim stays 16-aligned for bf16
KC = 3 * C1 + PAD_ROWS  # 208: [left tap | center tap | right tap | bias | zeros]


# ------------------------- fused kernel -------------------------

def _encoder_kernel(xe_ref, xo_ref, w1_ref, wcat_ref, o_ref, *, split_k):
    # xe_ref/xo_ref: [Kp, N] bf16  im2col of conv1 at even/odd output positions,
    #                              N = Bblk*L_OUT lanes, lane = b_local*L_OUT + position.
    # w1_ref:        [C1, Kp] bf16 flattened conv1 weight (zero-padded contraction).
    # wcat_ref:      [N_CONV, C1, KC] bf16 layer1 weights, BN scale + bias folded in.
    # o_ref:         [C1, N] f32
    N = o_ref.shape[-1]

    # conv1 + ReLU: two bf16 matmuls (even / odd output positions), f32 accumulation.
    ye = jnp.maximum(jnp.dot(w1_ref[...], xe_ref[...], preferred_element_type=jnp.float32), 0.0)
    yo = jnp.maximum(jnp.dot(w1_ref[...], xo_ref[...], preferred_element_type=jnp.float32), 0.0)

    # Hoisted edge masks as f32 {0,1}; modulo form so shifts never cross batch boundaries.
    lane = lax.broadcasted_iota(jnp.int32, (C1, N), 1) % L_OUT
    not_first = (lane != 0).astype(jnp.float32)           # zero at position 0
    not_last = (lane != L_OUT - 1).astype(jnp.float32)    # zero at position L_OUT-1

    # MaxPool1d(k=3, s=2, p=1): out[l] = max(y[2l-1], y[2l], y[2l+1]).
    # 0-masking at l=0 is equivalent to -inf padding because y >= 0 after ReLU.
    yo_prev = pltpu.roll(yo, shift=1, axis=1) * not_first  # y[2l-1]
    x = jnp.maximum(jnp.maximum(yo_prev, ye), yo)          # [C1, N] f32

    if not split_k:
        # ones row (pairs with the folded bias column) + zero pad rows, hoisted once.
        ones_blk = jnp.concatenate(
            [jnp.ones((1, N), jnp.bfloat16), jnp.zeros((PAD_ROWS - 1, N), jnp.bfloat16)], axis=0)

    def conv3(v, idx):
        # 1D conv, kernel 3, stride 1, pad 1; BN scale+bias pre-folded into wcat.
        v_l = (pltpu.roll(v, shift=1, axis=1) * not_first).astype(jnp.bfloat16)      # v[:, l-1]
        v_r = (pltpu.roll(v, shift=N - 1, axis=1) * not_last).astype(jnp.bfloat16)   # v[:, l+1]
        v_c = v.astype(jnp.bfloat16)
        w = wcat_ref[idx]                                                            # [C1, KC]
        if split_k:
            # v5e: MXU is 128-deep -> three K=64 accumulating dots, no 24-vreg concatenate.
            out = jnp.dot(w[:, 0:C1], v_l, preferred_element_type=jnp.float32)
            out = out + jnp.dot(w[:, C1:2 * C1], v_c, preferred_element_type=jnp.float32)
            out = out + jnp.dot(w[:, 2 * C1:3 * C1], v_r, preferred_element_type=jnp.float32)
            return out + w[:, 3 * C1:3 * C1 + 1].astype(jnp.float32)                 # bias column
        # v6e/v7x: single K=208 matmul; bias comes out of the MXU via the ones row.
        vcat = jnp.concatenate([v_l, v_c, v_r, ones_blk], axis=0)                    # [KC, N]
        return jnp.dot(w, vcat, preferred_element_type=jnp.float32)

    # layer1: 3 BasicBlocks (loop unrolled at trace time; idx is static)
    for blk in range(3):
        identity = x
        out = jnp.maximum(conv3(x, 2 * blk), 0.0)   # conv -> BN(folded) -> ReLU
        out = conv3(out, 2 * blk + 1)               # conv -> BN(folded)
        x = jnp.maximum(out + identity, 0.0)        # + identity -> ReLU

    o_ref[...] = x


# ------------------------- wrapper -------------------------

def _pick_bblk(B):
    # Keep >= 2 grid steps so v7x's two TensorCores both get work; cap lane width (vregs/VMEM).
    if B <= 2:
        return 1
    return min(4, pl.cdiv(B, 2))


def encoder_forward(x, params, *, bblk=None, split_k=None):
    """x: [B, C_in, 512] float32  ->  [B, 64, 128] float32"""
    B, Cin, L = x.shape
    assert L == L_IN
    if split_k is None:
        # v5e/v5p: 128-deep MXU -> prefer three K=64 accumulating dots over the K=208 concat.
        split_k = "v5" in jax.devices()[0].device_kind.lower()
    if bblk is None:
        bblk = _pick_bblk(B)
    grid_b = pl.cdiv(B, bblk)
    Bp = grid_b * bblk
    xb = jnp.pad(x, ((0, Bp - B), (0, 0), (0, 0)))

    w1 = params["conv1_w"]         # [C1, Cin, K1]
    wl = params["layer1_w"]        # [N_CONV, C1(out), C1(in), 3]
    bn_scale = params["bn_scale"]  # [N_CONV, C1]
    bn_bias = params["bn_bias"]    # [N_CONV, C1]

    # --- glue: im2col for conv1 (k=7, stride 2, pad 3); batch packed along lanes,
    #     conv1 output positions split into even / odd operands for the in-kernel maxpool ---
    Kdim = Cin * K1
    Kp = ((Kdim + 7) // 8) * 8
    xp = jnp.pad(xb, ((0, 0), (0, 0), (3, 3)))                                    # [Bp, Cin, 518]
    cols = jnp.stack([xp[:, :, k:k + 2 * L_MID:2] for k in range(K1)], axis=2)    # [Bp, Cin, K1, 256]
    cols = cols.reshape(Bp, Kdim, L_MID)                                          # [Bp, Kdim, 256]

    def pack(c):  # [Bp, Kdim, L_OUT] -> [Kp, Bp*L_OUT] bf16, lane = b*L_OUT + position
        c = jnp.transpose(c, (1, 0, 2)).reshape(Kdim, Bp * L_OUT)
        return jnp.pad(c, ((0, Kp - Kdim), (0, 0))).astype(jnp.bfloat16)

    xe = pack(cols[:, :, 0::2])   # conv1 outputs at even positions
    xo = pack(cols[:, :, 1::2])   # conv1 outputs at odd positions
    w1f = jnp.pad(w1.reshape(C1, Kdim), ((0, 0), (0, Kp - Kdim))).astype(jnp.bfloat16)

    # --- fold BN scale into layer1 weights, append BN bias column + zero pad (K = 208) ---
    wl_scaled = wl * bn_scale[:, :, None, None]
    # wtaps[n][o, k*C1 + i] = wl_scaled[n][o, i, k]  (matches [v_l; v; v_r] row order)
    wtaps = jnp.transpose(wl_scaled, (0, 1, 3, 2)).reshape(N_CONV, C1, 3 * C1)
    wcat = jnp.concatenate(
        [wtaps, bn_bias[:, :, None], jnp.zeros((N_CONV, C1, PAD_ROWS - 1), wtaps.dtype)],
        axis=-1).astype(jnp.bfloat16)                                              # [N_CONV, C1, KC]

    Nblk = bblk * L_OUT
    out = pl.pallas_call(
        functools.partial(_encoder_kernel, split_k=split_k),
        out_shape=jax.ShapeDtypeStruct((C1, Bp * L_OUT), jnp.float32),
        grid=(grid_b,),
        in_specs=[pl.BlockSpec((Kp, Nblk), lambda g: (0, g)),
                  pl.BlockSpec((Kp, Nblk), lambda g: (0, g)),
                  pl.BlockSpec((C1, Kp), lambda g: (0, 0)),
                  pl.BlockSpec((N_CONV, C1, KC), lambda g: (0, 0, 0))],
        out_specs=pl.BlockSpec((C1, Nblk), lambda g: (0, g)),
        compiler_params=pltpu.CompilerParams(dimension_semantics=("parallel",)),
    )(xe, xo, w1f, wcat)

    # [C1, Bp*L_OUT] with lane = b*L_OUT + l  ->  [B, C1, L_OUT]
    return out.reshape(C1, Bp, L_OUT).transpose(1, 0, 2)[:B]


# ------------------------- pure-JAX reference (f32) -------------------------

def ref_forward(x, params):
    dn = lax.ConvDimensionNumbers(lhs_spec=(0, 1, 2), rhs_spec=(0, 1, 2), out_spec=(0, 1, 2))
    y = lax.conv_general_dilated(x, params["conv1_w"], (2,), ((3, 3),), dimension_numbers=dn)
    y = jnp.maximum(y, 0.0)
    y = lax.reduce_window(y, -jnp.inf, lax.max, (1, 1, 3), (1, 1, 2),
                          ((0, 0), (0, 0), (1, 1)))
    wl, scale, bias = params["layer1_w"], params["bn_scale"], params["bn_bias"]
    for blk in range(3):
        ident = y
        o = lax.conv_general_dilated(y, wl[2 * blk], (1,), ((1, 1),), dimension_numbers=dn)
        o = o * scale[2 * blk][None, :, None] + bias[2 * blk][None, :, None]
        o = jnp.maximum(o, 0.0)
        o = lax.conv_general_dilated(o, wl[2 * blk + 1], (1,), ((1, 1),), dimension_numbers=dn)
        o = o * scale[2 * blk + 1][None, :, None] + bias[2 * blk + 1][None, :, None]
        y = jnp.maximum(o + ident, 0.0)
    return y


# ------------------------- main -------------------------

if __name__ == "__main__":
    B, Cin = 8, 1   # batch=8 (exercises batch packing: Bblk=4, grid=2), num_lead=1, L=512
    key = jax.random.PRNGKey(0)
    kx, k1, k2, k3, k4, k5, k6 = jax.random.split(key, 7)

    x = jax.random.normal(kx, (B, Cin, L_IN), jnp.float32)

    conv1_w = 0.1 * jax.random.normal(k1, (C1, Cin, K1), jnp.float32)
    layer1_w = 0.07 * jax.random.normal(k2, (N_CONV, C1, C1, 3), jnp.float32)
    gamma = 1.0 + 0.1 * jax.random.normal(k3, (N_CONV, C1), jnp.float32)
    beta = 0.1 * jax.random.normal(k4, (N_CONV, C1), jnp.float32)
    rmean = 0.1 * jax.random.normal(k5, (N_CONV, C1), jnp.float32)
    rvar = 1.0 + jax.random.uniform(k6, (N_CONV, C1), jnp.float32)
    eps = 1e-5
    bn_scale = gamma / jnp.sqrt(rvar + eps)
    bn_bias = beta - rmean * bn_scale

    params = {"conv1_w": conv1_w, "layer1_w": layer1_w,
              "bn_scale": bn_scale, "bn_bias": bn_bias}

    out = jax.block_until_ready(encoder_forward(x, params))
    ref = jax.block_until_ready(ref_forward(x, params))

    assert out.shape == (B, C1, L_OUT), out.shape
    # Tolerance accounts for bf16 MXU operands (f32 accumulation) vs the all-f32 reference;
    # structural bugs produce errors O(0.1-1) and would still trip this.
    max_err = float(jnp.max(jnp.abs(out - ref)))
    assert max_err < 5e-2, f"mismatch vs reference: max abs err = {max_err}"

    print("KERNEL_OK")
</pallas_src>

<mosaic_0001>
module attributes {stable_mosaic.version = 11 : i64} {
  func.func @_encoder_kernel(%arg0: i32, %arg1: memref<8x512xbf16, #tpu.memory_space<vmem>>, %arg2: memref<8x512xbf16, #tpu.memory_space<vmem>>, %arg3: memref<64x8xbf16, #tpu.memory_space<vmem>>, %arg4: memref<6x64x208xbf16, #tpu.memory_space<vmem>>, %arg5: memref<64x512xf32, #tpu.memory_space<vmem>>) attributes {dimension_semantics = [#tpu.dimension_semantics<parallel>], iteration_bounds = array<i64: 2>, scalar_prefetch = 0 : i64, scratch_operands = 0 : i64, tpu.core_type = #tpu.core_type<tc>, window_params = [{transform_indices = @transform_0, window_bounds = array<i64: 8, 512>}, {transform_indices = @transform_1, window_bounds = array<i64: 8, 512>}, {pipeline_mode = #tpu.pipeline_mode<synchronous>, transform_indices = @transform_2, window_bounds = array<i64: 64, 8>}, {pipeline_mode = #tpu.pipeline_mode<synchronous>, transform_indices = @transform_3, window_bounds = array<i64: 6, 64, 208>}, {transform_indices = @transform_4, window_bounds = array<i64: 64, 512>}]} {
    %c0 = arith.constant 0 : index
    %c0_0 = arith.constant 0 : index
    %0 = vector.load %arg3[%c0, %c0_0] : memref<64x8xbf16, #tpu.memory_space<vmem>>, vector<64x8xbf16>
    %c0_1 = arith.constant 0 : index
    %c0_2 = arith.constant 0 : index
    %1 = vector.load %arg1[%c0_1, %c0_2] : memref<8x512xbf16, #tpu.memory_space<vmem>>, vector<8x512xbf16>
    %cst = arith.constant dense<0.000000e+00> : vector<64x512xf32>
    %2 = tpu.matmul %0, %1, %cst {dimension_numbers = #tpu.dot_dimension_numbers<[1], [0], [0], [1], [0, 0, 1, 1], [], []>} : vector<64x8xbf16>, vector<8x512xbf16>, vector<64x512xf32> -> vector<64x512xf32>
    %cst_3 = arith.constant 0.000000e+00 : f32
    %3 = vector.broadcast %cst_3 : f32 to vector<64x512xf32>
    %4 = arith.maximumf %2, %3 : vector<64x512xf32>
    %c0_4 = arith.constant 0 : index
    %c0_5 = arith.constant 0 : index
    %5 = vector.load %arg3[%c0_4, %c0_5] : memref<64x8xbf16, #tpu.memory_space<vmem>>, vector<64x8xbf16>
    %c0_6 = arith.constant 0 : index
    %c0_7 = arith.constant 0 : index
    %6 = vector.load %arg2[%c0_6, %c0_7] : memref<8x512xbf16, #tpu.memory_space<vmem>>, vector<8x512xbf16>
    %cst_8 = arith.constant dense<0.000000e+00> : vector<64x512xf32>
    %7 = tpu.matmul %5, %6, %cst_8 {dimension_numbers = #tpu.dot_dimension_numbers<[1], [0], [0], [1], [0, 0, 1, 1], [], []>} : vector<64x8xbf16>, vector<8x512xbf16>, vector<64x512xf32> -> vector<64x512xf32>
    %cst_9 = arith.constant 0.000000e+00 : f32
    %8 = vector.broadcast %cst_9 : f32 to vector<64x512xf32>
    %9 = arith.maximumf %7, %8 : vector<64x512xf32>
    %10 = tpu.iota {dimensions = array<i32: 1>} : vector<64x512xi32>
    %c128_i32 = arith.constant 128 : i32
    %c0_i32 = arith.constant 0 : i32
    %11 = arith.cmpi eq, %c128_i32, %c0_i32 : i32
    %c1_i32 = arith.constant 1 : i32
    %12 = arith.select %11, %c1_i32, %c128_i32 : i32
    %13 = vector.broadcast %12 : i32 to vector<64x512xi32>
    %14 = arith.remsi %10, %13 : vector<64x512xi32>
    %c0_i32_10 = arith.constant 0 : i32
    %15 = vector.broadcast %c0_i32_10 : i32 to vector<64x512xi32>
    %16 = arith.cmpi ne, %14, %15 : vector<64x512xi32>
    %c0_i32_11 = arith.constant 0 : i32
    %17 = vector.broadcast %c0_i32_11 : i32 to vector<64x512xi32>
    %18 = arith.cmpi slt, %14, %17 : vector<64x512xi32>
    %c0_i32_12 = arith.constant 0 : i32
    %19 = arith.cmpi slt, %12, %c0_i32_12 : i32
    %20 = vector.broadcast %19 : i1 to vector<64x512xi1>
    %21 = vector.broadcast %20 : vector<64x512xi1> to vector<64x512xi1>
    %22 = arith.xori %18, %21 : vector<64x512xi1>
    %23 = arith.andi %22, %16 : vector<64x512xi1>
    %24 = vector.broadcast %12 : i32 to vector<64x512xi32>
    %25 = arith.addi %14, %24 : vector<64x512xi32>
    %26 = arith.select %23, %25, %14 : vector<64x512xi1>, vector<64x512xi32>
    %c0_i32_13 = arith.constant 0 : i32
    %27 = vector.broadcast %c0_i32_13 : i32 to vector<64x512xi32>
    %28 = arith.cmpi ne, %26, %27 : vector<64x512xi32>
    %29 = arith.extui %28 : vector<64x512xi1> to vector<64x512xi32>
    %30 = arith.sitofp %29 : vector<64x512xi32> to vector<64x512xf32>
    %c127_i32 = arith.constant 127 : i32
    %31 = vector.broadcast %c127_i32 : i32 to vector<64x512xi32>
    %32 = arith.cmpi ne, %26, %31 : vector<64x512xi32>
    %33 = arith.extui %32 : vector<64x512xi1> to vector<64x512xi32>
    %34 = arith.sitofp %33 : vector<64x512xi32> to vector<64x512xf32>
    %c1_i32_14 = arith.constant 1 : i32
    %35 = tpu.dynamic_rotate %9 by %c1_i32_14 dim 1 : vector<64x512xf32>, i32 -> vector<64x512xf32>
    %36 = arith.mulf %35, %30 : vector<64x512xf32>
    %37 = arith.maximumf %36, %4 : vector<64x512xf32>
    %38 = arith.maximumf %37, %9 : vector<64x512xf32>
    %cst_15 = arith.constant 1.000000e+00 : bf16
    %39 = vector.broadcast %cst_15 : bf16 to vector<1x512xbf16>
    %cst_16 = arith.constant 0.000000e+00 : bf16
    %40 = vector.broadcast %cst_16 : bf16 to vector<15x512xbf16>
    %41 = tpu.concatenate %39, %40 in 0 : vector<1x512xbf16>, vector<15x512xbf16> -> vector<16x512xbf16>
    %c1_i32_17 = arith.constant 1 : i32
    %42 = tpu.dynamic_rotate %38 by %c1_i32_17 dim 1 : vector<64x512xf32>, i32 -> vector<64x512xf32>
    %43 = arith.mulf %42, %30 : vector<64x512xf32>
    %44 = arith.truncf %43 : vector<64x512xf32> to vector<64x512xbf16>
    %c511_i32 = arith.constant 511 : i32
    %45 = tpu.dynamic_rotate %38 by %c511_i32 dim 1 : vector<64x512xf32>, i32 -> vector<64x512xf32>
    %46 = arith.mulf %45, %34 : vector<64x512xf32>
    %47 = arith.truncf %46 : vector<64x512xf32> to vector<64x512xbf16>
    %48 = arith.truncf %38 : vector<64x512xf32> to vector<64x512xbf16>
    %c0_18 = arith.constant 0 : index
    %c0_19 = arith.constant 0 : index
    %c0_20 = arith.constant 0 : index
    %49 = vector.load %arg4[%c0_18, %c0_19, %c0_20] : memref<6x64x208xbf16, #tpu.memory_space<vmem>>, vector<1x64x208xbf16>
    %50 = vector.shape_cast %49 : vector<1x64x208xbf16> to vector<64x208xbf16>
    %51 = tpu.concatenate %44, %48, %47, %41 in 0 : vector<64x512xbf16>, vector<64x512xbf16>, vector<64x512xbf16>, vector<16x512xbf16> -> vector<208x512xbf16>
    %cst_21 = arith.constant dense<0.000000e+00> : vector<64x512xf32>
    %52 = tpu.matmul %50, %51, %cst_21 {dimension_numbers = #tpu.dot_dimension_numbers<[1], [0], [0], [1], [0, 0, 1, 1], [], []>} : vector<64x208xbf16>, vector<208x512xbf16>, vector<64x512xf32> -> vector<64x512xf32>
    %cst_22 = arith.constant 0.000000e+00 : f32
    %53 = vector.broadcast %cst_22 : f32 to vector<64x512xf32>
    %54 = arith.maximumf %52, %53 : vector<64x512xf32>
    %c1_i32_23 = arith.constant 1 : i32
    %55 = tpu.dynamic_rotate %54 by %c1_i32_23 dim 1 : vector<64x512xf32>, i32 -> vector<64x512xf32>
    %56 = arith.mulf %55, %30 : vector<64x512xf32>
    %57 = arith.truncf %56 : vector<64x512xf32> to vector<64x512xbf16>
    %c511_i32_24 = arith.constant 511 : i32
    %58 = tpu.dynamic_rotate %54 by %c511_i32_24 dim 1 : vector<64x512xf32>, i32 -> vector<64x512xf32>
    %59 = arith.mulf %58, %34 : vector<64x512xf32>
    %60 = arith.truncf %59 : vector<64x512xf32> to vector<64x512xbf16>
    %61 = arith.truncf %54 : vector<64x512xf32> to vector<64x512xbf16>
    %c1 = arith.constant 1 : index
    %c0_25 = arith.constant 0 : index
    %c0_26 = arith.constant 0 : index
    %62 = vector.load %arg4[%c1, %c0_25, %c0_26] : memref<6x64x208xbf16, #tpu.memory_space<vmem>>, vector<1x64x208xbf16>
    %63 = vector.shape_cast %62 : vector<1x64x208xbf16> to vector<64x208xbf16>
    %64 = tpu.concatenate %57, %61, %60, %41 in 0 : vector<64x512xbf16>, vector<64x512xbf16>, vector<64x512xbf16>, vector<16x512xbf16> -> vector<208x512xbf16>
    %cst_27 = arith.constant dense<0.000000e+00> : vector<64x512xf32>
    %65 = tpu.matmul %63, %64, %cst_27 {dimension_numbers = #tpu.dot_dimension_numbers<[1], [0], [0], [1], [0, 0, 1, 1], [], []>} : vector<64x208xbf16>, vector<208x512xbf16>, vector<64x512xf32> -> vector<64x512xf32>
    %66 = arith.addf %65, %38 : vector<64x512xf32>
    %cst_28 = arith.constant 0.000000e+00 : f32
    %67 = vector.broadcast %cst_28 : f32 to vector<64x512xf32>
    %68 = arith.maximumf %66, %67 : vector<64x512xf32>
    %c1_i32_29 = arith.constant 1 : i32
    %69 = tpu.dynamic_rotate %68 by %c1_i32_29 dim 1 : vector<64x512xf32>, i32 -> vector<64x512xf32>
    %70 = arith.mulf %69, %30 : vector<64x512xf32>
    %71 = arith.truncf %70 : vector<64x512xf32> to vector<64x512xbf16>
    %c511_i32_30 = arith.constant 511 : i32
    %72 = tpu.dynamic_rotate %68 by %c511_i32_30 dim 1 : vector<64x512xf32>, i32 -> vector<64x512xf32>
    %73 = arith.mulf %72, %34 : vector<64x512xf32>
    %74 = arith.truncf %73 : vector<64x512xf32> to vector<64x512xbf16>
    %75 = arith.truncf %68 : vector<64x512xf32> to vector<64x512xbf16>
    %c2 = arith.constant 2 : index
    %c0_31 = arith.constant 0 : index
    %c0_32 = arith.constant 0 : index
    %76 = vector.load %arg4[%c2, %c0_31, %c0_32] : memref<6x64x208xbf16, #tpu.memory_space<vmem>>, vector<1x64x208xbf16>
    %77 = vector.shape_cast %76 : vector<1x64x208xbf16> to vector<64x208xbf16>
    %78 = tpu.concatenate %71, %75, %74, %41 in 0 : vector<64x512xbf16>, vector<64x512xbf16>, vector<64x512xbf16>, vector<16x512xbf16> -> vector<208x512xbf16>
    %cst_33 = arith.constant dense<0.000000e+00> : vector<64x512xf32>
    %79 = tpu.matmul %77, %78, %cst_33 {dimension_numbers = #tpu.dot_dimension_numbers<[1], [0], [0], [1], [0, 0, 1, 1], [], []>} : vector<64x208xbf16>, vector<208x512xbf16>, vector<64x512xf32> -> vector<64x512xf32>
    %cst_34 = arith.constant 0.000000e+00 : f32
    %80 = vector.broadcast %cst_34 : f32 to vector<64x512xf32>
    %81 = arith.maximumf %79, %80 : vector<64x512xf32>
    %c1_i32_35 = arith.constant 1 : i32
    %82 = tpu.dynamic_rotate %81 by %c1_i32_35 dim 1 : vector<64x512xf32>, i32 -> vector<64x512xf32>
    %83 = arith.mulf %82, %30 : vector<64x512xf32>
    %84 = arith.truncf %83 : vector<64x512xf32> to vector<64x512xbf16>
    %c511_i32_36 = arith.constant 511 : i32
    %85 = tpu.dynamic_rotate %81 by %c511_i32_36 dim 1 : vector<64x512xf32>, i32 -> vector<64x512xf32>
    %86 = arith.mulf %85, %34 : vector<64x512xf32>
    %87 = arith.truncf %86 : vector<64x512xf32> to vector<64x512xbf16>
    %88 = arith.truncf %81 : vector<64x512xf32> to vector<64x512xbf16>
    %c3 = arith.constant 3 : index
    %c0_37 = arith.constant 0 : index
    %c0_38 = arith.constant 0 : index
    %89 = vector.load %arg4[%c3, %c0_37, %c0_38] : memref<6x64x208xbf16, #tpu.memory_space<vmem>>, vector<1x64x208xbf16>
    %90 = vector.shape_cast %89 : vector<1x64x208xbf16> to vector<64x208xbf16>
    %91 = tpu.concatenate %84, %88, %87, %41 in 0 : vector<64x512xbf16>, vector<64x512xbf16>, vector<64x512xbf16>, vector<16x512xbf16> -> vector<208x512xbf16>
    %cst_39 = arith.constant dense<0.000000e+00> : vector<64x512xf32>
    %92 = tpu.matmul %90, %91, %cst_39 {dimension_numbers = #tpu.dot_dimension_numbers<[1], [0], [0], [1], [0, 0, 1, 1], [], []>} : vector<64x208xbf16>, vector<208x512xbf16>, vector<64x512xf32> -> vector<64x512xf32>
    %93 = arith.addf %92, %68 : vector<64x512xf32>
    %cst_40 = arith.constant 0.000000e+00 : f32
    %94 = vector.broadcast %cst_40 : f32 to vector<64x512xf32>
    %95 = arith.maximumf %93, %94 : vector<64x512xf32>
    %c1_i32_41 = arith.constant 1 : i32
    %96 = tpu.dynamic_rotate %95 by %c1_i32_41 dim 1 : vector<64x512xf32>, i32 -> vector<64x512xf32>
    %97 = arith.mulf %96, %30 : vector<64x512xf32>
    %98 = arith.truncf %97 : vector<64x512xf32> to vector<64x512xbf16>
    %c511_i32_42 = arith.constant 511 : i32
    %99 = tpu.dynamic_rotate %95 by %c511_i32_42 dim 1 : vector<64x512xf32>, i32 -> vector<64x512xf32>
    %100 = arith.mulf %99, %34 : vector<64x512xf32>
    %101 = arith.truncf %100 : vector<64x512xf32> to vector<64x512xbf16>
    %102 = arith.truncf %95 : vector<64x512xf32> to vector<64x512xbf16>
    %c4 = arith.constant 4 : index
    %c0_43 = arith.constant 0 : index
    %c0_44 = arith.constant 0 : index
    %103 = vector.load %arg4[%c4, %c0_43, %c0_44] : memref<6x64x208xbf16, #tpu.memory_space<vmem>>, vector<1x64x208xbf16>
    %104 = vector.shape_cast %103 : vector<1x64x208xbf16> to vector<64x208xbf16>
    %105 = tpu.concatenate %98, %102, %101, %41 in 0 : vector<64x512xbf16>, vector<64x512xbf16>, vector<64x512xbf16>, vector<16x512xbf16> -> vector<208x512xbf16>
    %cst_45 = arith.constant dense<0.000000e+00> : vector<64x512xf32>
    %106 = tpu.matmul %104, %105, %cst_45 {dimension_numbers = #tpu.dot_dimension_numbers<[1], [0], [0], [1], [0, 0, 1, 1], [], []>} : vector<64x208xbf16>, vector<208x512xbf16>, vector<64x512xf32> -> vector<64x512xf32>
    %cst_46 = arith.constant 0.000000e+00 : f32
    %107 = vector.broadcast %cst_46 : f32 to vector<64x512xf32>
    %108 = arith.maximumf %106, %107 : vector<64x512xf32>
    %c1_i32_47 = arith.constant 1 : i32
    %109 = tpu.dynamic_rotate %108 by %c1_i32_47 dim 1 : vector<64x512xf32>, i32 -> vector<64x512xf32>
    %110 = arith.mulf %109, %30 : vector<64x512xf32>
    %111 = arith.truncf %110 : vector<64x512xf32> to vector<64x512xbf16>
    %c511_i32_48 = arith.constant 511 : i32
    %112 = tpu.dynamic_rotate %108 by %c511_i32_48 dim 1 : vector<64x512xf32>, i32 -> vector<64x512xf32>
    %113 = arith.mulf %112, %34 : vector<64x512xf32>
    %114 = arith.truncf %113 : vector<64x512xf32> to vector<64x512xbf16>
    %115 = arith.truncf %108 : vector<64x512xf32> to vector<64x512xbf16>
    %c5 = arith.constant 5 : index
    %c0_49 = arith.constant 0 : index
    %c0_50 = arith.constant 0 : index
    %116 = vector.load %arg4[%c5, %c0_49, %c0_50] : memref<6x64x208xbf16, #tpu.memory_space<vmem>>, vector<1x64x208xbf16>
    %117 = vector.shape_cast %116 : vector<1x64x208xbf16> to vector<64x208xbf16>
    %118 = tpu.concatenate %111, %115, %114, %41 in 0 : vector<64x512xbf16>, vector<64x512xbf16>, vector<64x512xbf16>, vector<16x512xbf16> -> vector<208x512xbf16>
    %cst_51 = arith.constant dense<0.000000e+00> : vector<64x512xf32>
    %119 = tpu.matmul %117, %118, %cst_51 {dimension_numbers = #tpu.dot_dimension_numbers<[1], [0], [0], [1], [0, 0, 1, 1], [], []>} : vector<64x208xbf16>, vector<208x512xbf16>, vector<64x512xf32> -> vector<64x512xf32>
    %120 = arith.addf %119, %95 : vector<64x512xf32>
    %cst_52 = arith.constant 0.000000e+00 : f32
    %121 = vector.broadcast %cst_52 : f32 to vector<64x512xf32>
    %122 = arith.maximumf %120, %121 : vector<64x512xf32>
    %c0_53 = arith.constant 0 : index
    %c0_54 = arith.constant 0 : index
    %123 = vector.load %arg5[%c0_53, %c0_54] : memref<64x512xf32, #tpu.memory_space<vmem>>, vector<64x512xf32>
    tpu.vector_store %arg5[%c0_53, %c0_54], %122 {strides = array<i32>} : memref<64x512xf32, #tpu.memory_space<vmem>>, vector<64x512xf32>,
    return
  }
  func.func @transform_0(%arg0: i32) -> (i32, i32) {
    %c0_i32 = arith.constant 0 : i32
    %c0_i32_0 = arith.constant 0 : i32
    return %c0_i32, %arg0 : i32, i32
  }
  func.func @transform_1(%arg0: i32) -> (i32, i32) {
    %c0_i32 = arith.constant 0 : i32
    %c0_i32_0 = arith.constant 0 : i32
    return %c0_i32, %arg0 : i32, i32
  }
  func.func @transform_2(%arg0: i32) -> (i32, i32) {
    %c0_i32 = arith.constant 0 : i32
    %c0_i32_0 = arith.constant 0 : i32
    %c0_i32_1 = arith.constant 0 : i32
    return %c0_i32, %c0_i32_0 : i32, i32
  }
  func.func @transform_3(%arg0: i32) -> (i32, i32, i32) {
    %c0_i32 = arith.constant 0 : i32
    %c0_i32_0 = arith.constant 0 : i32
    %c0_i32_1 = arith.constant 0 : i32
    %c0_i32_2 = arith.constant 0 : i32
    return %c0_i32, %c0_i32_0, %c0_i32_1 : i32, i32, i32
  }
  func.func @transform_4(%arg0: i32) -> (i32, i32) {
    %c0_i32 = arith.constant 0 : i32
    %c0_i32_0 = arith.constant 0 : i32
    return %c0_i32, %arg0 : i32, i32
  }
}

</mosaic_0001>

<llo_original>
// kernel: tpu_custom_call.1
$region0: #{tpu_custom_call.1}
  #allocation0 [shape = 'u32[]', space=smem, size = 0x4, offset = 0x4, fixed_abs, tag = 'smem constant byte address 0x4 - core index']
  #allocation1 [shape = 'u32[144,128]{1,0:T(1,128)}', space=vmem, size = 0x12000, scoped, tag = 'internal scratch']
  %s0 = inlined_call_operand.vmem [shape: bf16[8,1024], index: 0, kind: input, shape index: {}]
  %s1 = inlined_call_operand.hbm [shape: bf16[8,1024], index: 1, kind: input, shape index: {}]
  %s2 = inlined_call_operand.vmem [shape: bf16[64,8], index: 2, kind: input, shape index: {}]
  %s3 = inlined_call_operand.hbm [shape: bf16[6,64,208], index: 3, kind: input, shape index: {}]
  %s4 = inlined_call_operand.hbm [shape: f32[64,1024], index: 4, kind: output, shape index: {}]
  %s5 = sld [smem:[#allocation0]]
  $region57: #{tpu_custom_call.1} parent=0
    _
  %s7 = ssub.s32 1, %s5
  %s8 = scalar_select 0, %s7, %s5
  $region1: #{tpu_custom_call.1} parent=0
    #allocation2 [shape = 'u8[16384]{0}', space=vmem, size = 0x4000, scoped, tag = 'input window, operand 1']
    #allocation3 [shape = 's32[2]{0}', space=sflag, size = 0x8, scoped, tag = 'scoped memory for tpu_custom_call.1']
    #allocation4 [shape = 's32[2]{0}', space=sflag, size = 0x8, scoped, tag = 'scoped memory for tpu_custom_call.1']
    #allocation5 [shape = 'u8[196608]{0}', space=vmem, size = 0x30000, scoped, tag = 'input window, operand 3, single buffered']
    #allocation6 [shape = 's32[1]{0}', space=sflag, size = 0x4, scoped, tag = 'scoped memory for tpu_custom_call.1']
    #allocation7 [shape = 'u8[262144]{0}', space=vmem, size = 0x40000, scoped, tag = 'output window, operand 0']
    %9 = vsyncpa [#allocation3], 0
    %s10 = scalar_lea.sflag [#allocation3], 1
    %11 = vsyncpa %s10, 0
    %12 = vsyncpa [#allocation6], 0
    %13 = vsyncpa [#allocation4], 0
    %s14 = scalar_lea.sflag [#allocation4], 1
    %15 = vsyncpa %s14, 0
    loop: start=0, step=1, limit=4
    $region2: #{tpu_custom_call.1} parent=1 // loop_pre_header
      _
    $region3: #{tpu_custom_call.1} parent=1 // loop_header
      %s17 = sphi 0, %s21
      %p18 = scmp.ge.s32.totalorder %s17, 4
      %s27 = sphi 0, %s29
      %s30 = sphi 0, %s27
      %s31 = sphi 0, %s30
      %s47 = sphi 0, %s31
      %s53 = sphi 0, %s55
      %s56 = sphi 0, %s53
      %s57 = sphi 0, %s56
      %s73 = sphi 0, %s57
      %s77 = sphi 0, %s77
      %s79 = sphi 0, %s77
      %s80 = sphi 0, %s79
      %s94 = sphi 0, %s80
      %s98 = sphi 0, %s98
      %s100 = sphi 0, %s98
      %s101 = sphi 0, %s100
      %s115 = sphi 0, %s101
      %s121 = sphi 0, %s123
      %s124 = sphi 0, %s121
      %s125 = sphi 0, %s124
      %s141 = sphi 0, %s125
    $region4: #{tpu_custom_call.1} parent=1 // loop_header_branch
      %20 = sbr.rel (%p18) target = $region8
    $region5: #{tpu_custom_call.1} parent=1 // loop_body
      %s22 = ssub.s32 %s17, 1
      %s23 = ssub.s32 %s17, 2
      %s24 = sadd.s32 %s17, 1
      %s25 = ssub.s32 %s17, %s24
      %p26 = scmp.eq.s32.totalorder %s25, 0
      %s28 = sadd.s32 %s27, 1
      %s29 = scalar_select %p26, %s27, %s28
      %p32 = pneg %p26
      %p33 = scmp.eq.s32.totalorder %s17, 1
      %p34 = por %p32, %p33
      %p35 = scmp.ne.s32.totalorder %s27, %s30
      %p36 = scmp.eq.s32.totalorder %s17, 0
      %p37 = por %p35, %p36
      %p38 = scmp.ne.s32.totalorder %s27, %s30
      %p39 = scmp.eq.s32.totalorder %s22, 1
      %p40 = por %p38, %p39
      %p41 = scmp.ne.s32.totalorder %s30, %s31
      %p42 = scmp.eq.s32.totalorder %s22, 0
      %p43 = por %p41, %p42
      %p44 = scmp.ne.s32.totalorder %s30, %s31
      %p45 = scmp.eq.s32.totalorder %s23, 1
      %p46 = por %p44, %p45
      %p48 = scmp.ne.s32.totalorder %s31, %s47
      %p49 = scmp.eq.s32.totalorder %s23, 0
      %p50 = por %p48, %p49
      %s51 = ssub.s32 %s17, %s24
      %p52 = scmp.eq.s32.totalorder %s51, 0
      %s54 = sadd.s32 %s53, 1
      %s55 = scalar_select %p52, %s53, %s54
      %p58 = pneg %p52
      %p59 = scmp.eq.s32.totalorder %s17, 1
      %p60 = por %p58, %p59
      %p61 = scmp.ne.s32.totalorder %s53, %s56
      %p62 = scmp.eq.s32.totalorder %s17, 0
      %p63 = por %p61, %p62
      %p64 = scmp.ne.s32.totalorder %s53, %s56
      %p65 = scmp.eq.s32.totalorder %s22, 1
      %p66 = por %p64, %p65
      %p67 = scmp.ne.s32.totalorder %s56, %s57
      %p68 = scmp.eq.s32.totalorder %s22, 0
      %p69 = por %p67, %p68
      %p70 = scmp.ne.s32.totalorder %s56, %s57
      %p71 = scmp.eq.s32.totalorder %s23, 1
      %p72 = por %p70, %p71
      %p74 = scmp.ne.s32.totalorder %s57, %s73
      %p75 = scmp.eq.s32.totalorder %s23, 0
      %p76 = por %p74, %p75
      %s78 = sadd.s32 %s77, 1
      %p81 = scmp.eq.s32.totalorder %s17, 1
      %p82 = scmp.ne.s32.totalorder %s77, %s79
      %p83 = scmp.eq.s32.totalorder %s17, 0
      %p84 = por %p82, %p83
      %p85 = scmp.ne.s32.totalorder %s77, %s79
      %p86 = scmp.eq.s32.totalorder %s22, 1
      %p87 = por %p85, %p86
      %p88 = scmp.ne.s32.totalorder %s79, %s80
      %p89 = scmp.eq.s32.totalorder %s22, 0
      %p90 = por %p88, %p89
      %p91 = scmp.ne.s32.totalorder %s79, %s80
      %p92 = scmp.eq.s32.totalorder %s23, 1
      %p93 = por %p91, %p92
      %p95 = scmp.ne.s32.totalorder %s80, %s94
      %p96 = scmp.eq.s32.totalorder %s23, 0
      %p97 = por %p95, %p96
      %s99 = sadd.s32 %s98, 1
      %p102 = scmp.eq.s32.totalorder %s17, 1
      %p103 = scmp.ne.s32.totalorder %s98, %s100
      %p104 = scmp.eq.s32.totalorder %s17, 0
      %p105 = por %p103, %p104
      %p106 = scmp.ne.s32.totalorder %s98, %s100
      %p107 = scmp.eq.s32.totalorder %s22, 1
      %p108 = por %p106, %p107
      %p109 = scmp.ne.s32.totalorder %s100, %s101
      %p110 = scmp.eq.s32.totalorder %s22, 0
      %p111 = por %p109, %p110
      %p112 = scmp.ne.s32.totalorder %s100, %s101
      %p113 = scmp.eq.s32.totalorder %s23, 1
      %p114 = por %p112, %p113
      %p116 = scmp.ne.s32.totalorder %s101, %s115
      %p117 = scmp.eq.s32.totalorder %s23, 0
      %p118 = por %p116, %p117
      %s119 = ssub.s32 %s17, %s24
      %p120 = scmp.eq.s32.totalorder %s119, 0
      %s122 = sadd.s32 %s121, 1
      %s123 = scalar_select %p120, %s121, %s122
      %p126 = pneg %p120
      %p127 = scmp.eq.s32.totalorder %s17, 1
      %p128 = por %p126, %p127
      %p129 = scmp.ne.s32.totalorder %s121, %s124
      %p130 = scmp.eq.s32.totalorder %s17, 0
      %p131 = por %p129, %p130
      %p132 = scmp.ne.s32.totalorder %s121, %s124
      %p133 = scmp.eq.s32.totalorder %s22, 1
      %p134 = por %p132, %p133
      %p135 = scmp.ne.s32.totalorder %s124, %s125
      %p136 = scmp.eq.s32.totalorder %s22, 0
      %p137 = por %p135, %p136
      %p138 = scmp.ne.s32.totalorder %s124, %s125
      %p139 = scmp.eq.s32.totalorder %s23, 1
      %p140 = por %p138, %p139
      %p142 = scmp.ne.s32.totalorder %s125, %s141
      %p143 = scmp.eq.s32.totalorder %s23, 0
      %p144 = por %p142, %p143
      %p145 = scmp.le.s32.totalorder 1, %s17
      %p146 = scmp.lt.s32.totalorder %s17, 3
      %p147 = pnand %p145, %p146
      %p148 = pneg %p147
      // Predicated region
      $region9: #{tpu_custom_call.1} parent=5 // pred_check
        _
      $region10: #{tpu_custom_call.1} parent=5 // pred_check_branch
        %150 = sbr.rel (%p147) target = $region12
      $region11: #{tpu_custom_call.1} parent=5 // pred_region
        %s151 = ssub.s32 %s17, 1
        // Predicated region
        $region13: #{tpu_custom_call.1} parent=11 // pred_check
          %p152 = pneg %p90
        $region14: #{tpu_custom_call.1} parent=11 // pred_check_branch
          %154 = sbr.rel (%p152) target = $region16
        $region15: #{tpu_custom_call.1} parent=11 // pred_region
          _
        $region16: #{tpu_custom_call.1} parent=11 // pred_fallthru
          _
        // Predicated region
        $region17: #{tpu_custom_call.1} parent=11 // pred_check
          %p155 = pneg %p111
        $region18: #{tpu_custom_call.1} parent=11 // pred_check_branch
          %157 = sbr.rel (%p155) target = $region20
        $region19: #{tpu_custom_call.1} parent=11 // pred_region
          %s159 = ssub.s32 6144, 6144
          %160 = vsyncadd [#allocation6], %s159
          %s161 = sshll.u32 [#allocation5], 4
          %s162 = int_to_ptr.vmem [resolvable:$true] %s161
          %167 = dma.hbm_to_vmem [thread:$0]  %s3, 6144, %s162, [#allocation6], 128, 128, 8
        $region20: #{tpu_custom_call.1} parent=11 // pred_fallthru
          _
      $region12: #{tpu_custom_call.1} parent=5 // pred_fallthru
        _
      %p168 = scmp.lt.s32.totalorder %s17, 2
      // Predicated region
      $region21: #{tpu_custom_call.1} parent=5 // pred_check
        %p169 = pneg %p168
      $region22: #{tpu_custom_call.1} parent=5 // pred_check_branch
        %171 = sbr.rel (%p169) target = $region24
      $region23: #{tpu_custom_call.1} parent=5 // pred_region
        // Predicated region
        $region25: #{tpu_custom_call.1} parent=23 // pred_check
          %p172 = pneg %p37
        $region26: #{tpu_custom_call.1} parent=23 // pred_check_branch
          %174 = sbr.rel (%p172) target = $region28
        $region27: #{tpu_custom_call.1} parent=23 // pred_region
          %s175 = smul.u32 4, %s17
          %p176 = scmp.lt.s32.totalorder %s175, 7
          %s177 = scalar_select %p176, %s175, 7
          %s178 = smul.addr %s177, 4
          %s179 = scalar_lea.vmem %s0, %s178
          %s180 = smul.u32 4, %s17
        $region28: #{tpu_custom_call.1} parent=23 // pred_fallthru
          _
        // Predicated region
        $region29: #{tpu_custom_call.1} parent=23 // pred_check
          %p181 = pneg %p63
        $region30: #{tpu_custom_call.1} parent=23 // pred_check_branch
          %183 = sbr.rel (%p181) target = $region32
        $region31: #{tpu_custom_call.1} parent=23 // pred_region
          %s184 = sand.u32 %s53, 1
          %s185 = scalar_lea.sflag [#allocation3], %s184
          %s186 = sand.u32 %s53, 1
          %s187 = smul.addr %s186, 16
          %s188 = scalar_lea.vmem [#allocation2], %s187
          %s189 = smul.u32 4, %s17
          %s191 = ssub.s32 256, 256
          %192 = vsyncadd %s185, %s191
          %s193 = smul.addr %s189, 64
          %s194 = scalar_lea.hbm %s1, %s193
          %s196 = sshll.u32 %s188, 4
          %s197 = int_to_ptr.vmem [resolvable:$true] %s196
          %199 = dma.hbm_to_vmem [thread:$0]  %s194, 256, %s197, %s185
        $region32: #{tpu_custom_call.1} parent=23 // pred_fallthru
          _
      $region24: #{tpu_custom_call.1} parent=5 // pred_fallthru
        _
      %p200 = scmp.le.s32.totalorder 1, %s17
      %p201 = scmp.lt.s32.totalorder %s17, 3
      %p202 = pnand %p200, %p201
      %p203 = pneg %p202
      // Predicated region
      $region33: #{tpu_custom_call.1} parent=5 // pred_check
        _
      $region34: #{tpu_custom_call.1} parent=5 // pred_check_branch
        %205 = sbr.rel (%p202) target = $region36
      $region35: #{tpu_custom_call.1} parent=5 // pred_region
        %s206 = ssub.s32 %s17, 1
        %s207 = sand.u32 %s56, 1
        %s208 = scalar_lea.sflag [#allocation3], %s207
        %s209 = sand.u32 %s56, 1
        %s210 = smul.addr %s209, 16
        %s211 = scalar_lea.vmem [#allocation2], %s210
        // Predicated region
        $region37: #{tpu_custom_call.1} parent=35 // pred_check
          %p212 = pneg %p69
        $region38: #{tpu_custom_call.1} parent=35 // pred_check_branch
          %214 = sbr.rel (%p212) target = $region40
        $region39: #{tpu_custom_call.1} parent=35 // pred_region
          %215 = dma.done %s208, 256
        $region40: #{tpu_custom_call.1} parent=35 // pred_fallthru
          _
        // Predicated region
        $region41: #{tpu_custom_call.1} parent=35 // pred_check
          %p216 = pneg %p111
        $region42: #{tpu_custom_call.1} parent=35 // pred_check_branch
          %218 = sbr.rel (%p216) target = $region44
        $region43: #{tpu_custom_call.1} parent=35 // pred_region
          %219 = dma.done [#allocation6], 6144
        $region44: #{tpu_custom_call.1} parent=35 // pred_fallthru
          _
        %s220 = smul.u32 4, %s22
        %p221 = scmp.lt.s32.totalorder %s220, 7
        %s222 = scalar_select %p221, %s220, 7
        %s223 = smul.addr %s222, 4
        %s224 = scalar_lea.vmem %s0, %s223
        %p225 = pneg %p43
        %p226 = pneg %p40
        %s227 = sand.u32 %s56, 1
        %s228 = scalar_lea.sflag [#allocation3], %s227
        %s229 = sand.u32 %s56, 1
        %s230 = smul.addr %s229, 16
        %s231 = scalar_lea.vmem [#allocation2], %s230
        %p232 = pneg %p69
        %p233 = pneg %p66
        %p234 = pneg %p90
        %p235 = pneg %p87
        %p236 = pneg %p111
        %p237 = pneg %p108
        %p238 = pneg %p137
        %p239 = pneg %p134
        %s240 = sand.u32 %s124, 1
        %s241 = scalar_lea.sflag [#allocation4], %s240
        %s242 = sand.u32 %s124, 1
        %s243 = smul.addr %s242, 256
        %s244 = scalar_lea.vmem [#allocation7], %s243
        %s245 = smul.u32 4, %s22
        %p246 = scmp.lt.s32.totalorder %s245, 7
        %s247 = scalar_select %p246, %s245, 7
        %s248 = smul.addr %s247, 4
        %s249 = scalar_lea.vmem %s0, %s248
        %s250 = smul.u32 4, %s22
        %s251 = smul.u32 4, %s22
        %s252 = smul.u32 4, %s22
        %v255 = vld [vmem:[%s2] sm:$0xf]
        %v256 = vld [vmem:[%s2 + $0x4] sm:$0xf]
        %v257 = vld [vmem:[%s2 + $0x8] sm:$0xf]
        %v258 = vld [vmem:[%s2 + $0xc] sm:$0xf]
        %v259 = vld [vmem:[%s2 + $0x10] sm:$0xf]
        %v260 = vld [vmem:[%s2 + $0x14] sm:$0xf]
        %v261 = vld [vmem:[%s2 + $0x18] sm:$0xf]
        %v262 = vld [vmem:[%s2 + $0x1c] sm:$0xf]
        %v263 = vld [vmem:[%s249] sm:$0xff]
        %v264 = vld [vmem:[%s249 + $0x8] sm:$0xff]
        %v273 = vunpack.c.l.b16 %v255
        %v274 = vunpack.c.l.b16 %v256
        %v275 = vunpack.c.l.b16 %v257
        %v276 = vunpack.c.l.b16 %v258
        %v277 = vunpack.c.l.b16 %v259
        %v278 = vunpack.c.l.b16 %v260
        %v279 = vunpack.c.l.b16 %v261
        %v280 = vunpack.c.l.b16 %v262
        %v281 = vpack.c.b16 %v274, %v273
        %v282 = vpack.c.b16 %v276, %v275
        %v283 = vpack.c.b16 %v278, %v277
        %v284 = vpack.c.b16 %v280, %v279
        %v287 = vunpack.c.l.b16 %v263
        %v288 = vunpack.c.h.b16 %v263
        %v289 = vunpack.c.l.b16 %v264
        %v290 = vunpack.c.h.b16 %v264
        %v291 = vpack.c.b16 %v287, %v287
        %v292 = vpack.c.b16 %v288, %v288
        %v293 = vpack.c.b16 %v289, %v289
        %v294 = vpack.c.b16 %v290, %v290
        %vm295 = vcmask 64512
        %v297 = vsel %vm295, %v281, 0
        %v300 = vsel %vm295, %v282, 0
        %v303 = vsel %vm295, %v283, 0
        %v306 = vsel %vm295, %v284, 0
        %vm308 = vcmask 1043456
        %v310 = vsel %vm308, %v291, 0
        %v313 = vsel %vm308, %v292, 0
        %v316 = vsel %vm308, %v293, 0
        %v319 = vsel %vm308, %v294, 0
        %321 = vmatprep.subr.bf16.mxu0 %v313
        %322 = vmatpush1.bf16.msra.mxu0 %v310
        %323 = vmatprep.subr.bf16.mxu0 0
        %324 = vmatpush1.bf16.msra.mxu0 0
        %325 = vmatprep.subr.bf16.mxu0 0
        %326 = vmatpush1.bf16.msra.mxu0 0
        %327 = vmatprep.subr.bf16.mxu0 0
        %328 = vmatpush1.bf16.msra.mxu0 0
        %329 = vmatprep.subr.bf16.mxu0 0
        %330 = vmatpush1.bf16.msra.mxu0 0
        %331 = vmatprep.subr.bf16.mxu0 0
        %332 = vmatpush1.bf16.msra.mxu0 0
        %333 = vmatprep.subr.bf16.mxu0 0
        %334 = vmatpush1.bf16.msra.mxu0 0
        %335 = vmatprep.subr.bf16.mxu0 0
        %336 = vmatpush1.bf16.msra.mxu0 0
        %337 = vmatprep.subr.bf16.mxu0 0
        %338 = vmatpush1.bf16.msra.mxu0 0
        %339 = vmatprep.subr.bf16.mxu0 0
        %340 = vmatpush1.bf16.msra.mxu0 0
        %341 = vmatprep.subr.bf16.mxu0 0
        %342 = vmatpush1.bf16.msra.mxu0 0
        %343 = vmatprep.subr.bf16.mxu0 0
        %344 = vmatpush1.bf16.msra.mxu0 0
        %345 = vmatprep.subr.bf16.mxu0 0
        %346 = vmatpush1.bf16.msra.mxu0 0
        %347 = vmatprep.subr.bf16.mxu0 0
        %348 = vmatpush1.bf16.msra.mxu0 0
        %349 = vmatprep.subr.bf16.mxu0 0
        %350 = vmatpush1.bf16.msra.mxu0 0
        %351 = vmatprep.subr.bf16.mxu0 0
        %352 = vmatpush1.bf16.msra.mxu0 0
        %353 = vmatprep.mubr.bf16.mxu0 0
        %354 = vmatmul.mubr.bf16.gmra.mrb[0].mxu0 %v297
        %v355 = vpop.f32.mrb[0].mxu0
        %v356 = vadd.f32 0.0, %v355
        %v357 = vpop.f32.mrb[0].mxu0
        %v358 = vadd.f32 0.0, %v357
        %v359 = vpop.f32.mrb[0].mxu0
        %v360 = vadd.f32 0.0, %v359
        %v361 = vpop.f32.mrb[0].mxu0
        %v362 = vadd.f32 0.0, %v361
        %363 = vmatprep.mubr.bf16.mxu0 0
        %364 = vmatmul.mubr.bf16.gmra.mrb[0].mxu0 %v300
        %v365 = vpop.f32.mrb[0].mxu0
        %v366 = vadd.f32 0.0, %v365
        %v367 = vpop.f32.mrb[0].mxu0
        %v368 = vadd.f32 0.0, %v367
        %v369 = vpop.f32.mrb[0].mxu0
        %v370 = vadd.f32 0.0, %v369
        %v371 = vpop.f32.mrb[0].mxu0
        %v372 = vadd.f32 0.0, %v371
        %373 = vmatprep.mubr.bf16.mxu0 0
        %374 = vmatmul.mubr.bf16.gmra.mrb[0].mxu0 %v303
        %v375 = vpop.f32.mrb[0].mxu0
        %v376 = vadd.f32 0.0, %v375
        %v377 = vpop.f32.mrb[0].mxu0
        %v378 = vadd.f32 0.0, %v377
        %v379 = vpop.f32.mrb[0].mxu0
        %v380 = vadd.f32 0.0, %v379
        %v381 = vpop.f32.mrb[0].mxu0
        %v382 = vadd.f32 0.0, %v381
        %383 = vmatprep.mubr.bf16.mxu0 0
        %384 = vmatmul.mubr.bf16.gmra.mrb[0].mxu0 %v306
        %v385 = vpop.f32.mrb[0].mxu0
        %v386 = vadd.f32 0.0, %v385
        %v387 = vpop.f32.mrb[0].mxu0
        %v388 = vadd.f32 0.0, %v387
        %v389 = vpop.f32.mrb[0].mxu0
        %v390 = vadd.f32 0.0, %v389
        %v391 = vpop.f32.mrb[0].mxu0
        %v392 = vadd.f32 0.0, %v391
        %393 = vdwg.mxu0
        %394 = vmatprep.subr.bf16.mxu0 %v319
        %395 = vmatpush1.bf16.msra.mxu0 %v316
        %396 = vmatprep.subr.bf16.mxu0 0
        %397 = vmatpush1.bf16.msra.mxu0 0
        %398 = vmatprep.subr.bf16.mxu0 0
        %399 = vmatpush1.bf16.msra.mxu0 0
        %400 = vmatprep.subr.bf16.mxu0 0
        %401 = vmatpush1.bf16.msra.mxu0 0
        %402 = vmatprep.subr.bf16.mxu0 0
        %403 = vmatpush1.bf16.msra.mxu0 0
        %404 = vmatprep.subr.bf16.mxu0 0
        %405 = vmatpush1.bf16.msra.mxu0 0
        %406 = vmatprep.subr.bf16.mxu0 0
        %407 = vmatpush1.bf16.msra.mxu0 0
        %408 = vmatprep.subr.bf16.mxu0 0
        %409 = vmatpush1.bf16.msra.mxu0 0
        %410 = vmatprep.subr.bf16.mxu0 0
        %411 = vmatpush1.bf16.msra.mxu0 0
        %412 = vmatprep.subr.bf16.mxu0 0
        %413 = vmatpush1.bf16.msra.mxu0 0
        %414 = vmatprep.subr.bf16.mxu0 0
        %415 = vmatpush1.bf16.msra.mxu0 0
        %416 = vmatprep.subr.bf16.mxu0 0
        %417 = vmatpush1.bf16.msra.mxu0 0
        %418 = vmatprep.subr.bf16.mxu0 0
        %419 = vmatpush1.bf16.msra.mxu0 0
        %420 = vmatprep.subr.bf16.mxu0 0
        %421 = vmatpush1.bf16.msra.mxu0 0
        %422 = vmatprep.subr.bf16.mxu0 0
        %423 = vmatpush1.bf16.msra.mxu0 0
        %424 = vmatprep.subr.bf16.mxu0 0
        %425 = vmatpush1.bf16.msra.mxu0 0
        %426 = vmatprep.mubr.bf16.mxu0 0
        %427 = vmatmul.mubr.bf16.gmra.mrb[0].mxu0 %v297
        %v428 = vpop.f32.mrb[0].mxu0
        %v429 = vadd.f32 0.0, %v428
        %v430 = vpop.f32.mrb[0].mxu0
        %v431 = vadd.f32 0.0, %v430
        %v432 = vpop.f32.mrb[0].mxu0
        %v433 = vadd.f32 0.0, %v432
        %v434 = vpop.f32.mrb[0].mxu0
        %v435 = vadd.f32 0.0, %v434
        %436 = vmatprep.mubr.bf16.mxu0 0
        %437 = vmatmul.mubr.bf16.gmra.mrb[0].mxu0 %v300
        %v438 = vpop.f32.mrb[0].mxu0
        %v439 = vadd.f32 0.0, %v438
        %v440 = vpop.f32.mrb[0].mxu0
        %v441 = vadd.f32 0.0, %v440
        %v442 = vpop.f32.mrb[0].mxu0
        %v443 = vadd.f32 0.0, %v442
        %v444 = vpop.f32.mrb[0].mxu0
        %v445 = vadd.f32 0.0, %v444
        %446 = vmatprep.mubr.bf16.mxu0 0
        %447 = vmatmul.mubr.bf16.gmra.mrb[0].mxu0 %v303
        %v448 = vpop.f32.mrb[0].mxu0
        %v449 = vadd.f32 0.0, %v448
        %v450 = vpop.f32.mrb[0].mxu0
        %v451 = vadd.f32 0.0, %v450
        %v452 = vpop.f32.mrb[0].mxu0
        %v453 = vadd.f32 0.0, %v452
        %v454 = vpop.f32.mrb[0].mxu0
        %v455 = vadd.f32 0.0, %v454
        %456 = vmatprep.mubr.bf16.mxu0 0
        %457 = vmatmul.mubr.bf16.gmra.mrb[0].mxu0 %v306
        %v458 = vpop.f32.mrb[0].mxu0
        %v459 = vadd.f32 0.0, %v458
        %v460 = vpop.f32.mrb[0].mxu0
        %v461 = vadd.f32 0.0, %v460
        %v462 = vpop.f32.mrb[0].mxu0
        %v463 = vadd.f32 0.0, %v462
        %v464 = vpop.f32.mrb[0].mxu0
        %v465 = vadd.f32 0.0, %v464
        %466 = vdwg.mxu0
        %v467 = vmax.f32 %v356, 0.0
        %v468 = vmax.f32 %v358, 0.0
        %v469 = vmax.f32 %v429, 0.0
        %v470 = vmax.f32 %v431, 0.0
        %v471 = vmax.f32 %v360, 0.0
        %v472 = vmax.f32 %v362, 0.0
        %v473 = vmax.f32 %v433, 0.0
        %v474 = vmax.f32 %v435, 0.0
        %v475 = vmax.f32 %v366, 0.0
        %v476 = vmax.f32 %v368, 0.0
        %v477 = vmax.f32 %v439, 0.0
        %v478 = vmax.f32 %v441, 0.0
        %v479 = vmax.f32 %v370, 0.0
        %v480 = vmax.f32 %v372, 0.0
        %v481 = vmax.f32 %v443, 0.0
        %v482 = vmax.f32 %v445, 0.0
        %v483 = vmax.f32 %v376, 0.0
        %v484 = vmax.f32 %v378, 0.0
        %v485 = vmax.f32 %v449, 0.0
        %v486 = vmax.f32 %v451, 0.0
        %v487 = vmax.f32 %v380, 0.0
        %v488 = vmax.f32 %v382, 0.0
        %v489 = vmax.f32 %v453, 0.0
        %v490 = vmax.f32 %v455, 0.0
        %v491 = vmax.f32 %v386, 0.0
        %v492 = vmax.f32 %v388, 0.0
        %v493 = vmax.f32 %v459, 0.0
        %v494 = vmax.f32 %v461, 0.0
        %v495 = vmax.f32 %v390, 0.0
        %v496 = vmax.f32 %v392, 0.0
        %v497 = vmax.f32 %v463, 0.0
        %v498 = vmax.f32 %v465, 0.0
        %v499 = vld [vmem:[%s211] sm:$0xff]
        %v500 = vld [vmem:[%s211 + $0x8] sm:$0xff]
        %v503 = vunpack.c.l.b16 %v499
        %v504 = vunpack.c.h.b16 %v499
        %v505 = vunpack.c.l.b16 %v500
        %v506 = vunpack.c.h.b16 %v500
        %v507 = vpack.c.b16 %v503, %v503
        %v508 = vpack.c.b16 %v504, %v504
        %v509 = vpack.c.b16 %v505, %v505
        %v510 = vpack.c.b16 %v506, %v506
        %v512 = vsel %vm308, %v507, 0
        %v515 = vsel %vm308, %v508, 0
        %v518 = vsel %vm308, %v509, 0
        %v521 = vsel %vm308, %v510, 0
        %523 = vmatprep.subr.bf16.mxu0 %v515
        %524 = vmatpush1.bf16.msra.mxu0 %v512
        %525 = vmatprep.subr.bf16.mxu0 0
        %526 = vmatpush1.bf16.msra.mxu0 0
        %527 = vmatprep.subr.bf16.mxu0 0
        %528 = vmatpush1.bf16.msra.mxu0 0
        %529 = vmatprep.subr.bf16.mxu0 0
        %530 = vmatpush1.bf16.msra.mxu0 0
        %531 = vmatprep.subr.bf16.mxu0 0
        %532 = vmatpush1.bf16.msra.mxu0 0
        %533 = vmatprep.subr.bf16.mxu0 0
        %534 = vmatpush1.bf16.msra.mxu0 0
        %535 = vmatprep.subr.bf16.mxu0 0
        %536 = vmatpush1.bf16.msra.mxu0 0
        %537 = vmatprep.subr.bf16.mxu0 0
        %538 = vmatpush1.bf16.msra.mxu0 0
        %539 = vmatprep.subr.bf16.mxu0 0
        %540 = vmatpush1.bf16.msra.mxu0 0
        %541 = vmatprep.subr.bf16.mxu0 0
        %542 = vmatpush1.bf16.msra.mxu0 0
        %543 = vmatprep.subr.bf16.mxu0 0
        %544 = vmatpush1.bf16.msra.mxu0 0
        %545 = vmatprep.subr.bf16.mxu0 0
        %546 = vmatpush1.bf16.msra.mxu0 0
        %547 = vmatprep.subr.bf16.mxu0 0
        %548 = vmatpush1.bf16.msra.mxu0 0
        %549 = vmatprep.subr.bf16.mxu0 0
        %550 = vmatpush1.bf16.msra.mxu0 0
        %551 = vmatprep.subr.bf16.mxu0 0
        %552 = vmatpush1.bf16.msra.mxu0 0
        %553 = vmatprep.subr.bf16.mxu0 0
        %554 = vmatpush1.bf16.msra.mxu0 0
        %555 = vmatprep.mubr.bf16.mxu0 0
        %556 = vmatmul.mubr.bf16.gmra.mrb[0].mxu0 %v297
        %v557 = vpop.f32.mrb[0].mxu0
        %v558 = vadd.f32 0.0, %v557
        %v559 = vpop.f32.mrb[0].mxu0
        %v560 = vadd.f32 0.0, %v559
        %v561 = vpop.f32.mrb[0].mxu0
        %v562 = vadd.f32 0.0, %v561
        %v563 = vpop.f32.mrb[0].mxu0
        %v564 = vadd.f32 0.0, %v563
        %565 = vmatprep.mubr.bf16.mxu0 0
        %566 = vmatmul.mubr.bf16.gmra.mrb[0].mxu0 %v300
        %v567 = vpop.f32.mrb[0].mxu0
        %v568 = vadd.f32 0.0, %v567
        %v569 = vpop.f32.mrb[0].mxu0
        %v570 = vadd.f32 0.0, %v569
        %v571 = vpop.f32.mrb[0].mxu0
        %v572 = vadd.f32 0.0, %v571
        %v573 = vpop.f32.mrb[0].mxu0
        %v574 = vadd.f32 0.0, %v573
        %575 = vmatprep.mubr.bf16.mxu0 0
        %576 = vmatmul.mubr.bf16.gmra.mrb[0].mxu0 %v303
        %v577 = vpop.f32.mrb[0].mxu0
        %v578 = vadd.f32 0.0, %v577
        %v579 = vpop.f32.mrb[0].mxu0
        %v580 = vadd.f32 0.0, %v579
        %v581 = vpop.f32.mrb[0].mxu0
        %v582 = vadd.f32 0.0, %v581
        %v583 = vpop.f32.mrb[0].mxu0
        %v584 = vadd.f32 0.0, %v583
        %585 = vmatprep.mubr.bf16.mxu0 0
        %586 = vmatmul.mubr.bf16.gmra.mrb[0].mxu0 %v306
        %v587 = vpop.f32.mrb[0].mxu0
        %v588 = vadd.f32 0.0, %v587
        %v589 = vpop.f32.mrb[0].mxu0
        %v590 = vadd.f32 0.0, %v589
        %v591 = vpop.f32.mrb[0].mxu0
        %v592 = vadd.f32 0.0, %v591
        %v593 = vpop.f32.mrb[0].mxu0
        %v594 = vadd.f32 0.0, %v593
        %595 = vdwg.mxu0
        %596 = vmatprep.subr.bf16.mxu0 %v521
        %597 = vmatpush1.bf16.msra.mxu0 %v518
        %598 = vmatprep.subr.bf16.mxu0 0
        %599 = vmatpush1.bf16.msra.mxu0 0
        %600 = vmatprep.subr.bf16.mxu0 0
        %601 = vmatpush1.bf16.msra.mxu0 0
        %602 = vmatprep.subr.bf16.mxu0 0
        %603 = vmatpush1.bf16.msra.mxu0 0
        %604 = vmatprep.subr.bf16.mxu0 0
        %605 = vmatpush1.bf16.msra.mxu0 0
        %606 = vmatprep.subr.bf16.mxu0 0
        %607 = vmatpush1.bf16.msra.mxu0 0
        %608 = vmatprep.subr.bf16.mxu0 0
        %609 = vmatpush1.bf16.msra.mxu0 0
        %610 = vmatprep.subr.bf16.mxu0 0
        %611 = vmatpush1.bf16.msra.mxu0 0
        %612 = vmatprep.subr.bf16.mxu0 0
        %613 = vmatpush1.bf16.msra.mxu0 0
        %614 = vmatprep.subr.bf16.mxu0 0
        %615 = vmatpush1.bf16.msra.mxu0 0
        %616 = vmatprep.subr.bf16.mxu0 0
        %617 = vmatpush1.bf16.msra.mxu0 0
        %618 = vmatprep.subr.bf16.mxu0 0
        %619 = vmatpush1.bf16.msra.mxu0 0
        %620 = vmatprep.subr.bf16.mxu0 0
        %621 = vmatpush1.bf16.msra.mxu0 0
        %622 = vmatprep.subr.bf16.mxu0 0
        %623 = vmatpush1.bf16.msra.mxu0 0
        %624 = vmatprep.subr.bf16.mxu0 0
        %625 = vmatpush1.bf16.msra.mxu0 0
        %626 = vmatprep.subr.bf16.mxu0 0
        %627 = vmatpush1.bf16.msra.mxu0 0
        %628 = vmatprep.mubr.bf16.mxu0 0
        %629 = vmatmul.mubr.bf16.gmra.mrb[0].mxu0 %v297
        %v630 = vpop.f32.mrb[0].mxu0
        %v631 = vadd.f32 0.0, %v630
        %v632 = vpop.f32.mrb[0].mxu0
        %v633 = vadd.f32 0.0, %v632
        %v634 = vpop.f32.mrb[0].mxu0
        %v635 = vadd.f32 0.0, %v634
        %v636 = vpop.f32.mrb[0].mxu0
        %v637 = vadd.f32 0.0, %v636
        %638 = vmatprep.mubr.bf16.mxu0 0
        %639 = vmatmul.mubr.bf16.gmra.mrb[0].mxu0 %v300
        %v640 = vpop.f32.mrb[0].mxu0
        %v641 = vadd.f32 0.0, %v640
        %v642 = vpop.f32.mrb[0].mxu0
        %v643 = vadd.f32 0.0, %v642
        %v644 = vpop.f32.mrb[0].mxu0
        %v645 = vadd.f32 0.0, %v644
        %v646 = vpop.f32.mrb[0].mxu0
        %v647 = vadd.f32 0.0, %v646
        %648 = vmatprep.mubr.bf16.mxu0 0
        %649 = vmatmul.mubr.bf16.gmra.mrb[0].mxu0 %v303
        %v650 = vpop.f32.mrb[0].mxu0
        %v651 = vadd.f32 0.0, %v650
        %v652 = vpop.f32.mrb[0].mxu0
        %v653 = vadd.f32 0.0, %v652
        %v654 = vpop.f32.mrb[0].mxu0
        %v655 = vadd.f32 0.0, %v654
        %v656 = vpop.f32.mrb[0].mxu0
        %v657 = vadd.f32 0.0, %v656
        %658 = vmatprep.mubr.bf16.mxu0 0
        %659 = vmatmul.mubr.bf16.gmra.mrb[0].mxu0 %v306
        %v660 = vpop.f32.mrb[0].mxu0
        %v661 = vadd.f32 0.0, %v660
        %v662 = vpop.f32.mrb[0].mxu0
        %v663 = vadd.f32 0.0, %v662
        %v664 = vpop.f32.mrb[0].mxu0
        %v665 = vadd.f32 0.0, %v664
        %v666 = vpop.f32.mrb[0].mxu0
        %v667 = vadd.f32 0.0, %v666
        %668 = vdwg.mxu0
        %v669 = vmax.f32 %v558, 0.0
        %v670 = vmax.f32 %v560, 0.0
        %v671 = vmax.f32 %v631, 0.0
        %v672 = vmax.f32 %v633, 0.0
        %v673 = vmax.f32 %v562, 0.0
        %v674 = vmax.f32 %v564, 0.0
        %v675 = vmax.f32 %v635, 0.0
        %v676 = vmax.f32 %v637, 0.0
        %v677 = vmax.f32 %v568, 0.0
        %v678 = vmax.f32 %v570, 0.0
        %v679 = vmax.f32 %v641, 0.0
        %v680 = vmax.f32 %v643, 0.0
        %v681 = vmax.f32 %v572, 0.0
        %v682 = vmax.f32 %v574, 0.0
        %v683 = vmax.f32 %v645, 0.0
        %v684 = vmax.f32 %v647, 0.0
        %v685 = vmax.f32 %v578, 0.0
        %v686 = vmax.f32 %v580, 0.0
        %v687 = vmax.f32 %v651, 0.0
        %v688 = vmax.f32 %v653, 0.0
        %v689 = vmax.f32 %v582, 0.0
        %v690 = vmax.f32 %v584, 0.0
        %v691 = vmax.f32 %v655, 0.0
        %v692 = vmax.f32 %v657, 0.0
        %v693 = vmax.f32 %v588, 0.0
        %v694 = vmax.f32 %v590, 0.0
        %v695 = vmax.f32 %v661, 0.0
        %v696 = vmax.f32 %v663, 0.0
        %v697 = vmax.f32 %v592, 0.0
        %v698 = vmax.f32 %v594, 0.0
        %v699 = vmax.f32 %v665, 0.0
        %v700 = vmax.f32 %v667, 0.0
        %v701 = vlaneseq
        %v702 = vand.u32 %v701, 127
        %v703 = vadd.s32 %v702, 128
        %v704 = vadd.s32 %v702, 256
        %v705 = vadd.s32 %v702, 384
        %vm706 = vcmp.lt.s32.totalorder %v702, 0
        %v707 = vsub.s32 0, %v702
        %v708 = vsel %vm706, %v707, %v702
        %v709 = vshrl.u32 %v708, 7
        %v710 = vand.u32 %v708, 127
        %v711 = vsub.s32 0, %v710
        %v712 = vsel %vm706, %v711, %v710
        %vm713 = vcmp.lt.s32.totalorder %v703, 0
        %v714 = vsub.s32 0, %v703
        %v715 = vsel %vm713, %v714, %v703
        %v716 = vshrl.u32 %v715, 7
        %v717 = vand.u32 %v715, 127
        %v718 = vsub.s32 0, %v717
        %v719 = vsel %vm713, %v718, %v717
        %vm720 = vcmp.lt.s32.totalorder %v704, 0
        %v721 = vsub.s32 0, %v704
        %v722 = vsel %vm720, %v721, %v704
        %v723 = vshrl.u32 %v722, 7
        %v724 = vand.u32 %v722, 127
        %v725 = vsub.s32 0, %v724
        %v726 = vsel %vm720, %v725, %v724
        %vm727 = vcmp.lt.s32.totalorder %v705, 0
        %v728 = vsub.s32 0, %v705
        %v729 = vsel %vm727, %v728, %v705
        %v730 = vshrl.u32 %v729, 7
        %v731 = vand.u32 %v729, 127
        %v732 = vsub.s32 0, %v731
        %v733 = vsel %vm727, %v732, %v731
        %vm734 = vcmp.ne.s32.totalorder %v712, 0
        %vm735 = vcmp.ne.s32.totalorder %v719, 0
        %vm736 = vcmp.ne.s32.totalorder %v726, 0
        %vm737 = vcmp.ne.s32.totalorder %v733, 0
        %vm738 = vcmp.lt.s32.totalorder %v712, 0
        %vm739 = vcmp.lt.s32.totalorder %v719, 0
        %vm740 = vcmp.lt.s32.totalorder %v726, 0
        %vm741 = vcmp.lt.s32.totalorder %v733, 0
        %vm742 = vmand %vm738, %vm734
        %vm743 = vmand %vm739, %vm735
        %vm744 = vmand %vm740, %vm736
        %vm745 = vmand %vm741, %vm737
        %v746 = vadd.s32 %v712, 128
        %v747 = vadd.s32 %v719, 128
        %v748 = vadd.s32 %v726, 128
        %v749 = vadd.s32 %v733, 128
        %v750 = vsel %vm742, %v746, %v712
        %v751 = vsel %vm743, %v747, %v719
        %v752 = vsel %vm744, %v748, %v726
        %v753 = vsel %vm745, %v749, %v733
        %vm754 = vcmp.ne.s32.totalorder %v750, 0
        %vm755 = vcmp.ne.s32.totalorder %v751, 0
        %vm756 = vcmp.ne.s32.totalorder %v752, 0
        %vm757 = vcmp.ne.s32.totalorder %v753, 0
        %v758 = vsel %vm754, 1, 0
        %v759 = vsel %vm755, 1, 0
        %v760 = vsel %vm756, 1, 0
        %v761 = vsel %vm757, 1, 0
        %v762 = vcvt.s32.f32 %v758
        %v763 = vcvt.s32.f32 %v759
        %v764 = vcvt.s32.f32 %v760
        %v765 = vcvt.s32.f32 %v761
        %vm766 = vcmp.ne.s32.totalorder %v750, 127
        %vm767 = vcmp.ne.s32.totalorder %v751, 127
        %vm768 = vcmp.ne.s32.totalorder %v752, 127
        %vm769 = vcmp.ne.s32.totalorder %v753, 127
        %v770 = vsel %vm766, 1, 0
        %v771 = vsel %vm767, 1, 0
        %v772 = vsel %vm768, 1, 0
        %v773 = vsel %vm769, 1, 0
        %v774 = vcvt.s32.f32 %v770
        %v775 = vcvt.s32.f32 %v771
        %v776 = vcvt.s32.f32 %v772
        %v777 = vcvt.s32.f32 %v773
        %778 = vrot.lane.b32.xlu0 %v669, 1
        %v779 = vpop.permute.xlu0 %778
        %780 = vrot.lane.b32.xlu0 %v673, 1
        %v781 = vpop.permute.xlu0 %780
        %782 = vrot.lane.b32.xlu0 %v677, 1
        %v783 = vpop.permute.xlu0 %782
        %784 = vrot.lane.b32.xlu0 %v681, 1
        %v785 = vpop.permute.xlu0 %784
        %786 = vrot.lane.b32.xlu0 %v685, 1
        %v787 = vpop.permute.xlu0 %786
        %788 = vrot.lane.b32.xlu0 %v689, 1
        %v789 = vpop.permute.xlu0 %788
        %790 = vrot.lane.b32.xlu0 %v693, 1
        %v791 = vpop.permute.xlu0 %790
        %792 = vrot.lane.b32.xlu0 %v697, 1
        %v793 = vpop.permute.xlu0 %792
        %794 = vrot.lane.b32.xlu0 %v670, 1
        %v795 = vpop.permute.xlu0 %794
        %796 = vrot.lane.b32.xlu0 %v674, 1
        %v797 = vpop.permute.xlu0 %796
        %798 = vrot.lane.b32.xlu0 %v678, 1
        %v799 = vpop.permute.xlu0 %798
        %800 = vrot.lane.b32.xlu0 %v682, 1
        %v801 = vpop.permute.xlu0 %800
        %802 = vrot.lane.b32.xlu0 %v686, 1
        %v803 = vpop.permute.xlu0 %802
        %804 = vrot.lane.b32.xlu0 %v690, 1
        %v805 = vpop.permute.xlu0 %804
        %806 = vrot.lane.b32.xlu0 %v694, 1
        %v807 = vpop.permute.xlu0 %806
        %808 = vrot.lane.b32.xlu0 %v698, 1
        %v809 = vpop.permute.xlu0 %808
        %810 = vrot.lane.b32.xlu0 %v671, 1
        %v811 = vpop.permute.xlu0 %810
        %812 = vrot.lane.b32.xlu0 %v675, 1
        %v813 = vpop.permute.xlu0 %812
        %814 = vrot.lane.b32.xlu0 %v679, 1
        %v815 = vpop.permute.xlu0 %814
        %816 = vrot.lane.b32.xlu0 %v683, 1
        %v817 = vpop.permute.xlu0 %816
        %818 = vrot.lane.b32.xlu0 %v687, 1
        %v819 = vpop.permute.xlu0 %818
        %820 = vrot.lane.b32.xlu0 %v691, 1
        %v821 = vpop.permute.xlu0 %820
        %822 = vrot.lane.b32.xlu0 %v695, 1
        %v823 = vpop.permute.xlu0 %822
        %824 = vrot.lane.b32.xlu0 %v699, 1
        %v825 = vpop.permute.xlu0 %824
        %826 = vrot.lane.b32.xlu0 %v672, 1
        %v827 = vpop.permute.xlu0 %826
        %828 = vrot.lane.b32.xlu0 %v676, 1
        %v829 = vpop.permute.xlu0 %828
        %830 = vrot.lane.b32.xlu0 %v680, 1
        %v831 = vpop.permute.xlu0 %830
        %832 = vrot.lane.b32.xlu0 %v684, 1
        %v833 = vpop.permute.xlu0 %832
        %834 = vrot.lane.b32.xlu0 %v688, 1
        %v835 = vpop.permute.xlu0 %834
        %836 = vrot.lane.b32.xlu0 %v692, 1
        %v837 = vpop.permute.xlu0 %836
        %838 = vrot.lane.b32.xlu0 %v696, 1
        %v839 = vpop.permute.xlu0 %838
        %840 = vrot.lane.b32.xlu0 %v700, 1
        %v841 = vpop.permute.xlu0 %840
        %vm842 = vcmp.lt.s32.totalorder %v702, 1
        %v843 = vsel %vm842, %v811, %v827
        %v844 = vsel %vm842, %v813, %v829
        %v845 = vsel %vm842, %v815, %v831
        %v846 = vsel %vm842, %v817, %v833
        %v847 = vsel %vm842, %v819, %v835
        %v848 = vsel %vm842, %v821, %v837
        %v849 = vsel %vm842, %v823, %v839
        %v850 = vsel %vm842, %v825, %v841
        %v851 = vsel %vm842, %v795, %v811
        %v852 = vsel %vm842, %v797, %v813
        %v853 = vsel %vm842, %v799, %v815
        %v854 = vsel %vm842, %v801, %v817
        %v855 = vsel %vm842, %v803, %v819
        %v856 = vsel %vm842, %v805, %v821
        %v857 = vsel %vm842, %v807, %v823
        %v858 = vsel %vm842, %v809, %v825
        %v859 = vsel %vm842, %v779, %v795
        %v860 = vsel %vm842, %v781, %v797
        %v861 = vsel %vm842, %v783, %v799
        %v862 = vsel %vm842, %v785, %v801
        %v863 = vsel %vm842, %v787, %v803
        %v864 = vsel %vm842, %v789, %v805
        %v865 = vsel %vm842, %v791, %v807
        %v866 = vsel %vm842, %v793, %v809
        %v867 = vsel %vm842, %v827, %v779
        %v868 = vsel %vm842, %v829, %v781
        %v869 = vsel %vm842, %v831, %v783
        %v870 = vsel %vm842, %v833, %v785
        %v871 = vsel %vm842, %v835, %v787
        %v872 = vsel %vm842, %v837, %v789
        %v873 = vsel %vm842, %v839, %v791
        %v874 = vsel %vm842, %v841, %v793
        %v875 = vmul.f32 %v867, %v762
        %v876 = vmul.f32 %v859, %v763
        %v877 = vmul.f32 %v851, %v764
        %v878 = vmul.f32 %v843, %v765
        %v879 = vmul.f32 %v868, %v762
        %v880 = vmul.f32 %v860, %v763
        %v881 = vmul.f32 %v852, %v764
        %v882 = vmul.f32 %v844, %v765
        %v883 = vmul.f32 %v869, %v762
        %v884 = vmul.f32 %v861, %v763
        %v885 = vmul.f32 %v853, %v764
        %v886 = vmul.f32 %v845, %v765
        %v887 = vmul.f32 %v870, %v762
        %v888 = vmul.f32 %v862, %v763
        %v889 = vmul.f32 %v854, %v764
        %v890 = vmul.f32 %v846, %v765
        %v891 = vmul.f32 %v871, %v762
        %v892 = vmul.f32 %v863, %v763
        %v893 = vmul.f32 %v855, %v764
        %v894 = vmul.f32 %v847, %v765
        %v895 = vmul.f32 %v872, %v762
        %v896 = vmul.f32 %v864, %v763
        %v897 = vmul.f32 %v856, %v764
        %v898 = vmul.f32 %v848, %v765
        %v899 = vmul.f32 %v873, %v762
        %v900 = vmul.f32 %v865, %v763
        %v901 = vmul.f32 %v857, %v764
        %v902 = vmul.f32 %v849, %v765
        %v903 = vmul.f32 %v874, %v762
        %v904 = vmul.f32 %v866, %v763
        %v905 = vmul.f32 %v858, %v764
        %v906 = vmul.f32 %v850, %v765
        %v907 = vmax.f32 %v875, %v467
        %v908 = vmax.f32 %v876, %v468
        %v909 = vmax.f32 %v877, %v469
        %v910 = vmax.f32 %v878, %v470
        %v911 = vmax.f32 %v879, %v471
        %v912 = vmax.f32 %v880, %v472
        %v913 = vmax.f32 %v881, %v473
        %v914 = vmax.f32 %v882, %v474
        %v915 = vmax.f32 %v883, %v475
        %v916 = vmax.f32 %v884, %v476
        %v917 = vmax.f32 %v885, %v477
        %v918 = vmax.f32 %v886, %v478
        %v919 = vmax.f32 %v887, %v479
        %v920 = vmax.f32 %v888, %v480
        %v921 = vmax.f32 %v889, %v481
        %v922 = vmax.f32 %v890, %v482
        %v923 = vmax.f32 %v891, %v483
        %v924 = vmax.f32 %v892, %v484
        %v925 = vmax.f32 %v893, %v485
        %v926 = vmax.f32 %v894, %v486
        %v927 = vmax.f32 %v895, %v487
        %v928 = vmax.f32 %v896, %v488
        %v929 = vmax.f32 %v897, %v489
        %v930 = vmax.f32 %v898, %v490
        %v931 = vmax.f32 %v899, %v491
        %v932 = vmax.f32 %v900, %v492
        %v933 = vmax.f32 %v901, %v493
        %v934 = vmax.f32 %v902, %v494
        %v935 = vmax.f32 %v903, %v495
        %v936 = vmax.f32 %v904, %v496
        %v937 = vmax.f32 %v905, %v497
        %v938 = vmax.f32 %v906, %v498
        %v939 = vmax.f32 %v907, %v669
        %v940 = vmax.f32 %v908, %v670
        %v941 = vmax.f32 %v909, %v671
        %v942 = vmax.f32 %v910, %v672
        %v943 = vmax.f32 %v911, %v673
        %v944 = vmax.f32 %v912, %v674
        %v945 = vmax.f32 %v913, %v675
        %v946 = vmax.f32 %v914, %v676
        %v947 = vmax.f32 %v915, %v677
        %v948 = vmax.f32 %v916, %v678
        %v949 = vmax.f32 %v917, %v679
        %v950 = vmax.f32 %v918, %v680
        %v951 = vmax.f32 %v919, %v681
        %v952 = vmax.f32 %v920, %v682
        %v953 = vmax.f32 %v921, %v683
        %v954 = vmax.f32 %v922, %v684
        %v955 = vmax.f32 %v923, %v685
        %v956 = vmax.f32 %v924, %v686
        %v957 = vmax.f32 %v925, %v687
        %v958 = vmax.f32 %v926, %v688
        %v959 = vmax.f32 %v927, %v689
        %v960 = vmax.f32 %v928, %v690
        %v961 = vmax.f32 %v929, %v691
        %v962 = vmax.f32 %v930, %v692
        %v963 = vmax.f32 %v931, %v693
        %v964 = vmax.f32 %v932, %v694
        %v965 = vmax.f32 %v933, %v695
        %v966 = vmax.f32 %v934, %v696
        %v967 = vmax.f32 %v935, %v697
        %v968 = vmax.f32 %v936, %v698
        %v969 = vmax.f32 %v937, %v699
        %v970 = vmax.f32 %v938, %v700
        %vm971 = vcmask 1040384
        %vm972 = vsmask.f32 256
        %vm973 = vmand %vm971, %vm972
        %v974 = vsel %vm973, 1065369472, 0
        %975 = vrot.lane.b32.xlu0 %v939, 1
        %v976 = vpop.permute.xlu0 %975
        %977 = vrot.lane.b32.xlu0 %v943, 1
        %v978 = vpop.permute.xlu0 %977
        %979 = vrot.lane.b32.xlu0 %v947, 1
        %v980 = vpop.permute.xlu0 %979
        %981 = vrot.lane.b32.xlu0 %v951, 1
        %v982 = vpop.permute.xlu0 %981
        %983 = vrot.lane.b32.xlu0 %v955, 1
        %v984 = vpop.permute.xlu0 %983
        %985 = vrot.lane.b32.xlu0 %v959, 1
        %v986 = vpop.permute.xlu0 %985
        %987 = vrot.lane.b32.xlu0 %v963, 1
        %v988 = vpop.permute.xlu0 %987
        %989 = vrot.lane.b32.xlu0 %v967, 1
        %v990 = vpop.permute.xlu0 %989
        %991 = vrot.lane.b32.xlu0 %v940, 1
        %v992 = vpop.permute.xlu0 %991
        %993 = vrot.lane.b32.xlu0 %v944, 1
        %v994 = vpop.permute.xlu0 %993
        %995 = vrot.lane.b32.xlu0 %v948, 1
        %v996 = vpop.permute.xlu0 %995
        %997 = vrot.lane.b32.xlu0 %v952, 1
        %v998 = vpop.permute.xlu0 %997
        %999 = vrot.lane.b32.xlu0 %v956, 1
        %v1000 = vpop.permute.xlu0 %999
        %1001 = vrot.lane.b32.xlu0 %v960, 1
        %v1002 = vpop.permute.xlu0 %1001
        %1003 = vrot.lane.b32.xlu0 %v964, 1
        %v1004 = vpop.permute.xlu0 %1003
        %1005 = vrot.lane.b32.xlu0 %v968, 1
        %v1006 = vpop.permute.xlu0 %1005
        %1007 = vrot.lane.b32.xlu0 %v941, 1
        %v1008 = vpop.permute.xlu0 %1007
        %1009 = vrot.lane.b32.xlu0 %v945, 1
        %v1010 = vpop.permute.xlu0 %1009
        %1011 = vrot.lane.b32.xlu0 %v949, 1
        %v1012 = vpop.permute.xlu0 %1011
        %1013 = vrot.lane.b32.xlu0 %v953, 1
        %v1014 = vpop.permute.xlu0 %1013
        %1015 = vrot.lane.b32.xlu0 %v957, 1
        %v1016 = vpop.permute.xlu0 %1015
        %1017 = vrot.lane.b32.xlu0 %v961, 1
        %v1018 = vpop.permute.xlu0 %1017
        %1019 = vrot.lane.b32.xlu0 %v965, 1
        %v1020 = vpop.permute.xlu0 %1019
        %1021 = vrot.lane.b32.xlu0 %v969, 1
        %v1022 = vpop.permute.xlu0 %1021
        %1023 = vrot.lane.b32.xlu0 %v942, 1
        %v1024 = vpop.permute.xlu0 %1023
        %1025 = vrot.lane.b32.xlu0 %v946, 1
        %v1026 = vpop.permute.xlu0 %1025
        %1027 = vrot.lane.b32.xlu0 %v950, 1
        %v1028 = vpop.permute.xlu0 %1027
        %1029 = vrot.lane.b32.xlu0 %v954, 1
        %v1030 = vpop.permute.xlu0 %1029
        %1031 = vrot.lane.b32.xlu0 %v958, 1
        %v1032 = vpop.permute.xlu0 %1031
        %1033 = vrot.lane.b32.xlu0 %v962, 1
        %v1034 = vpop.permute.xlu0 %1033
        %1035 = vrot.lane.b32.xlu0 %v966, 1
        %v1036 = vpop.permute.xlu0 %1035
        %1037 = vrot.lane.b32.xlu0 %v970, 1
        %v1038 = vpop.permute.xlu0 %1037
        %v1039 = vsel %vm842, %v1008, %v1024
        %v1040 = vsel %vm842, %v1010, %v1026
        %v1041 = vsel %vm842, %v1012, %v1028
        %v1042 = vsel %vm842, %v1014, %v1030
        %v1043 = vsel %vm842, %v1016, %v1032
        %v1044 = vsel %vm842, %v1018, %v1034
        %v1045 = vsel %vm842, %v1020, %v1036
        %v1046 = vsel %vm842, %v1022, %v1038
        %v1047 = vsel %vm842, %v992, %v1008
        %v1048 = vsel %vm842, %v994, %v1010
        %v1049 = vsel %vm842, %v996, %v1012
        %v1050 = vsel %vm842, %v998, %v1014
        %v1051 = vsel %vm842, %v1000, %v1016
        %v1052 = vsel %vm842, %v1002, %v1018
        %v1053 = vsel %vm842, %v1004, %v1020
        %v1054 = vsel %vm842, %v1006, %v1022
        %v1055 = vsel %vm842, %v976, %v992
        %v1056 = vsel %vm842, %v978, %v994
        %v1057 = vsel %vm842, %v980, %v996
        %v1058 = vsel %vm842, %v982, %v998
        %v1059 = vsel %vm842, %v984, %v1000
        %v1060 = vsel %vm842, %v986, %v1002
        %v1061 = vsel %vm842, %v988, %v1004
        %v1062 = vsel %vm842, %v990, %v1006
        %v1063 = vsel %vm842, %v1024, %v976
        %v1064 = vsel %vm842, %v1026, %v978
        %v1065 = vsel %vm842, %v1028, %v980
        %v1066 = vsel %vm842, %v1030, %v982
        %v1067 = vsel %vm842, %v1032, %v984
        %v1068 = vsel %vm842, %v1034, %v986
        %v1069 = vsel %vm842, %v1036, %v988
        %v1070 = vsel %vm842, %v1038, %v990
        %v1071 = vmul.f32 %v1063, %v762
        %v1072 = vmul.f32 %v1055, %v763
        %v1073 = vmul.f32 %v1047, %v764
        %v1074 = vmul.f32 %v1039, %v765
        %v1075 = vmul.f32 %v1064, %v762
        %v1076 = vmul.f32 %v1056, %v763
        %v1077 = vmul.f32 %v1048, %v764
        %v1078 = vmul.f32 %v1040, %v765
        %v1079 = vmul.f32 %v1065, %v762
        %v1080 = vmul.f32 %v1057, %v763
        %v1081 = vmul.f32 %v1049, %v764
        %v1082 = vmul.f32 %v1041, %v765
        %v1083 = vmul.f32 %v1066, %v762
        %v1084 = vmul.f32 %v1058, %v763
        %v1085 = vmul.f32 %v1050, %v764
        %v1086 = vmul.f32 %v1042, %v765
        %v1087 = vmul.f32 %v1067, %v762
        %v1088 = vmul.f32 %v1059, %v763
        %v1089 = vmul.f32 %v1051, %v764
        %v1090 = vmul.f32 %v1043, %v765
        %v1091 = vmul.f32 %v1068, %v762
        %v1092 = vmul.f32 %v1060, %v763
        %v1093 = vmul.f32 %v1052, %v764
        %v1094 = vmul.f32 %v1044, %v765
        %v1095 = vmul.f32 %v1069, %v762
        %v1096 = vmul.f32 %v1061, %v763
        %v1097 = vmul.f32 %v1053, %v764
        %v1098 = vmul.f32 %v1045, %v765
        %v1099 = vmul.f32 %v1070, %v762
        %v1100 = vmul.f32 %v1062, %v763
        %v1101 = vmul.f32 %v1054, %v764
        %v1102 = vmul.f32 %v1046, %v765
        %v1103 = vpack.c.bf16 %v1075, %v1071
        %v1104 = vpack.c.bf16 %v1076, %v1072
        %v1105 = vpack.c.bf16 %v1077, %v1073
        %v1106 = vpack.c.bf16 %v1078, %v1074
        %v1107 = vpack.c.bf16 %v1083, %v1079
        %v1108 = vpack.c.bf16 %v1084, %v1080
        %v1109 = vpack.c.bf16 %v1085, %v1081
        %v1110 = vpack.c.bf16 %v1086, %v1082
        %v1111 = vpack.c.bf16 %v1091, %v1087
        %v1112 = vpack.c.bf16 %v1092, %v1088
        %v1113 = vpack.c.bf16 %v1093, %v1089
        %v1114 = vpack.c.bf16 %v1094, %v1090
        %v1115 = vpack.c.bf16 %v1099, %v1095
        %v1116 = vpack.c.bf16 %v1100, %v1096
        %v1117 = vpack.c.bf16 %v1101, %v1097
        %v1118 = vpack.c.bf16 %v1102, %v1098
        %1119 = vrot.lane.b32.xlu0 %v939, 127
        %v1120 = vpop.permute.xlu0 %1119
        %1121 = vrot.lane.b32.xlu0 %v943, 127
        %v1122 = vpop.permute.xlu0 %1121
        %1123 = vrot.lane.b32.xlu0 %v947, 127
        %v1124 = vpop.permute.xlu0 %1123
        %1125 = vrot.lane.b32.xlu0 %v951, 127
        %v1126 = vpop.permute.xlu0 %1125
        %1127 = vrot.lane.b32.xlu0 %v955, 127
        %v1128 = vpop.permute.xlu0 %1127
        %1129 = vrot.lane.b32.xlu0 %v959, 127
        %v1130 = vpop.permute.xlu0 %1129
        %1131 = vrot.lane.b32.xlu0 %v963, 127
        %v1132 = vpop.permute.xlu0 %1131
        %1133 = vrot.lane.b32.xlu0 %v967, 127
        %v1134 = vpop.permute.xlu0 %1133
        %1135 = vrot.lane.b32.xlu0 %v940, 127
        %v1136 = vpop.permute.xlu0 %1135
        %1137 = vrot.lane.b32.xlu0 %v944, 127
        %v1138 = vpop.permute.xlu0 %1137
        %1139 = vrot.lane.b32.xlu0 %v948, 127
        %v1140 = vpop.permute.xlu0 %1139
        %1141 = vrot.lane.b32.xlu0 %v952, 127
        %v1142 = vpop.permute.xlu0 %1141
        %1143 = vrot.lane.b32.xlu0 %v956, 127
        %v1144 = vpop.permute.xlu0 %1143
        %1145 = vrot.lane.b32.xlu0 %v960, 127
        %v1146 = vpop.permute.xlu0 %1145
        %1147 = vrot.lane.b32.xlu0 %v964, 127
        %v1148 = vpop.permute.xlu0 %1147
        %1149 = vrot.lane.b32.xlu0 %v968, 127
        %v1150 = vpop.permute.xlu0 %1149
        %1151 = vrot.lane.b32.xlu0 %v941, 127
        %v1152 = vpop.permute.xlu0 %1151
        %1153 = vrot.lane.b32.xlu0 %v945, 127
        %v1154 = vpop.permute.xlu0 %1153
        %1155 = vrot.lane.b32.xlu0 %v949, 127
        %v1156 = vpop.permute.xlu0 %1155
        %1157 = vrot.lane.b32.xlu0 %v953, 127
        %v1158 = vpop.permute.xlu0 %1157
        %1159 = vrot.lane.b32.xlu0 %v957, 127
        %v1160 = vpop.permute.xlu0 %1159
        %1161 = vrot.lane.b32.xlu0 %v961, 127
        %v1162 = vpop.permute.xlu0 %1161
        %1163 = vrot.lane.b32.xlu0 %v965, 127
        %v1164 = vpop.permute.xlu0 %1163
        %1165 = vrot.lane.b32.xlu0 %v969, 127
        %v1166 = vpop.permute.xlu0 %1165
        %1167 = vrot.lane.b32.xlu0 %v942, 127
        %v1168 = vpop.permute.xlu0 %1167
        %1169 = vrot.lane.b32.xlu0 %v946, 127
        %v1170 = vpop.permute.xlu0 %1169
        %1171 = vrot.lane.b32.xlu0 %v950, 127
        %v1172 = vpop.permute.xlu0 %1171
        %1173 = vrot.lane.b32.xlu0 %v954, 127
        %v1174 = vpop.permute.xlu0 %1173
        %1175 = vrot.lane.b32.xlu0 %v958, 127
        %v1176 = vpop.permute.xlu0 %1175
        %1177 = vrot.lane.b32.xlu0 %v962, 127
        %v1178 = vpop.permute.xlu0 %1177
        %1179 = vrot.lane.b32.xlu0 %v966, 127
        %v1180 = vpop.permute.xlu0 %1179
        %1181 = vrot.lane.b32.xlu0 %v970, 127
        %v1182 = vpop.permute.xlu0 %1181
        %vm1183 = vcmp.lt.s32.totalorder %v702, 127
        %v1184 = vsel %vm1183, %v1152, %v1168
        %v1185 = vsel %vm1183, %v1154, %v1170
        %v1186 = vsel %vm1183, %v1156, %v1172
        %v1187 = vsel %vm1183, %v1158, %v1174
        %v1188 = vsel %vm1183, %v1160, %v1176
        %v1189 = vsel %vm1183, %v1162, %v1178
        %v1190 = vsel %vm1183, %v1164, %v1180
        %v1191 = vsel %vm1183, %v1166, %v1182
        %v1192 = vsel %vm1183, %v1136, %v1152
        %v1193 = vsel %vm1183, %v1138, %v1154
        %v1194 = vsel %vm1183, %v1140, %v1156
        %v1195 = vsel %vm1183, %v1142, %v1158
        %v1196 = vsel %vm1183, %v1144, %v1160
        %v1197 = vsel %vm1183, %v1146, %v1162
        %v1198 = vsel %vm1183, %v1148, %v1164
        %v1199 = vsel %vm1183, %v1150, %v1166
        %v1200 = vsel %vm1183, %v1120, %v1136
        %v1201 = vsel %vm1183, %v1122, %v1138
        %v1202 = vsel %vm1183, %v1124, %v1140
        %v1203 = vsel %vm1183, %v1126, %v1142
        %v1204 = vsel %vm1183, %v1128, %v1144
        %v1205 = vsel %vm1183, %v1130, %v1146
        %v1206 = vsel %vm1183, %v1132, %v1148
        %v1207 = vsel %vm1183, %v1134, %v1150
        %v1208 = vsel %vm1183, %v1168, %v1120
        %v1209 = vsel %vm1183, %v1170, %v1122
        %v1210 = vsel %vm1183, %v1172, %v1124
        %v1211 = vsel %vm1183, %v1174, %v1126
        %v1212 = vsel %vm1183, %v1176, %v1128
        %v1213 = vsel %vm1183, %v1178, %v1130
        %v1214 = vsel %vm1183, %v1180, %v1132
        %v1215 = vsel %vm1183, %v1182, %v1134
        %v1216 = vmul.f32 %v1200, %v774
        %v1217 = vmul.f32 %v1192, %v775
        %v1218 = vmul.f32 %v1184, %v776
        %v1219 = vmul.f32 %v1208, %v777
        %v1220 = vmul.f32 %v1201, %v774
        %v1221 = vmul.f32 %v1193, %v775
        %v1222 = vmul.f32 %v1185, %v776
        %v1223 = vmul.f32 %v1209, %v777
        %v1224 = vmul.f32 %v1202, %v774
        %v1225 = vmul.f32 %v1194, %v775
        %v1226 = vmul.f32 %v1186, %v776
        %v1227 = vmul.f32 %v1210, %v777
        %v1228 = vmul.f32 %v1203, %v774
        %v1229 = vmul.f32 %v1195, %v775
        %v1230 = vmul.f32 %v1187, %v776
        %v1231 = vmul.f32 %v1211, %v777
        %v1232 = vmul.f32 %v1204, %v774
        %v1233 = vmul.f32 %v1196, %v775
        %v1234 = vmul.f32 %v1188, %v776
        %v1235 = vmul.f32 %v1212, %v777
        %v1236 = vmul.f32 %v1205, %v774
        %v1237 = vmul.f32 %v1197, %v775
        %v1238 = vmul.f32 %v1189, %v776
        %v1239 = vmul.f32 %v1213, %v777
        %v1240 = vmul.f32 %v1206, %v774
        %v1241 = vmul.f32 %v1198, %v775
        %v1242 = vmul.f32 %v1190, %v776
        %v1243 = vmul.f32 %v1214, %v777
        %v1244 = vmul.f32 %v1207, %v774
        %v1245 = vmul.f32 %v1199, %v775
        %v1246 = vmul.f32 %v1191, %v776
        %v1247 = vmul.f32 %v1215, %v777
        %v1248 = vpack.c.bf16 %v1220, %v1216
        %v1249 = vpack.c.bf16 %v1221, %v1217
        %v1250 = vpack.c.bf16 %v1222, %v1218
        %v1251 = vpack.c.bf16 %v1223, %v1219
        %v1252 = vpack.c.bf16 %v1228, %v1224
        %v1253 = vpack.c.bf16 %v1229, %v1225
        %v1254 = vpack.c.bf16 %v1230, %v1226
        %v1255 = vpack.c.bf16 %v1231, %v1227
        %v1256 = vpack.c.bf16 %v1236, %v1232
        %v1257 = vpack.c.bf16 %v1237, %v1233
        %v1258 = vpack.c.bf16 %v1238, %v1234
        %v1259 = vpack.c.bf16 %v1239, %v1235
        %v1260 = vpack.c.bf16 %v1244, %v1240
        %v1261 = vpack.c.bf16 %v1245, %v1241
        %v1262 = vpack.c.bf16 %v1246, %v1242
        %v1263 = vpack.c.bf16 %v1247, %v1243
        %v1264 = vpack.c.bf16 %v943, %v939
        %v1265 = vpack.c.bf16 %v944, %v940
        %v1266 = vpack.c.bf16 %v945, %v941
        %v1267 = vpack.c.bf16 %v946, %v942
        %v1268 = vpack.c.bf16 %v951, %v947
        %v1269 = vpack.c.bf16 %v952, %v948
        %v1270 = vpack.c.bf16 %v953, %v949
        %v1271 = vpack.c.bf16 %v954, %v950
        %v1272 = vpack.c.bf16 %v959, %v955
        %v1273 = vpack.c.bf16 %v960, %v956
        %v1274 = vpack.c.bf16 %v961, %v957
        %v1275 = vpack.c.bf16 %v962, %v958
        %v1276 = vpack.c.bf16 %v967, %v963
        %v1277 = vpack.c.bf16 %v968, %v964
        %v1278 = vpack.c.bf16 %v969, %v965
        %v1279 = vpack.c.bf16 %v970, %v966
        %v1280 = vld [vmem:[#allocation5] sm:$0xff]
        %v1281 = vld [vmem:[#allocation5 + $0x8] sm:$0xff]
        %v1282 = vld [vmem:[#allocation5 + $0x10] sm:$0xff]
        %v1283 = vld [vmem:[#allocation5 + $0x18] sm:$0xff]
        %v1284 = vld [vmem:[#allocation5 + $0x20] sm:$0xff]
        %v1285 = vld [vmem:[#allocation5 + $0x28] sm:$0xff]
        %v1286 = vld [vmem:[#allocation5 + $0x30] sm:$0xff]
        %v1287 = vld [vmem:[#allocation5 + $0x38] sm:$0xff]
        %v1296 = vunpack.c.l.b16 %v1280
        %v1297 = vunpack.c.h.b16 %v1280
        %v1298 = vunpack.c.l.b16 %v1281
        %v1299 = vunpack.c.h.b16 %v1281
        %v1300 = vunpack.c.l.b16 %v1282
        %v1301 = vunpack.c.h.b16 %v1282
        %v1302 = vunpack.c.l.b16 %v1283
        %v1303 = vunpack.c.h.b16 %v1283
        %v1304 = vunpack.c.l.b16 %v1284
        %v1305 = vunpack.c.h.b16 %v1284
        %v1306 = vunpack.c.l.b16 %v1285
        %v1307 = vunpack.c.h.b16 %v1285
        %v1308 = vunpack.c.l.b16 %v1286
        %v1309 = vunpack.c.h.b16 %v1286
        %v1310 = vunpack.c.l.b16 %v1287
        %v1311 = vunpack.c.h.b16 %v1287
        %v1312 = vpack.c.b16 %v1298, %v1296
        %v1313 = vpack.c.b16 %v1299, %v1297
        %v1314 = vpack.c.b16 %v1302, %v1300
        %v1315 = vpack.c.b16 %v1303, %v1301
        %v1316 = vpack.c.b16 %v1306, %v1304
        %v1317 = vpack.c.b16 %v1307, %v1305
        %v1318 = vpack.c.b16 %v1310, %v1308
        %v1319 = vpack.c.b16 %v1311, %v1309
        %vm1324 = vcmask 654336
        %v1326 = vsel %vm1324, %v1313, 0
        %v1329 = vsel %vm1324, %v1315, 0
        %v1332 = vsel %vm1324, %v1317, 0
        %v1335 = vsel %vm1324, %v1319, 0
        %1337 = vmatprep.subr.bf16.mxu0 %v1104
        %1338 = vmatpush1.bf16.msra.mxu0 %v1103
        %1339 = vmatprep.subr.bf16.mxu0 %v1108
        %1340 = vmatpush1.bf16.msra.mxu0 %v1107
        %1341 = vmatprep.subr.bf16.mxu0 %v1112
        %1342 = vmatpush1.bf16.msra.mxu0 %v1111
        %1343 = vmatprep.subr.bf16.mxu0 %v1116
        %1344 = vmatpush1.bf16.msra.mxu0 %v1115
        %1345 = vmatprep.subr.bf16.mxu0 %v1265
        %1346 = vmatpush1.bf16.msra.mxu0 %v1264
        %1347 = vmatprep.subr.bf16.mxu0 %v1269
        %1348 = vmatpush1.bf16.msra.mxu0 %v1268
        %1349 = vmatprep.subr.bf16.mxu0 %v1273
        %1350 = vmatpush1.bf16.msra.mxu0 %v1272
        %1351 = vmatprep.subr.bf16.mxu0 %v1277
        %1352 = vmatpush1.bf16.msra.mxu0 %v1276
        %1353 = vmatprep.subr.bf16.mxu0 %v1249
        %1354 = vmatpush1.bf16.msra.mxu0 %v1248
        %1355 = vmatprep.subr.bf16.mxu0 %v1253
        %1356 = vmatpush1.bf16.msra.mxu0 %v1252
        %1357 = vmatprep.subr.bf16.mxu0 %v1257
        %1358 = vmatpush1.bf16.msra.mxu0 %v1256
        %1359 = vmatprep.subr.bf16.mxu0 %v1261
        %1360 = vmatpush1.bf16.msra.mxu0 %v1260
        %1361 = vmatprep.subr.bf16.mxu0 %v974
        %1362 = vmatpush1.bf16.msra.mxu0 %v974
        %1363 = vmatprep.subr.bf16.mxu0 0
        %1364 = vmatpush1.bf16.msra.mxu0 0
        %1365 = vmatprep.subr.bf16.mxu0 0
        %1366 = vmatpush1.bf16.msra.mxu0 0
        %1367 = vmatprep.subr.bf16.mxu0 0
        %1368 = vmatpush1.bf16.msra.mxu0 0
        %1369 = vmatprep.mubr.bf16.mxu0 %v1326
        %1370 = vmatmul.mubr.bf16.gmra.mrb[0].mxu0 %v1312
        %v1371 = vpop.f32.mrb[0].mxu0
        %v1372 = vadd.f32 0.0, %v1371
        %v1373 = vpop.f32.mrb[0].mxu0
        %v1374 = vadd.f32 0.0, %v1373
        %v1375 = vpop.f32.mrb[0].mxu0
        %v1376 = vadd.f32 0.0, %v1375
        %v1377 = vpop.f32.mrb[0].mxu0
        %v1378 = vadd.f32 0.0, %v1377
        %1379 = vmatprep.mubr.bf16.mxu0 %v1329
        %1380 = vmatmul.mubr.bf16.gmra.mrb[0].mxu0 %v1314
        %v1381 = vpop.f32.mrb[0].mxu0
        %v1382 = vadd.f32 0.0, %v1381
        %v1383 = vpop.f32.mrb[0].mxu0
        %v1384 = vadd.f32 0.0, %v1383
        %v1385 = vpop.f32.mrb[0].mxu0
        %v1386 = vadd.f32 0.0, %v1385
        %v1387 = vpop.f32.mrb[0].mxu0
        %v1388 = vadd.f32 0.0, %v1387
        %1389 = vmatprep.mubr.bf16.mxu0 %v1332
        %1390 = vmatmul.mubr.bf16.gmra.mrb[0].mxu0 %v1316
        %v1391 = vpop.f32.mrb[0].mxu0
        %v1392 = vadd.f32 0.0, %v1391
        %v1393 = vpop.f32.mrb[0].mxu0
        %v1394 = vadd.f32 0.0, %v1393
        %v1395 = vpop.f32.mrb[0].mxu0
        %v1396 = vadd.f32 0.0, %v1395
        %v1397 = vpop.f32.mrb[0].mxu0
        %v1398 = vadd.f32 0.0, %v1397
        %1399 = vmatprep.mubr.bf16.mxu0 %v1335
        %1400 = vmatmul.mubr.bf16.gmra.mrb[0].mxu0 %v1318
        %v1401 = vpop.f32.mrb[0].mxu0
        %v1402 = vadd.f32 0.0, %v1401
        %v1403 = vpop.f32.mrb[0].mxu0
        %v1404 = vadd.f32 0.0, %v1403
        %v1405 = vpop.f32.mrb[0].mxu0
        %v1406 = vadd.f32 0.0, %v1405
        %v1407 = vpop.f32.mrb[0].mxu0
        %v1408 = vadd.f32 0.0, %v1407
        %1409 = vdwg.mxu0
        %1410 = vmatprep.subr.bf16.mxu0 %v1106
        %1411 = vmatpush1.bf16.msra.mxu0 %v1105
        %1412 = vmatprep.subr.bf16.mxu0 %v1110
        %1413 = vmatpush1.bf16.msra.mxu0 %v1109
        %1414 = vmatprep.subr.bf16.mxu0 %v1114
        %1415 = vmatpush1.bf16.msra.mxu0 %v1113
        %1416 = vmatprep.subr.bf16.mxu0 %v1118
        %1417 = vmatpush1.bf16.msra.mxu0 %v1117
        %1418 = vmatprep.subr.bf16.mxu0 %v1267
        %1419 = vmatpush1.bf16.msra.mxu0 %v1266
        %1420 = vmatprep.subr.bf16.mxu0 %v1271
        %1421 = vmatpush1.bf16.msra.mxu0 %v1270
        %1422 = vmatprep.subr.bf16.mxu0 %v1275
        %1423 = vmatpush1.bf16.msra.mxu0 %v1274
        %1424 = vmatprep.subr.bf16.mxu0 %v1279
        %1425 = vmatpush1.bf16.msra.mxu0 %v1278
        %1426 = vmatprep.subr.bf16.mxu0 %v1251
        %1427 = vmatpush1.bf16.msra.mxu0 %v1250
        %1428 = vmatprep.subr.bf16.mxu0 %v1255
        %1429 = vmatpush1.bf16.msra.mxu0 %v1254
        %1430 = vmatprep.subr.bf16.mxu0 %v1259
        %1431 = vmatpush1.bf16.msra.mxu0 %v1258
        %1432 = vmatprep.subr.bf16.mxu0 %v1263
        %1433 = vmatpush1.bf16.msra.mxu0 %v1262
        %1434 = vmatprep.subr.bf16.mxu0 %v974
        %1435 = vmatpush1.bf16.msra.mxu0 %v974
        %1436 = vmatprep.subr.bf16.mxu0 0
        %1437 = vmatpush1.bf16.msra.mxu0 0
        %1438 = vmatprep.subr.bf16.mxu0 0
        %1439 = vmatpush1.bf16.msra.mxu0 0
        %1440 = vmatprep.subr.bf16.mxu0 0
        %1441 = vmatpush1.bf16.msra.mxu0 0
        %1442 = vmatprep.mubr.bf16.mxu0 %v1326
        %1443 = vmatmul.mubr.bf16.gmra.mrb[0].mxu0 %v1312
        %v1444 = vpop.f32.mrb[0].mxu0
        %v1445 = vadd.f32 0.0, %v1444
        %v1446 = vpop.f32.mrb[0].mxu0
        %v1447 = vadd.f32 0.0, %v1446
        %v1448 = vpop.f32.mrb[0].mxu0
        %v1449 = vadd.f32 0.0, %v1448
        %v1450 = vpop.f32.mrb[0].mxu0
        %v1451 = vadd.f32 0.0, %v1450
        %1452 = vmatprep.mubr.bf16.mxu0 %v1329
        %1453 = vmatmul.mubr.bf16.gmra.mrb[0].mxu0 %v1314
        %v1454 = vpop.f32.mrb[0].mxu0
        %v1455 = vadd.f32 0.0, %v1454
        %v1456 = vpop.f32.mrb[0].mxu0
        %v1457 = vadd.f32 0.0, %v1456
        %v1458 = vpop.f32.mrb[0].mxu0
        %v1459 = vadd.f32 0.0, %v1458
        %v1460 = vpop.f32.mrb[0].mxu0
        %v1461 = vadd.f32 0.0, %v1460
        %1462 = vmatprep.mubr.bf16.mxu0 %v1332
        %1463 = vmatmul.mubr.bf16.gmra.mrb[0].mxu0 %v1316
        %v1464 = vpop.f32.mrb[0].mxu0
        %v1465 = vadd.f32 0.0, %v1464
        %v1466 = vpop.f32.mrb[0].mxu0
        %v1467 = vadd.f32 0.0, %v1466
        %v1468 = vpop.f32.mrb[0].mxu0
        %v1469 = vadd.f32 0.0, %v1468
        %v1470 = vpop.f32.mrb[0].mxu0
        %v1471 = vadd.f32 0.0, %v1470
        %1472 = vmatprep.mubr.bf16.mxu0 %v1335
        %1473 = vmatmul.mubr.bf16.gmra.mrb[0].mxu0 %v1318
        %v1474 = vpop.f32.mrb[0].mxu0
        %v1475 = vadd.f32 0.0, %v1474
        %v1476 = vpop.f32.mrb[0].mxu0
        %v1477 = vadd.f32 0.0, %v1476
        %v1478 = vpop.f32.mrb[0].mxu0
        %v1479 = vadd.f32 0.0, %v1478
        %v1480 = vpop.f32.mrb[0].mxu0
        %v1481 = vadd.f32 0.0, %v1480
        %1482 = vdwg.mxu0
        %v1483 = vmax.f32 %v1372, 0.0
        %v1484 = vmax.f32 %v1374, 0.0
        %v1485 = vmax.f32 %v1445, 0.0
        %v1486 = vmax.f32 %v1447, 0.0
        %v1487 = vmax.f32 %v1376, 0.0
        %v1488 = vmax.f32 %v1378, 0.0
        %v1489 = vmax.f32 %v1449, 0.0
        %v1490 = vmax.f32 %v1451, 0.0
        %v1491 = vmax.f32 %v1382, 0.0
        %v1492 = vmax.f32 %v1384, 0.0
        %v1493 = vmax.f32 %v1455, 0.0
        %v1494 = vmax.f32 %v1457, 0.0
        %v1495 = vmax.f32 %v1386, 0.0
        %v1496 = vmax.f32 %v1388, 0.0
        %v1497 = vmax.f32 %v1459, 0.0
        %v1498 = vmax.f32 %v1461, 0.0
        %v1499 = vmax.f32 %v1392, 0.0
        %v1500 = vmax.f32 %v1394, 0.0
        %v1501 = vmax.f32 %v1465, 0.0
        %v1502 = vmax.f32 %v1467, 0.0
        %v1503 = vmax.f32 %v1396, 0.0
        %v1504 = vmax.f32 %v1398, 0.0
        %v1505 = vmax.f32 %v1469, 0.0
        %v1506 = vmax.f32 %v1471, 0.0
        %v1507 = vmax.f32 %v1402, 0.0
        %v1508 = vmax.f32 %v1404, 0.0
        %v1509 = vmax.f32 %v1475, 0.0
        %v1510 = vmax.f32 %v1477, 0.0
        %v1511 = vmax.f32 %v1406, 0.0
        %v1512 = vmax.f32 %v1408, 0.0
        %v1513 = vmax.f32 %v1479, 0.0
        %v1514 = vmax.f32 %v1481, 0.0
        %1515 = vrot.lane.b32.xlu0 %v1483, 1
        %v1516 = vpop.permute.xlu0 %1515
        %1517 = vrot.lane.b32.xlu0 %v1487, 1
        %v1518 = vpop.permute.xlu0 %1517
        %1519 = vrot.lane.b32.xlu0 %v1491, 1
        %v1520 = vpop.permute.xlu0 %1519
        %1521 = vrot.lane.b32.xlu0 %v1495, 1
        %v1522 = vpop.permute.xlu0 %1521
        %1523 = vrot.lane.b32.xlu0 %v1499, 1
        %v1524 = vpop.permute.xlu0 %1523
        %1525 = vrot.lane.b32.xlu0 %v1503, 1
        %v1526 = vpop.permute.xlu0 %1525
        %1527 = vrot.lane.b32.xlu0 %v1507, 1
        %v1528 = vpop.permute.xlu0 %1527
        %1529 = vrot.lane.b32.xlu0 %v1511, 1
        %v1530 = vpop.permute.xlu0 %1529
        %1531 = vrot.lane.b32.xlu0 %v1484, 1
        %v1532 = vpop.permute.xlu0 %1531
        %1533 = vrot.lane.b32.xlu0 %v1488, 1
        %v1534 = vpop.permute.xlu0 %1533
        %1535 = vrot.lane.b32.xlu0 %v1492, 1
        %v1536 = vpop.permute.xlu0 %1535
        %1537 = vrot.lane.b32.xlu0 %v1496, 1
        %v1538 = vpop.permute.xlu0 %1537
        %1539 = vrot.lane.b32.xlu0 %v1500, 1
        %v1540 = vpop.permute.xlu0 %1539
        %1541 = vrot.lane.b32.xlu0 %v1504, 1
        %v1542 = vpop.permute.xlu0 %1541
        %1543 = vrot.lane.b32.xlu0 %v1508, 1
        %v1544 = vpop.permute.xlu0 %1543
        %1545 = vrot.lane.b32.xlu0 %v1512, 1
        %v1546 = vpop.permute.xlu0 %1545
        %1547 = vrot.lane.b32.xlu0 %v1485, 1
        %v1548 = vpop.permute.xlu0 %1547
        %1549 = vrot.lane.b32.xlu0 %v1489, 1
        %v1550 = vpop.permute.xlu0 %1549
        %1551 = vrot.lane.b32.xlu0 %v1493, 1
        %v1552 = vpop.permute.xlu0 %1551
        %1553 = vrot.lane.b32.xlu0 %v1497, 1
        %v1554 = vpop.permute.xlu0 %1553
        %1555 = vrot.lane.b32.xlu0 %v1501, 1
        %v1556 = vpop.permute.xlu0 %1555
        %1557 = vrot.lane.b32.xlu0 %v1505, 1
        %v1558 = vpop.permute.xlu0 %1557
        %1559 = vrot.lane.b32.xlu0 %v1509, 1
        %v1560 = vpop.permute.xlu0 %1559
        %1561 = vrot.lane.b32.xlu0 %v1513, 1
        %v1562 = vpop.permute.xlu0 %1561
        %1563 = vrot.lane.b32.xlu0 %v1486, 1
        %v1564 = vpop.permute.xlu0 %1563
        %1565 = vrot.lane.b32.xlu0 %v1490, 1
        %v1566 = vpop.permute.xlu0 %1565
        %1567 = vrot.lane.b32.xlu0 %v1494, 1
        %v1568 = vpop.permute.xlu0 %1567
        %1569 = vrot.lane.b32.xlu0 %v1498, 1
        %v1570 = vpop.permute.xlu0 %1569
        %1571 = vrot.lane.b32.xlu0 %v1502, 1
        %v1572 = vpop.permute.xlu0 %1571
        %1573 = vrot.lane.b32.xlu0 %v1506, 1
        %v1574 = vpop.permute.xlu0 %1573
        %1575 = vrot.lane.b32.xlu0 %v1510, 1
        %v1576 = vpop.permute.xlu0 %1575
        %1577 = vrot.lane.b32.xlu0 %v1514, 1
        %v1578 = vpop.permute.xlu0 %1577
        %v1579 = vsel %vm842, %v1548, %v1564
        %v1580 = vsel %vm842, %v1550, %v1566
        %v1581 = vsel %vm842, %v1552, %v1568
        %v1582 = vsel %vm842, %v1554, %v1570
        %v1583 = vsel %vm842, %v1556, %v1572
        %v1584 = vsel %vm842, %v1558, %v1574
        %v1585 = vsel %vm842, %v1560, %v1576
        %v1586 = vsel %vm842, %v1562, %v1578
        %v1587 = vsel %vm842, %v1532, %v1548
        %v1588 = vsel %vm842, %v1534, %v1550
        %v1589 = vsel %vm842, %v1536, %v1552
        %v1590 = vsel %vm842, %v1538, %v1554
        %v1591 = vsel %vm842, %v1540, %v1556
        %v1592 = vsel %vm842, %v1542, %v1558
        %v1593 = vsel %vm842, %v1544, %v1560
        %v1594 = vsel %vm842, %v1546, %v1562
        %v1595 = vsel %vm842, %v1516, %v1532
        %v1596 = vsel %vm842, %v1518, %v1534
        %v1597 = vsel %vm842, %v1520, %v1536
        %v1598 = vsel %vm842, %v1522, %v1538
        %v1599 = vsel %vm842, %v1524, %v1540
        %v1600 = vsel %vm842, %v1526, %v1542
        %v1601 = vsel %vm842, %v1528, %v1544
        %v1602 = vsel %vm842, %v1530, %v1546
        %v1603 = vsel %vm842, %v1564, %v1516
        %v1604 = vsel %vm842, %v1566, %v1518
        %v1605 = vsel %vm842, %v1568, %v1520
        %v1606 = vsel %vm842, %v1570, %v1522
        %v1607 = vsel %vm842, %v1572, %v1524
        %v1608 = vsel %vm842, %v1574, %v1526
        %v1609 = vsel %vm842, %v1576, %v1528
        %v1610 = vsel %vm842, %v1578, %v1530
        %v1611 = vmul.f32 %v1603, %v762
        %v1612 = vmul.f32 %v1595, %v763
        %v1613 = vmul.f32 %v1587, %v764
        %v1614 = vmul.f32 %v1579, %v765
        %v1615 = vmul.f32 %v1604, %v762
        %v1616 = vmul.f32 %v1596, %v763
        %v1617 = vmul.f32 %v1588, %v764
        %v1618 = vmul.f32 %v1580, %v765
        %v1619 = vmul.f32 %v1605, %v762
        %v1620 = vmul.f32 %v1597, %v763
        %v1621 = vmul.f32 %v1589, %v764
        %v1622 = vmul.f32 %v1581, %v765
        %v1623 = vmul.f32 %v1606, %v762
        %v1624 = vmul.f32 %v1598, %v763
        %v1625 = vmul.f32 %v1590, %v764
        %v1626 = vmul.f32 %v1582, %v765
        %v1627 = vmul.f32 %v1607, %v762
        %v1628 = vmul.f32 %v1599, %v763
        %v1629 = vmul.f32 %v1591, %v764
        %v1630 = vmul.f32 %v1583, %v765
        %v1631 = vmul.f32 %v1608, %v762
        %v1632 = vmul.f32 %v1600, %v763
        %v1633 = vmul.f32 %v1592, %v764
        %v1634 = vmul.f32 %v1584, %v765
        %v1635 = vmul.f32 %v1609, %v762
        %v1636 = vmul.f32 %v1601, %v763
        %v1637 = vmul.f32 %v1593, %v764
        %v1638 = vmul.f32 %v1585, %v765
        %v1639 = vmul.f32 %v1610, %v762
        %v1640 = vmul.f32 %v1602, %v763
        %v1641 = vmul.f32 %v1594, %v764
        %v1642 = vmul.f32 %v1586, %v765
        %v1643 = vpack.c.bf16 %v1615, %v1611
        %v1644 = vpack.c.bf16 %v1616, %v1612
        %v1645 = vpack.c.bf16 %v1617, %v1613
        %v1646 = vpack.c.bf16 %v1618, %v1614
        %v1647 = vpack.c.bf16 %v1623, %v1619
        %v1648 = vpack.c.bf16 %v1624, %v1620
        %v1649 = vpack.c.bf16 %v1625, %v1621
        %v1650 = vpack.c.bf16 %v1626, %v1622
        %v1651 = vpack.c.bf16 %v1631, %v1627
        %v1652 = vpack.c.bf16 %v1632, %v1628
        %v1653 = vpack.c.bf16 %v1633, %v1629
        %v1654 = vpack.c.bf16 %v1634, %v1630
        %v1655 = vpack.c.bf16 %v1639, %v1635
        %v1656 = vpack.c.bf16 %v1640, %v1636
        %v1657 = vpack.c.bf16 %v1641, %v1637
        %v1658 = vpack.c.bf16 %v1642, %v1638
        %1659 = vrot.lane.b32.xlu0 %v1483, 127
        %v1660 = vpop.permute.xlu0 %1659
        %1661 = vrot.lane.b32.xlu0 %v1487, 127
        %v1662 = vpop.permute.xlu0 %1661
        %1663 = vrot.lane.b32.xlu0 %v1491, 127
        %v1664 = vpop.permute.xlu0 %1663
        %1665 = vrot.lane.b32.xlu0 %v1495, 127
        %v1666 = vpop.permute.xlu0 %1665
        %1667 = vrot.lane.b32.xlu0 %v1499, 127
        %v1668 = vpop.permute.xlu0 %1667
        %1669 = vrot.lane.b32.xlu0 %v1503, 127
        %v1670 = vpop.permute.xlu0 %1669
        %1671 = vrot.lane.b32.xlu0 %v1507, 127
        %v1672 = vpop.permute.xlu0 %1671
        %1673 = vrot.lane.b32.xlu0 %v1511, 127
        %v1674 = vpop.permute.xlu0 %1673
        %1675 = vrot.lane.b32.xlu0 %v1484, 127
        %v1676 = vpop.permute.xlu0 %1675
        %1677 = vrot.lane.b32.xlu0 %v1488, 127
        %v1678 = vpop.permute.xlu0 %1677
        %1679 = vrot.lane.b32.xlu0 %v1492, 127
        %v1680 = vpop.permute.xlu0 %1679
        %1681 = vrot.lane.b32.xlu0 %v1496, 127
        %v1682 = vpop.permute.xlu0 %1681
        %1683 = vrot.lane.b32.xlu0 %v1500, 127
        %v1684 = vpop.permute.xlu0 %1683
        %1685 = vrot.lane.b32.xlu0 %v1504, 127
        %v1686 = vpop.permute.xlu0 %1685
        %1687 = vrot.lane.b32.xlu0 %v1508, 127
        %v1688 = vpop.permute.xlu0 %1687
        %1689 = vrot.lane.b32.xlu0 %v1512, 127
        %v1690 = vpop.permute.xlu0 %1689
        %1691 = vrot.lane.b32.xlu0 %v1485, 127
        %v1692 = vpop.permute.xlu0 %1691
        %1693 = vrot.lane.b32.xlu0 %v1489, 127
        %v1694 = vpop.permute.xlu0 %1693
        %1695 = vrot.lane.b32.xlu0 %v1493, 127
        %v1696 = vpop.permute.xlu0 %1695
        %1697 = vrot.lane.b32.xlu0 %v1497, 127
        %v1698 = vpop.permute.xlu0 %1697
        %1699 = vrot.lane.b32.xlu0 %v1501, 127
        %v1700 = vpop.permute.xlu0 %1699
        %1701 = vrot.lane.b32.xlu0 %v1505, 127
        %v1702 = vpop.permute.xlu0 %1701
        %1703 = vrot.lane.b32.xlu0 %v1509, 127
        %v1704 = vpop.permute.xlu0 %1703
        %1705 = vrot.lane.b32.xlu0 %v1513, 127
        %v1706 = vpop.permute.xlu0 %1705
        %1707 = vrot.lane.b32.xlu0 %v1486, 127
        %v1708 = vpop.permute.xlu0 %1707
        %1709 = vrot.lane.b32.xlu0 %v1490, 127
        %v1710 = vpop.permute.xlu0 %1709
        %1711 = vrot.lane.b32.xlu0 %v1494, 127
        %v1712 = vpop.permute.xlu0 %1711
        %1713 = vrot.lane.b32.xlu0 %v1498, 127
        %v1714 = vpop.permute.xlu0 %1713
        %1715 = vrot.lane.b32.xlu0 %v1502, 127
        %v1716 = vpop.permute.xlu0 %1715
        %1717 = vrot.lane.b32.xlu0 %v1506, 127
        %v1718 = vpop.permute.xlu0 %1717
        %1719 = vrot.lane.b32.xlu0 %v1510, 127
        %v1720 = vpop.permute.xlu0 %1719
        %1721 = vrot.lane.b32.xlu0 %v1514, 127
        %v1722 = vpop.permute.xlu0 %1721
        %v1723 = vsel %vm1183, %v1692, %v1708
        %v1724 = vsel %vm1183, %v1694, %v1710
        %v1725 = vsel %vm1183, %v1696, %v1712
        %v1726 = vsel %vm1183, %v1698, %v1714
        %v1727 = vsel %vm1183, %v1700, %v1716
        %v1728 = vsel %vm1183, %v1702, %v1718
        %v1729 = vsel %vm1183, %v1704, %v1720
        %v1730 = vsel %vm1183, %v1706, %v1722
        %v1731 = vsel %vm1183, %v1676, %v1692
        %v1732 = vsel %vm1183, %v1678, %v1694
        %v1733 = vsel %vm1183, %v1680, %v1696
        %v1734 = vsel %vm1183, %v1682, %v1698
        %v1735 = vsel %vm1183, %v1684, %v1700
        %v1736 = vsel %vm1183, %v1686, %v1702
        %v1737 = vsel %vm1183, %v1688, %v1704
        %v1738 = vsel %vm1183, %v1690, %v1706
        %v1739 = vsel %vm1183, %v1660, %v1676
        %v1740 = vsel %vm1183, %v1662, %v1678
        %v1741 = vsel %vm1183, %v1664, %v1680
        %v1742 = vsel %vm1183, %v1666, %v1682
        %v1743 = vsel %vm1183, %v1668, %v1684
        %v1744 = vsel %vm1183, %v1670, %v1686
        %v1745 = vsel %vm1183, %v1672, %v1688
        %v1746 = vsel %vm1183, %v1674, %v1690
        %v1747 = vsel %vm1183, %v1708, %v1660
        %v1748 = vsel %vm1183, %v1710, %v1662
        %v1749 = vsel %vm1183, %v1712, %v1664
        %v1750 = vsel %vm1183, %v1714, %v1666
        %v1751 = vsel %vm1183, %v1716, %v1668
        %v1752 = vsel %vm1183, %v1718, %v1670
        %v1753 = vsel %vm1183, %v1720, %v1672
        %v1754 = vsel %vm1183, %v1722, %v1674
        %v1755 = vmul.f32 %v1739, %v774
        %v1756 = vmul.f32 %v1731, %v775
        %v1757 = vmul.f32 %v1723, %v776
        %v1758 = vmul.f32 %v1747, %v777
        %v1759 = vmul.f32 %v1740, %v774
        %v1760 = vmul.f32 %v1732, %v775
        %v1761 = vmul.f32 %v1724, %v776
        %v1762 = vmul.f32 %v1748, %v777
        %v1763 = vmul.f32 %v1741, %v774
        %v1764 = vmul.f32 %v1733, %v775
        %v1765 = vmul.f32 %v1725, %v776
        %v1766 = vmul.f32 %v1749, %v777
        %v1767 = vmul.f32 %v1742, %v774
        %v1768 = vmul.f32 %v1734, %v775
        %v1769 = vmul.f32 %v1726, %v776
        %v1770 = vmul.f32 %v1750, %v777
        %v1771 = vmul.f32 %v1743, %v774
        %v1772 = vmul.f32 %v1735, %v775
        %v1773 = vmul.f32 %v1727, %v776
        %v1774 = vmul.f32 %v1751, %v777
        %v1775 = vmul.f32 %v1744, %v774
        %v1776 = vmul.f32 %v1736, %v775
        %v1777 = vmul.f32 %v1728, %v776
        %v1778 = vmul.f32 %v1752, %v777
        %v1779 = vmul.f32 %v1745, %v774
        %v1780 = vmul.f32 %v1737, %v775
        %v1781 = vmul.f32 %v1729, %v776
        %v1782 = vmul.f32 %v1753, %v777
        %v1783 = vmul.f32 %v1746, %v774
        %v1784 = vmul.f32 %v1738, %v775
        %v1785 = vmul.f32 %v1730, %v776
        %v1786 = vmul.f32 %v1754, %v777
        %v1787 = vpack.c.bf16 %v1759, %v1755
        %v1788 = vpack.c.bf16 %v1760, %v1756
        %v1789 = vpack.c.bf16 %v1761, %v1757
        %v1790 = vpack.c.bf16 %v1762, %v1758
        %v1791 = vpack.c.bf16 %v1767, %v1763
        %v1792 = vpack.c.bf16 %v1768, %v1764
        %v1793 = vpack.c.bf16 %v1769, %v1765
        %v1794 = vpack.c.bf16 %v1770, %v1766
        %v1795 = vpack.c.bf16 %v1775, %v1771
        %v1796 = vpack.c.bf16 %v1776, %v1772
        %v1797 = vpack.c.bf16 %v1777, %v1773
        %v1798 = vpack.c.bf16 %v1778, %v1774
        %v1799 = vpack.c.bf16 %v1783, %v1779
        %v1800 = vpack.c.bf16 %v1784, %v1780
        %v1801 = vpack.c.bf16 %v1785, %v1781
        %v1802 = vpack.c.bf16 %v1786, %v1782
        %v1803 = vpack.c.bf16 %v1487, %v1483
        %v1804 = vpack.c.bf16 %v1488, %v1484
        %v1805 = vpack.c.bf16 %v1489, %v1485
        %v1806 = vpack.c.bf16 %v1490, %v1486
        %v1807 = vpack.c.bf16 %v1495, %v1491
        %v1808 = vpack.c.bf16 %v1496, %v1492
        %v1809 = vpack.c.bf16 %v1497, %v1493
        %v1810 = vpack.c.bf16 %v1498, %v1494
        %v1811 = vpack.c.bf16 %v1503, %v1499
        %v1812 = vpack.c.bf16 %v1504, %v1500
        %v1813 = vpack.c.bf16 %v1505, %v1501
        %v1814 = vpack.c.bf16 %v1506, %v1502
        %v1815 = vpack.c.bf16 %v1511, %v1507
        %v1816 = vpack.c.bf16 %v1512, %v1508
        %v1817 = vpack.c.bf16 %v1513, %v1509
        %v1818 = vpack.c.bf16 %v1514, %v1510
        %s1819 = scalar_lea.vmem [#allocation5], 64
        %v1820 = vld [vmem:[%s1819] sm:$0xff]
        %v1821 = vld [vmem:[%s1819 + $0x8] sm:$0xff]
        %v1822 = vld [vmem:[%s1819 + $0x10] sm:$0xff]
        %v1823 = vld [vmem:[%s1819 + $0x18] sm:$0xff]
        %v1824 = vld [vmem:[%s1819 + $0x20] sm:$0xff]
        %v1825 = vld [vmem:[%s1819 + $0x28] sm:$0xff]
        %v1826 = vld [vmem:[%s1819 + $0x30] sm:$0xff]
        %v1827 = vld [vmem:[%s1819 + $0x38] sm:$0xff]
        %v1836 = vunpack.c.l.b16 %v1820
        %v1837 = vunpack.c.h.b16 %v1820
        %v1838 = vunpack.c.l.b16 %v1821
        %v1839 = vunpack.c.h.b16 %v1821
        %v1840 = vunpack.c.l.b16 %v1822
        %v1841 = vunpack.c.h.b16 %v1822
        %v1842 = vunpack.c.l.b16 %v1823
        %v1843 = vunpack.c.h.b16 %v1823
        %v1844 = vunpack.c.l.b16 %v1824
        %v1845 = vunpack.c.h.b16 %v1824
        %v1846 = vunpack.c.l.b16 %v1825
        %v1847 = vunpack.c.h.b16 %v1825
        %v1848 = vunpack.c.l.b16 %v1826
        %v1849 = vunpack.c.h.b16 %v1826
        %v1850 = vunpack.c.l.b16 %v1827
        %v1851 = vunpack.c.h.b16 %v1827
        %v1852 = vpack.c.b16 %v1838, %v1836
        %v1853 = vpack.c.b16 %v1839, %v1837
        %v1854 = vpack.c.b16 %v1842, %v1840
        %v1855 = vpack.c.b16 %v1843, %v1841
        %v1856 = vpack.c.b16 %v1846, %v1844
        %v1857 = vpack.c.b16 %v1847, %v1845
        %v1858 = vpack.c.b16 %v1850, %v1848
        %v1859 = vpack.c.b16 %v1851, %v1849
        %v1865 = vsel %vm1324, %v1853, 0
        %v1868 = vsel %vm1324, %v1855, 0
        %v1871 = vsel %vm1324, %v1857, 0
        %v1874 = vsel %vm1324, %v1859, 0
        %1876 = vmatprep.subr.bf16.mxu0 %v1644
        %1877 = vmatpush1.bf16.msra.mxu0 %v1643
        %1878 = vmatprep.subr.bf16.mxu0 %v1648
        %1879 = vmatpush1.bf16.msra.mxu0 %v1647
        %1880 = vmatprep.subr.bf16.mxu0 %v1652
        %1881 = vmatpush1.bf16.msra.mxu0 %v1651
        %1882 = vmatprep.subr.bf16.mxu0 %v1656
        %1883 = vmatpush1.bf16.msra.mxu0 %v1655
        %1884 = vmatprep.subr.bf16.mxu0 %v1804
        %1885 = vmatpush1.bf16.msra.mxu0 %v1803
        %1886 = vmatprep.subr.bf16.mxu0 %v1808
        %1887 = vmatpush1.bf16.msra.mxu0 %v1807
        %1888 = vmatprep.subr.bf16.mxu0 %v1812
        %1889 = vmatpush1.bf16.msra.mxu0 %v1811
        %1890 = vmatprep.subr.bf16.mxu0 %v1816
        %1891 = vmatpush1.bf16.msra.mxu0 %v1815
        %1892 = vmatprep.subr.bf16.mxu0 %v1788
        %1893 = vmatpush1.bf16.msra.mxu0 %v1787
        %1894 = vmatprep.subr.bf16.mxu0 %v1792
        %1895 = vmatpush1.bf16.msra.mxu0 %v1791
        %1896 = vmatprep.subr.bf16.mxu0 %v1796
        %1897 = vmatpush1.bf16.msra.mxu0 %v1795
        %1898 = vmatprep.subr.bf16.mxu0 %v1800
        %1899 = vmatpush1.bf16.msra.mxu0 %v1799
        %1900 = vmatprep.subr.bf16.mxu0 %v974
        %1901 = vmatpush1.bf16.msra.mxu0 %v974
        %1902 = vmatprep.subr.bf16.mxu0 0
        %1903 = vmatpush1.bf16.msra.mxu0 0
        %1904 = vmatprep.subr.bf16.mxu0 0
        %1905 = vmatpush1.bf16.msra.mxu0 0
        %1906 = vmatprep.subr.bf16.mxu0 0
        %1907 = vmatpush1.bf16.msra.mxu0 0
        %1908 = vmatprep.mubr.bf16.mxu0 %v1865
        %1909 = vmatmul.mubr.bf16.gmra.mrb[0].mxu0 %v1852
        %v1910 = vpop.f32.mrb[0].mxu0
        %v1911 = vadd.f32 %v939, %v1910
        %v1912 = vpop.f32.mrb[0].mxu0
        %v1913 = vadd.f32 %v940, %v1912
        %v1914 = vpop.f32.mrb[0].mxu0
        %v1915 = vadd.f32 %v943, %v1914
        %v1916 = vpop.f32.mrb[0].mxu0
        %v1917 = vadd.f32 %v944, %v1916
        %1918 = vmatprep.mubr.bf16.mxu0 %v1868
        %1919 = vmatmul.mubr.bf16.gmra.mrb[0].mxu0 %v1854
        %v1920 = vpop.f32.mrb[0].mxu0
        %v1921 = vadd.f32 %v947, %v1920
        %v1922 = vpop.f32.mrb[0].mxu0
        %v1923 = vadd.f32 %v948, %v1922
        %v1924 = vpop.f32.mrb[0].mxu0
        %v1925 = vadd.f32 %v951, %v1924
        %v1926 = vpop.f32.mrb[0].mxu0
        %v1927 = vadd.f32 %v952, %v1926
        %1928 = vmatprep.mubr.bf16.mxu0 %v1871
        %1929 = vmatmul.mubr.bf16.gmra.mrb[0].mxu0 %v1856
        %v1930 = vpop.f32.mrb[0].mxu0
        %v1931 = vadd.f32 %v955, %v1930
        %v1932 = vpop.f32.mrb[0].mxu0
        %v1933 = vadd.f32 %v956, %v1932
        %v1934 = vpop.f32.mrb[0].mxu0
        %v1935 = vadd.f32 %v959, %v1934
        %v1936 = vpop.f32.mrb[0].mxu0
        %v1937 = vadd.f32 %v960, %v1936
        %1938 = vmatprep.mubr.bf16.mxu0 %v1874
        %1939 = vmatmul.mubr.bf16.gmra.mrb[0].mxu0 %v1858
        %v1940 = vpop.f32.mrb[0].mxu0
        %v1941 = vadd.f32 %v963, %v1940
        %v1942 = vpop.f32.mrb[0].mxu0
        %v1943 = vadd.f32 %v964, %v1942
        %v1944 = vpop.f32.mrb[0].mxu0
        %v1945 = vadd.f32 %v967, %v1944
        %v1946 = vpop.f32.mrb[0].mxu0
        %v1947 = vadd.f32 %v968, %v1946
        %1948 = vdwg.mxu0
        %1949 = vmatprep.subr.bf16.mxu0 %v1646
        %1950 = vmatpush1.bf16.msra.mxu0 %v1645
        %1951 = vmatprep.subr.bf16.mxu0 %v1650
        %1952 = vmatpush1.bf16.msra.mxu0 %v1649
        %1953 = vmatprep.subr.bf16.mxu0 %v1654
        %1954 = vmatpush1.bf16.msra.mxu0 %v1653
        %1955 = vmatprep.subr.bf16.mxu0 %v1658
        %1956 = vmatpush1.bf16.msra.mxu0 %v1657
        %1957 = vmatprep.subr.bf16.mxu0 %v1806
        %1958 = vmatpush1.bf16.msra.mxu0 %v1805
        %1959 = vmatprep.subr.bf16.mxu0 %v1810
        %1960 = vmatpush1.bf16.msra.mxu0 %v1809
        %1961 = vmatprep.subr.bf16.mxu0 %v1814
        %1962 = vmatpush1.bf16.msra.mxu0 %v1813
        %1963 = vmatprep.subr.bf16.mxu0 %v1818
        %1964 = vmatpush1.bf16.msra.mxu0 %v1817
        %1965 = vmatprep.subr.bf16.mxu0 %v1790
        %1966 = vmatpush1.bf16.msra.mxu0 %v1789
        %1967 = vmatprep.subr.bf16.mxu0 %v1794
        %1968 = vmatpush1.bf16.msra.mxu0 %v1793
        %1969 = vmatprep.subr.bf16.mxu0 %v1798
        %1970 = vmatpush1.bf16.msra.mxu0 %v1797
        %1971 = vmatprep.subr.bf16.mxu0 %v1802
        %1972 = vmatpush1.bf16.msra.mxu0 %v1801
        %1973 = vmatprep.subr.bf16.mxu0 %v974
        %1974 = vmatpush1.bf16.msra.mxu0 %v974
        %1975 = vmatprep.subr.bf16.mxu0 0
        %1976 = vmatpush1.bf16.msra.mxu0 0
        %1977 = vmatprep.subr.bf16.mxu0 0
        %1978 = vmatpush1.bf16.msra.mxu0 0
        %1979 = vmatprep.subr.bf16.mxu0 0
        %1980 = vmatpush1.bf16.msra.mxu0 0
        %1981 = vmatprep.mubr.bf16.mxu0 %v1865
        %1982 = vmatmul.mubr.bf16.gmra.mrb[0].mxu0 %v1852
        %v1983 = vpop.f32.mrb[0].mxu0
        %v1984 = vadd.f32 %v941, %v1983
        %v1985 = vpop.f32.mrb[0].mxu0
        %v1986 = vadd.f32 %v942, %v1985
        %v1987 = vpop.f32.mrb[0].mxu0
        %v1988 = vadd.f32 %v945, %v1987
        %v1989 = vpop.f32.mrb[0].mxu0
        %v1990 = vadd.f32 %v946, %v1989
        %1991 = vmatprep.mubr.bf16.mxu0 %v1868
        %1992 = vmatmul.mubr.bf16.gmra.mrb[0].mxu0 %v1854
        %v1993 = vpop.f32.mrb[0].mxu0
        %v1994 = vadd.f32 %v949, %v1993
        %v1995 = vpop.f32.mrb[0].mxu0
        %v1996 = vadd.f32 %v950, %v1995
        %v1997 = vpop.f32.mrb[0].mxu0
        %v1998 = vadd.f32 %v953, %v1997
        %v1999 = vpop.f32.mrb[0].mxu0
        %v2000 = vadd.f32 %v954, %v1999
        %2001 = vmatprep.mubr.bf16.mxu0 %v1871
        %2002 = vmatmul.mubr.bf16.gmra.mrb[0].mxu0 %v1856
        %v2003 = vpop.f32.mrb[0].mxu0
        %v2004 = vadd.f32 %v957, %v2003
        %v2005 = vpop.f32.mrb[0].mxu0
        %v2006 = vadd.f32 %v958, %v2005
        %v2007 = vpop.f32.mrb[0].mxu0
        %v2008 = vadd.f32 %v961, %v2007
        %v2009 = vpop.f32.mrb[0].mxu0
        %v2010 = vadd.f32 %v962, %v2009
        %2011 = vmatprep.mubr.bf16.mxu0 %v1874
        %2012 = vmatmul.mubr.bf16.gmra.mrb[0].mxu0 %v1858
        %v2013 = vpop.f32.mrb[0].mxu0
        %v2014 = vadd.f32 %v965, %v2013
        %v2015 = vpop.f32.mrb[0].mxu0
        %v2016 = vadd.f32 %v966, %v2015
        %v2017 = vpop.f32.mrb[0].mxu0
        %v2018 = vadd.f32 %v969, %v2017
        %v2019 = vpop.f32.mrb[0].mxu0
        %v2020 = vadd.f32 %v970, %v2019
        %2021 = vdwg.mxu0
        %v2022 = vmax.f32 %v1911, 0.0
        %v2023 = vmax.f32 %v1913, 0.0
        %v2024 = vmax.f32 %v1984, 0.0
        %v2025 = vmax.f32 %v1986, 0.0
        %v2026 = vmax.f32 %v1915, 0.0
        %v2027 = vmax.f32 %v1917, 0.0
        %v2028 = vmax.f32 %v1988, 0.0
        %v2029 = vmax.f32 %v1990, 0.0
        %v2030 = vmax.f32 %v1921, 0.0
        %v2031 = vmax.f32 %v1923, 0.0
        %v2032 = vmax.f32 %v1994, 0.0
        %v2033 = vmax.f32 %v1996, 0.0
        %v2034 = vmax.f32 %v1925, 0.0
        %v2035 = vmax.f32 %v1927, 0.0
        %v2036 = vmax.f32 %v1998, 0.0
        %v2037 = vmax.f32 %v2000, 0.0
        %v2038 = vmax.f32 %v1931, 0.0
        %v2039 = vmax.f32 %v1933, 0.0
        %v2040 = vmax.f32 %v2004, 0.0
        %v2041 = vmax.f32 %v2006, 0.0
        %v2042 = vmax.f32 %v1935, 0.0
        %v2043 = vmax.f32 %v1937, 0.0
        %v2044 = vmax.f32 %v2008, 0.0
        %v2045 = vmax.f32 %v2010, 0.0
        %v2046 = vmax.f32 %v1941, 0.0
        %v2047 = vmax.f32 %v1943, 0.0
        %v2048 = vmax.f32 %v2014, 0.0
        %v2049 = vmax.f32 %v2016, 0.0
        %v2050 = vmax.f32 %v1945, 0.0
        %v2051 = vmax.f32 %v1947, 0.0
        %v2052 = vmax.f32 %v2018, 0.0
        %v2053 = vmax.f32 %v2020, 0.0
        %2054 = vrot.lane.b32.xlu0 %v2022, 1
        %v2055 = vpop.permute.xlu0 %2054
        %2056 = vrot.lane.b32.xlu0 %v2026, 1
        %v2057 = vpop.permute.xlu0 %2056
        %2058 = vrot.lane.b32.xlu0 %v2030, 1
        %v2059 = vpop.permute.xlu0 %2058
        %2060 = vrot.lane.b32.xlu0 %v2034, 1
        %v2061 = vpop.permute.xlu0 %2060
        %2062 = vrot.lane.b32.xlu0 %v2038, 1
        %v2063 = vpop.permute.xlu0 %2062
        %2064 = vrot.lane.b32.xlu0 %v2042, 1
        %v2065 = vpop.permute.xlu0 %2064
        %2066 = vrot.lane.b32.xlu0 %v2046, 1
        %v2067 = vpop.permute.xlu0 %2066
        %2068 = vrot.lane.b32.xlu0 %v2050, 1
        %v2069 = vpop.permute.xlu0 %2068
        %2070 = vrot.lane.b32.xlu0 %v2023, 1
        %v2071 = vpop.permute.xlu0 %2070
        %2072 = vrot.lane.b32.xlu0 %v2027, 1
        %v2073 = vpop.permute.xlu0 %2072
        %2074 = vrot.lane.b32.xlu0 %v2031, 1
        %v2075 = vpop.permute.xlu0 %2074
        %2076 = vrot.lane.b32.xlu0 %v2035, 1
        %v2077 = vpop.permute.xlu0 %2076
        %2078 = vrot.lane.b32.xlu0 %v2039, 1
        %v2079 = vpop.permute.xlu0 %2078
        %2080 = vrot.lane.b32.xlu0 %v2043, 1
        %v2081 = vpop.permute.xlu0 %2080
        %2082 = vrot.lane.b32.xlu0 %v2047, 1
        %v2083 = vpop.permute.xlu0 %2082
        %2084 = vrot.lane.b32.xlu0 %v2051, 1
        %v2085 = vpop.permute.xlu0 %2084
        %2086 = vrot.lane.b32.xlu0 %v2024, 1
        %v2087 = vpop.permute.xlu0 %2086
        %2088 = vrot.lane.b32.xlu0 %v2028, 1
        %v2089 = vpop.permute.xlu0 %2088
        %2090 = vrot.lane.b32.xlu0 %v2032, 1
        %v2091 = vpop.permute.xlu0 %2090
        %2092 = vrot.lane.b32.xlu0 %v2036, 1
        %v2093 = vpop.permute.xlu0 %2092
        %2094 = vrot.lane.b32.xlu0 %v2040, 1
        %v2095 = vpop.permute.xlu0 %2094
        %2096 = vrot.lane.b32.xlu0 %v2044, 1
        %v2097 = vpop.permute.xlu0 %2096
        %2098 = vrot.lane.b32.xlu0 %v2048, 1
        %v2099 = vpop.permute.xlu0 %2098
        %2100 = vrot.lane.b32.xlu0 %v2052, 1
        %v2101 = vpop.permute.xlu0 %2100
        %2102 = vrot.lane.b32.xlu0 %v2025, 1
        %v2103 = vpop.permute.xlu0 %2102
        %2104 = vrot.lane.b32.xlu0 %v2029, 1
        %v2105 = vpop.permute.xlu0 %2104
        %2106 = vrot.lane.b32.xlu0 %v2033, 1
        %v2107 = vpop.permute.xlu0 %2106
        %2108 = vrot.lane.b32.xlu0 %v2037, 1
        %v2109 = vpop.permute.xlu0 %2108
        %2110 = vrot.lane.b32.xlu0 %v2041, 1
        %v2111 = vpop.permute.xlu0 %2110
        %2112 = vrot.lane.b32.xlu0 %v2045, 1
        %v2113 = vpop.permute.xlu0 %2112
        %2114 = vrot.lane.b32.xlu0 %v2049, 1
        %v2115 = vpop.permute.xlu0 %2114
        %2116 = vrot.lane.b32.xlu0 %v2053, 1
        %v2117 = vpop.permute.xlu0 %2116
        %v2118 = vsel %vm842, %v2087, %v2103
        %v2119 = vsel %vm842, %v2089, %v2105
        %v2120 = vsel %vm842, %v2091, %v2107
        %v2121 = vsel %vm842, %v2093, %v2109
        %v2122 = vsel %vm842, %v2095, %v2111
        %v2123 = vsel %vm842, %v2097, %v2113
        %v2124 = vsel %vm842, %v2099, %v2115
        %v2125 = vsel %vm842, %v2101, %v2117
        %v2126 = vsel %vm842, %v2071, %v2087
        %v2127 = vsel %vm842, %v2073, %v2089
        %v2128 = vsel %vm842, %v2075, %v2091
        %v2129 = vsel %vm842, %v2077, %v2093
        %v2130 = vsel %vm842, %v2079, %v2095
        %v2131 = vsel %vm842, %v2081, %v2097
        %v2132 = vsel %vm842, %v2083, %v2099
        %v2133 = vsel %vm842, %v2085, %v2101
        %v2134 = vsel %vm842, %v2055, %v2071
        %v2135 = vsel %vm842, %v2057, %v2073
        %v2136 = vsel %vm842, %v2059, %v2075
        %v2137 = vsel %vm842, %v2061, %v2077
        %v2138 = vsel %vm842, %v2063, %v2079
        %v2139 = vsel %vm842, %v2065, %v2081
        %v2140 = vsel %vm842, %v2067, %v2083
        %v2141 = vsel %vm842, %v2069, %v2085
        %v2142 = vsel %vm842, %v2103, %v2055
        %v2143 = vsel %vm842, %v2105, %v2057
        %v2144 = vsel %vm842, %v2107, %v2059
        %v2145 = vsel %vm842, %v2109, %v2061
        %v2146 = vsel %vm842, %v2111, %v2063
        %v2147 = vsel %vm842, %v2113, %v2065
        %v2148 = vsel %vm842, %v2115, %v2067
        %v2149 = vsel %vm842, %v2117, %v2069
        %v2150 = vmul.f32 %v2142, %v762
        %v2151 = vmul.f32 %v2134, %v763
        %v2152 = vmul.f32 %v2126, %v764
        %v2153 = vmul.f32 %v2118, %v765
        %v2154 = vmul.f32 %v2143, %v762
        %v2155 = vmul.f32 %v2135, %v763
        %v2156 = vmul.f32 %v2127, %v764
        %v2157 = vmul.f32 %v2119, %v765
        %v2158 = vmul.f32 %v2144, %v762
        %v2159 = vmul.f32 %v2136, %v763
        %v2160 = vmul.f32 %v2128, %v764
        %v2161 = vmul.f32 %v2120, %v765
        %v2162 = vmul.f32 %v2145, %v762
        %v2163 = vmul.f32 %v2137, %v763
        %v2164 = vmul.f32 %v2129, %v764
        %v2165 = vmul.f32 %v2121, %v765
        %v2166 = vmul.f32 %v2146, %v762
        %v2167 = vmul.f32 %v2138, %v763
        %v2168 = vmul.f32 %v2130, %v764
        %v2169 = vmul.f32 %v2122, %v765
        %v2170 = vmul.f32 %v2147, %v762
        %v2171 = vmul.f32 %v2139, %v763
        %v2172 = vmul.f32 %v2131, %v764
        %v2173 = vmul.f32 %v2123, %v765
        %v2174 = vmul.f32 %v2148, %v762
        %v2175 = vmul.f32 %v2140, %v763
        %v2176 = vmul.f32 %v2132, %v764
        %v2177 = vmul.f32 %v2124, %v765
        %v2178 = vmul.f32 %v2149, %v762
        %v2179 = vmul.f32 %v2141, %v763
        %v2180 = vmul.f32 %v2133, %v764
        %v2181 = vmul.f32 %v2125, %v765
        %v2182 = vpack.c.bf16 %v2154, %v2150
        %v2183 = vpack.c.bf16 %v2155, %v2151
        %v2184 = vpack.c.bf16 %v2156, %v2152
        %v2185 = vpack.c.bf16 %v2157, %v2153
        %v2186 = vpack.c.bf16 %v2162, %v2158
        %v2187 = vpack.c.bf16 %v2163, %v2159
        %v2188 = vpack.c.bf16 %v2164, %v2160
        %v2189 = vpack.c.bf16 %v2165, %v2161
        %v2190 = vpack.c.bf16 %v2170, %v2166
        %v2191 = vpack.c.bf16 %v2171, %v2167
        %v2192 = vpack.c.bf16 %v2172, %v2168
        %v2193 = vpack.c.bf16 %v2173, %v2169
        %v2194 = vpack.c.bf16 %v2178, %v2174
        %v2195 = vpack.c.bf16 %v2179, %v2175
        %v2196 = vpack.c.bf16 %v2180, %v2176
        %v2197 = vpack.c.bf16 %v2181, %v2177
        %2198 = vrot.lane.b32.xlu0 %v2022, 127
        %v2199 = vpop.permute.xlu0 %2198
        %2200 = vrot.lane.b32.xlu0 %v2026, 127
        %v2201 = vpop.permute.xlu0 %2200
        %2202 = vrot.lane.b32.xlu0 %v2030, 127
        %v2203 = vpop.permute.xlu0 %2202
        %2204 = vrot.lane.b32.xlu0 %v2034, 127
        %v2205 = vpop.permute.xlu0 %2204
        %2206 = vrot.lane.b32.xlu0 %v2038, 127
        %v2207 = vpop.permute.xlu0 %2206
        %2208 = vrot.lane.b32.xlu0 %v2042, 127
        %v2209 = vpop.permute.xlu0 %2208
        %2210 = vrot.lane.b32.xlu0 %v2046, 127
        %v2211 = vpop.permute.xlu0 %2210
        %2212 = vrot.lane.b32.xlu0 %v2050, 127
        %v2213 = vpop.permute.xlu0 %2212
        %2214 = vrot.lane.b32.xlu0 %v2023, 127
        %v2215 = vpop.permute.xlu0 %2214
        %2216 = vrot.lane.b32.xlu0 %v2027, 127
        %v2217 = vpop.permute.xlu0 %2216
        %2218 = vrot.lane.b32.xlu0 %v2031, 127
        %v2219 = vpop.permute.xlu0 %2218
        %2220 = vrot.lane.b32.xlu0 %v2035, 127
        %v2221 = vpop.permute.xlu0 %2220
        %2222 = vrot.lane.b32.xlu0 %v2039, 127
        %v2223 = vpop.permute.xlu0 %2222
        %2224 = vrot.lane.b32.xlu0 %v2043, 127
        %v2225 = vpop.permute.xlu0 %2224
        %2226 = vrot.lane.b32.xlu0 %v2047, 127
        %v2227 = vpop.permute.xlu0 %2226
        %2228 = vrot.lane.b32.xlu0 %v2051, 127
        %v2229 = vpop.permute.xlu0 %2228
        %2230 = vrot.lane.b32.xlu0 %v2024, 127
        %v2231 = vpop.permute.xlu0 %2230
        %2232 = vrot.lane.b32.xlu0 %v2028, 127
        %v2233 = vpop.permute.xlu0 %2232
        %2234 = vrot.lane.b32.xlu0 %v2032, 127
        %v2235 = vpop.permute.xlu0 %2234
        %2236 = vrot.lane.b32.xlu0 %v2036, 127
        %v2237 = vpop.permute.xlu0 %2236
        %2238 = vrot.lane.b32.xlu0 %v2040, 127
        %v2239 = vpop.permute.xlu0 %2238
        %2240 = vrot.lane.b32.xlu0 %v2044, 127
        %v2241 = vpop.permute.xlu0 %2240
        %2242 = vrot.lane.b32.xlu0 %v2048, 127
        %v2243 = vpop.permute.xlu0 %2242
        %2244 = vrot.lane.b32.xlu0 %v2052, 127
        %v2245 = vpop.permute.xlu0 %2244
        %2246 = vrot.lane.b32.xlu0 %v2025, 127
        %v2247 = vpop.permute.xlu0 %2246
        %2248 = vrot.lane.b32.xlu0 %v2029, 127
        %v2249 = vpop.permute.xlu0 %2248
        %2250 = vrot.lane.b32.xlu0 %v2033, 127
        %v2251 = vpop.permute.xlu0 %2250
        %2252 = vrot.lane.b32.xlu0 %v2037, 127
        %v2253 = vpop.permute.xlu0 %2252
        %2254 = vrot.lane.b32.xlu0 %v2041, 127
        %v2255 = vpop.permute.xlu0 %2254
        %2256 = vrot.lane.b32.xlu0 %v2045, 127
        %v2257 = vpop.permute.xlu0 %2256
        %2258 = vrot.lane.b32.xlu0 %v2049, 127
        %v2259 = vpop.permute.xlu0 %2258
        %2260 = vrot.lane.b32.xlu0 %v2053, 127
        %v2261 = vpop.permute.xlu0 %2260
        %v2262 = vsel %vm1183, %v2231, %v2247
        %v2263 = vsel %vm1183, %v2233, %v2249
        %v2264 = vsel %vm1183, %v2235, %v2251
        %v2265 = vsel %vm1183, %v2237, %v2253
        %v2266 = vsel %vm1183, %v2239, %v2255
        %v2267 = vsel %vm1183, %v2241, %v2257
        %v2268 = vsel %vm1183, %v2243, %v2259
        %v2269 = vsel %vm1183, %v2245, %v2261
        %v2270 = vsel %vm1183, %v2215, %v2231
        %v2271 = vsel %vm1183, %v2217, %v2233
        %v2272 = vsel %vm1183, %v2219, %v2235
        %v2273 = vsel %vm1183, %v2221, %v2237
        %v2274 = vsel %vm1183, %v2223, %v2239
        %v2275 = vsel %vm1183, %v2225, %v2241
        %v2276 = vsel %vm1183, %v2227, %v2243
        %v2277 = vsel %vm1183, %v2229, %v2245
        %v2278 = vsel %vm1183, %v2199, %v2215
        %v2279 = vsel %vm1183, %v2201, %v2217
        %v2280 = vsel %vm1183, %v2203, %v2219
        %v2281 = vsel %vm1183, %v2205, %v2221
        %v2282 = vsel %vm1183, %v2207, %v2223
        %v2283 = vsel %vm1183, %v2209, %v2225
        %v2284 = vsel %vm1183, %v2211, %v2227
        %v2285 = vsel %vm1183, %v2213, %v2229
        %v2286 = vsel %vm1183, %v2247, %v2199
        %v2287 = vsel %vm1183, %v2249, %v2201
        %v2288 = vsel %vm1183, %v2251, %v2203
        %v2289 = vsel %vm1183, %v2253, %v2205
        %v2290 = vsel %vm1183, %v2255, %v2207
        %v2291 = vsel %vm1183, %v2257, %v2209
        %v2292 = vsel %vm1183, %v2259, %v2211
        %v2293 = vsel %vm1183, %v2261, %v2213
        %v2294 = vmul.f32 %v2278, %v774
        %v2295 = vmul.f32 %v2270, %v775
        %v2296 = vmul.f32 %v2262, %v776
        %v2297 = vmul.f32 %v2286, %v777
        %v2298 = vmul.f32 %v2279, %v774
        %v2299 = vmul.f32 %v2271, %v775
        %v2300 = vmul.f32 %v2263, %v776
        %v2301 = vmul.f32 %v2287, %v777
        %v2302 = vmul.f32 %v2280, %v774
        %v2303 = vmul.f32 %v2272, %v775
        %v2304 = vmul.f32 %v2264, %v776
        %v2305 = vmul.f32 %v2288, %v777
        %v2306 = vmul.f32 %v2281, %v774
        %v2307 = vmul.f32 %v2273, %v775
        %v2308 = vmul.f32 %v2265, %v776
        %v2309 = vmul.f32 %v2289, %v777
        %v2310 = vmul.f32 %v2282, %v774
        %v2311 = vmul.f32 %v2274, %v775
        %v2312 = vmul.f32 %v2266, %v776
        %v2313 = vmul.f32 %v2290, %v777
        %v2314 = vmul.f32 %v2283, %v774
        %v2315 = vmul.f32 %v2275, %v775
        %v2316 = vmul.f32 %v2267, %v776
        %v2317 = vmul.f32 %v2291, %v777
        %v2318 = vmul.f32 %v2284, %v774
        %v2319 = vmul.f32 %v2276, %v775
        %v2320 = vmul.f32 %v2268, %v776
        %v2321 = vmul.f32 %v2292, %v777
        %v2322 = vmul.f32 %v2285, %v774
        %v2323 = vmul.f32 %v2277, %v775
        %v2324 = vmul.f32 %v2269, %v776
        %v2325 = vmul.f32 %v2293, %v777
        %v2326 = vpack.c.bf16 %v2298, %v2294
        %v2327 = vpack.c.bf16 %v2299, %v2295
        %v2328 = vpack.c.bf16 %v2300, %v2296
        %v2329 = vpack.c.bf16 %v2301, %v2297
        %v2330 = vpack.c.bf16 %v2306, %v2302
        %v2331 = vpack.c.bf16 %v2307, %v2303
        %v2332 = vpack.c.bf16 %v2308, %v2304
        %v2333 = vpack.c.bf16 %v2309, %v2305
        %v2334 = vpack.c.bf16 %v2314, %v2310
        %v2335 = vpack.c.bf16 %v2315, %v2311
        %v2336 = vpack.c.bf16 %v2316, %v2312
        %v2337 = vpack.c.bf16 %v2317, %v2313
        %v2338 = vpack.c.bf16 %v2322, %v2318
        %v2339 = vpack.c.bf16 %v2323, %v2319
        %v2340 = vpack.c.bf16 %v2324, %v2320
        %v2341 = vpack.c.bf16 %v2325, %v2321
        %v2342 = vpack.c.bf16 %v2026, %v2022
        %v2343 = vpack.c.bf16 %v2027, %v2023
        %v2344 = vpack.c.bf16 %v2028, %v2024
        %v2345 = vpack.c.bf16 %v2029, %v2025
        %v2346 = vpack.c.bf16 %v2034, %v2030
        %v2347 = vpack.c.bf16 %v2035, %v2031
        %v2348 = vpack.c.bf16 %v2036, %v2032
        %v2349 = vpack.c.bf16 %v2037, %v2033
        %v2350 = vpack.c.bf16 %v2042, %v2038
        %v2351 = vpack.c.bf16 %v2043, %v2039
        %v2352 = vpack.c.bf16 %v2044, %v2040
        %v2353 = vpack.c.bf16 %v2045, %v2041
        %v2354 = vpack.c.bf16 %v2050, %v2046
        %v2355 = vpack.c.bf16 %v2051, %v2047
        %v2356 = vpack.c.bf16 %v2052, %v2048
        %v2357 = vpack.c.bf16 %v2053, %v2049
        %s2358 = scalar_lea.vmem [#allocation5], 128
        %v2359 = vld [vmem:[%s2358] sm:$0xff]
        %v2360 = vld [vmem:[%s2358 + $0x8] sm:$0xff]
        %v2361 = vld [vmem:[%s2358 + $0x10] sm:$0xff]
        %v2362 = vld [vmem:[%s2358 + $0x18] sm:$0xff]
        %v2363 = vld [vmem:[%s2358 + $0x20] sm:$0xff]
        %v2364 = vld [vmem:[%s2358 + $0x28] sm:$0xff]
        %v2365 = vld [vmem:[%s2358 + $0x30] sm:$0xff]
        %v2366 = vld [vmem:[%s2358 + $0x38] sm:$0xff]
        %v2375 = vunpack.c.l.b16 %v2359
        %v2376 = vunpack.c.h.b16 %v2359
        %v2377 = vunpack.c.l.b16 %v2360
        %v2378 = vunpack.c.h.b16 %v2360
        %v2379 = vunpack.c.l.b16 %v2361
        %v2380 = vunpack.c.h.b16 %v2361
        %v2381 = vunpack.c.l.b16 %v2362
        %v2382 = vunpack.c.h.b16 %v2362
        %v2383 = vunpack.c.l.b16 %v2363
        %v2384 = vunpack.c.h.b16 %v2363
        %v2385 = vunpack.c.l.b16 %v2364
        %v2386 = vunpack.c.h.b16 %v2364
        %v2387 = vunpack.c.l.b16 %v2365
        %v2388 = vunpack.c.h.b16 %v2365
        %v2389 = vunpack.c.l.b16 %v2366
        %v2390 = vunpack.c.h.b16 %v2366
        %v2391 = vpack.c.b16 %v2377, %v2375
        %v2392 = vpack.c.b16 %v2378, %v2376
        %v2393 = vpack.c.b16 %v2381, %v2379
        %v2394 = vpack.c.b16 %v2382, %v2380
        %v2395 = vpack.c.b16 %v2385, %v2383
        %v2396 = vpack.c.b16 %v2386, %v2384
        %v2397 = vpack.c.b16 %v2389, %v2387
        %v2398 = vpack.c.b16 %v2390, %v2388
        %v2404 = vsel %vm1324, %v2392, 0
        %v2407 = vsel %vm1324, %v2394, 0
        %v2410 = vsel %vm1324, %v2396, 0
        %v2413 = vsel %vm1324, %v2398, 0
        %2415 = vmatprep.subr.bf16.mxu0 %v2183
        %2416 = vmatpush1.bf16.msra.mxu0 %v2182
        %2417 = vmatprep.subr.bf16.mxu0 %v2187
        %2418 = vmatpush1.bf16.msra.mxu0 %v2186
        %2419 = vmatprep.subr.bf16.mxu0 %v2191
        %2420 = vmatpush1.bf16.msra.mxu0 %v2190
        %2421 = vmatprep.subr.bf16.mxu0 %v2195
        %2422 = vmatpush1.bf16.msra.mxu0 %v2194
        %2423 = vmatprep.subr.bf16.mxu0 %v2343
        %2424 = vmatpush1.bf16.msra.mxu0 %v2342
        %2425 = vmatprep.subr.bf16.mxu0 %v2347
        %2426 = vmatpush1.bf16.msra.mxu0 %v2346
        %2427 = vmatprep.subr.bf16.mxu0 %v2351
        %2428 = vmatpush1.bf16.msra.mxu0 %v2350
        %2429 = vmatprep.subr.bf16.mxu0 %v2355
        %2430 = vmatpush1.bf16.msra.mxu0 %v2354
        %2431 = vmatprep.subr.bf16.mxu0 %v2327
        %2432 = vmatpush1.bf16.msra.mxu0 %v2326
        %2433 = vmatprep.subr.bf16.mxu0 %v2331
        %2434 = vmatpush1.bf16.msra.mxu0 %v2330
        %2435 = vmatprep.subr.bf16.mxu0 %v2335
        %2436 = vmatpush1.bf16.msra.mxu0 %v2334
        %2437 = vmatprep.subr.bf16.mxu0 %v2339
        %2438 = vmatpush1.bf16.msra.mxu0 %v2338
        %2439 = vmatprep.subr.bf16.mxu0 %v974
        %2440 = vmatpush1.bf16.msra.mxu0 %v974
        %2441 = vmatprep.subr.bf16.mxu0 0
        %2442 = vmatpush1.bf16.msra.mxu0 0
        %2443 = vmatprep.subr.bf16.mxu0 0
        %2444 = vmatpush1.bf16.msra.mxu0 0
        %2445 = vmatprep.subr.bf16.mxu0 0
        %2446 = vmatpush1.bf16.msra.mxu0 0
        %2447 = vmatprep.mubr.bf16.mxu0 %v2404
        %2448 = vmatmul.mubr.bf16.gmra.mrb[0].mxu0 %v2391
        %v2449 = vpop.f32.mrb[0].mxu0
        %v2450 = vadd.f32 0.0, %v2449
        %v2451 = vpop.f32.mrb[0].mxu0
        %v2452 = vadd.f32 0.0, %v2451
        %v2453 = vpop.f32.mrb[0].mxu0
        %v2454 = vadd.f32 0.0, %v2453
        %v2455 = vpop.f32.mrb[0].mxu0
        %v2456 = vadd.f32 0.0, %v2455
        %2457 = vmatprep.mubr.bf16.mxu0 %v2407
        %2458 = vmatmul.mubr.bf16.gmra.mrb[0].mxu0 %v2393
        %v2459 = vpop.f32.mrb[0].mxu0
        %v2460 = vadd.f32 0.0, %v2459
        %v2461 = vpop.f32.mrb[0].mxu0
        %v2462 = vadd.f32 0.0, %v2461
        %v2463 = vpop.f32.mrb[0].mxu0
        %v2464 = vadd.f32 0.0, %v2463
        %v2465 = vpop.f32.mrb[0].mxu0
        %v2466 = vadd.f32 0.0, %v2465
        %2467 = vmatprep.mubr.bf16.mxu0 %v2410
        %2468 = vmatmul.mubr.bf16.gmra.mrb[0].mxu0 %v2395
        %v2469 = vpop.f32.mrb[0].mxu0
        %v2470 = vadd.f32 0.0, %v2469
        %v2471 = vpop.f32.mrb[0].mxu0
        %v2472 = vadd.f32 0.0, %v2471
        %v2473 = vpop.f32.mrb[0].mxu0
        %v2474 = vadd.f32 0.0, %v2473
        %v2475 = vpop.f32.mrb[0].mxu0
        %v2476 = vadd.f32 0.0, %v2475
        %2477 = vmatprep.mubr.bf16.mxu0 %v2413
        %2478 = vmatmul.mubr.bf16.gmra.mrb[0].mxu0 %v2397
        %v2479 = vpop.f32.mrb[0].mxu0
        %v2480 = vadd.f32 0.0, %v2479
        %v2481 = vpop.f32.mrb[0].mxu0
        %v2482 = vadd.f32 0.0, %v2481
        %v2483 = vpop.f32.mrb[0].mxu0
        %v2484 = vadd.f32 0.0, %v2483
        %v2485 = vpop.f32.mrb[0].mxu0
        %v2486 = vadd.f32 0.0, %v2485
        %2487 = vdwg.mxu0
        %2488 = vmatprep.subr.bf16.mxu0 %v2185
        %2489 = vmatpush1.bf16.msra.mxu0 %v2184
        %2490 = vmatprep.subr.bf16.mxu0 %v2189
        %2491 = vmatpush1.bf16.msra.mxu0 %v2188
        %2492 = vmatprep.subr.bf16.mxu0 %v2193
        %2493 = vmatpush1.bf16.msra.mxu0 %v2192
        %2494 = vmatprep.subr.bf16.mxu0 %v2197
        %2495 = vmatpush1.bf16.msra.mxu0 %v2196
        %2496 = vmatprep.subr.bf16.mxu0 %v2345
        %2497 = vmatpush1.bf16.msra.mxu0 %v2344
        %2498 = vmatprep.subr.bf16.mxu0 %v2349
        %2499 = vmatpush1.bf16.msra.mxu0 %v2348
        %2500 = vmatprep.subr.bf16.mxu0 %v2353
        %2501 = vmatpush1.bf16.msra.mxu0 %v2352
        %2502 = vmatprep.subr.bf16.mxu0 %v2357
        %2503 = vmatpush1.bf16.msra.mxu0 %v2356
        %2504 = vmatprep.subr.bf16.mxu0 %v2329
        %2505 = vmatpush1.bf16.msra.mxu0 %v2328
        %2506 = vmatprep.subr.bf16.mxu0 %v2333
        %2507 = vmatpush1.bf16.msra.mxu0 %v2332
        %2508 = vmatprep.subr.bf16.mxu0 %v2337
        %2509 = vmatpush1.bf16.msra.mxu0 %v2336
        %2510 = vmatprep.subr.bf16.mxu0 %v2341
        %2511 = vmatpush1.bf16.msra.mxu0 %v2340
        %2512 = vmatprep.subr.bf16.mxu0 %v974
        %2513 = vmatpush1.bf16.msra.mxu0 %v974
        %2514 = vmatprep.subr.bf16.mxu0 0
        %2515 = vmatpush1.bf16.msra.mxu0 0
        %2516 = vmatprep.subr.bf16.mxu0 0
        %2517 = vmatpush1.bf16.msra.mxu0 0
        %2518 = vmatprep.subr.bf16.mxu0 0
        %2519 = vmatpush1.bf16.msra.mxu0 0
        %2520 = vmatprep.mubr.bf16.mxu0 %v2404
        %2521 = vmatmul.mubr.bf16.gmra.mrb[0].mxu0 %v2391
        %v2522 = vpop.f32.mrb[0].mxu0
        %v2523 = vadd.f32 0.0, %v2522
        %v2524 = vpop.f32.mrb[0].mxu0
        %v2525 = vadd.f32 0.0, %v2524
        %v2526 = vpop.f32.mrb[0].mxu0
        %v2527 = vadd.f32 0.0, %v2526
        %v2528 = vpop.f32.mrb[0].mxu0
        %v2529 = vadd.f32 0.0, %v2528
        %2530 = vmatprep.mubr.bf16.mxu0 %v2407
        %2531 = vmatmul.mubr.bf16.gmra.mrb[0].mxu0 %v2393
        %v2532 = vpop.f32.mrb[0].mxu0
        %v2533 = vadd.f32 0.0, %v2532
        %v2534 = vpop.f32.mrb[0].mxu0
        %v2535 = vadd.f32 0.0, %v2534
        %v2536 = vpop.f32.mrb[0].mxu0
        %v2537 = vadd.f32 0.0, %v2536
        %v2538 = vpop.f32.mrb[0].mxu0
        %v2539 = vadd.f32 0.0, %v2538
        %2540 = vmatprep.mubr.bf16.mxu0 %v2410
        %2541 = vmatmul.mubr.bf16.gmra.mrb[0].mxu0 %v2395
        %v2542 = vpop.f32.mrb[0].mxu0
        %v2543 = vadd.f32 0.0, %v2542
        %v2544 = vpop.f32.mrb[0].mxu0
        %v2545 = vadd.f32 0.0, %v2544
        %v2546 = vpop.f32.mrb[0].mxu0
        %v2547 = vadd.f32 0.0, %v2546
        %v2548 = vpop.f32.mrb[0].mxu0
        %v2549 = vadd.f32 0.0, %v2548
        %2550 = vmatprep.mubr.bf16.mxu0 %v2413
        %2551 = vmatmul.mubr.bf16.gmra.mrb[0].mxu0 %v2397
        %v2552 = vpop.f32.mrb[0].mxu0
        %v2553 = vadd.f32 0.0, %v2552
        %v2554 = vpop.f32.mrb[0].mxu0
        %v2555 = vadd.f32 0.0, %v2554
        %v2556 = vpop.f32.mrb[0].mxu0
        %v2557 = vadd.f32 0.0, %v2556
        %v2558 = vpop.f32.mrb[0].mxu0
        %v2559 = vadd.f32 0.0, %v2558
        %2560 = vdwg.mxu0
        %v2561 = vmax.f32 %v2450, 0.0
        %v2562 = vmax.f32 %v2452, 0.0
        %v2563 = vmax.f32 %v2523, 0.0
        %v2564 = vmax.f32 %v2525, 0.0
        %v2565 = vmax.f32 %v2454, 0.0
        %v2566 = vmax.f32 %v2456, 0.0
        %v2567 = vmax.f32 %v2527, 0.0
        %v2568 = vmax.f32 %v2529, 0.0
        %v2569 = vmax.f32 %v2460, 0.0
        %v2570 = vmax.f32 %v2462, 0.0
        %v2571 = vmax.f32 %v2533, 0.0
        %v2572 = vmax.f32 %v2535, 0.0
        %v2573 = vmax.f32 %v2464, 0.0
        %v2574 = vmax.f32 %v2466, 0.0
        %v2575 = vmax.f32 %v2537, 0.0
        %v2576 = vmax.f32 %v2539, 0.0
        %v2577 = vmax.f32 %v2470, 0.0
        %v2578 = vmax.f32 %v2472, 0.0
        %v2579 = vmax.f32 %v2543, 0.0
        %v2580 = vmax.f32 %v2545, 0.0
        %v2581 = vmax.f32 %v2474, 0.0
        %v2582 = vmax.f32 %v2476, 0.0
        %v2583 = vmax.f32 %v2547, 0.0
        %v2584 = vmax.f32 %v2549, 0.0
        %v2585 = vmax.f32 %v2480, 0.0
        %v2586 = vmax.f32 %v2482, 0.0
        %v2587 = vmax.f32 %v2553, 0.0
        %v2588 = vmax.f32 %v2555, 0.0
        %v2589 = vmax.f32 %v2484, 0.0
        %v2590 = vmax.f32 %v2486, 0.0
        %v2591 = vmax.f32 %v2557, 0.0
        %v2592 = vmax.f32 %v2559, 0.0
        %2593 = vrot.lane.b32.xlu0 %v2561, 1
        %v2594 = vpop.permute.xlu0 %2593
        %2595 = vrot.lane.b32.xlu0 %v2565, 1
        %v2596 = vpop.permute.xlu0 %2595
        %2597 = vrot.lane.b32.xlu0 %v2569, 1
        %v2598 = vpop.permute.xlu0 %2597
        %2599 = vrot.lane.b32.xlu0 %v2573, 1
        %v2600 = vpop.permute.xlu0 %2599
        %2601 = vrot.lane.b32.xlu0 %v2577, 1
        %v2602 = vpop.permute.xlu0 %2601
        %2603 = vrot.lane.b32.xlu0 %v2581, 1
        %v2604 = vpop.permute.xlu0 %2603
        %2605 = vrot.lane.b32.xlu0 %v2585, 1
        %v2606 = vpop.permute.xlu0 %2605
        %2607 = vrot.lane.b32.xlu0 %v2589, 1
        %v2608 = vpop.permute.xlu0 %2607
        %2609 = vrot.lane.b32.xlu0 %v2562, 1
        %v2610 = vpop.permute.xlu0 %2609
        %2611 = vrot.lane.b32.xlu0 %v2566, 1
        %v2612 = vpop.permute.xlu0 %2611
        %2613 = vrot.lane.b32.xlu0 %v2570, 1
        %v2614 = vpop.permute.xlu0 %2613
        %2615 = vrot.lane.b32.xlu0 %v2574, 1
        %v2616 = vpop.permute.xlu0 %2615
        %2617 = vrot.lane.b32.xlu0 %v2578, 1
        %v2618 = vpop.permute.xlu0 %2617
        %2619 = vrot.lane.b32.xlu0 %v2582, 1
        %v2620 = vpop.permute.xlu0 %2619
        %2621 = vrot.lane.b32.xlu0 %v2586, 1
        %v2622 = vpop.permute.xlu0 %2621
        %2623 = vrot.lane.b32.xlu0 %v2590, 1
        %v2624 = vpop.permute.xlu0 %2623
        %2625 = vrot.lane.b32.xlu0 %v2563, 1
        %v2626 = vpop.permute.xlu0 %2625
        %2627 = vrot.lane.b32.xlu0 %v2567, 1
        %v2628 = vpop.permute.xlu0 %2627
        %2629 = vrot.lane.b32.xlu0 %v2571, 1
        %v2630 = vpop.permute.xlu0 %2629
        %2631 = vrot.lane.b32.xlu0 %v2575, 1
        %v2632 = vpop.permute.xlu0 %2631
        %2633 = vrot.lane.b32.xlu0 %v2579, 1
        %v2634 = vpop.permute.xlu0 %2633
        %2635 = vrot.lane.b32.xlu0 %v2583, 1
        %v2636 = vpop.permute.xlu0 %2635
        %2637 = vrot.lane.b32.xlu0 %v2587, 1
        %v2638 = vpop.permute.xlu0 %2637
        %2639 = vrot.lane.b32.xlu0 %v2591, 1
        %v2640 = vpop.permute.xlu0 %2639
        %2641 = vrot.lane.b32.xlu0 %v2564, 1
        %v2642 = vpop.permute.xlu0 %2641
        %2643 = vrot.lane.b32.xlu0 %v2568, 1
        %v2644 = vpop.permute.xlu0 %2643
        %2645 = vrot.lane.b32.xlu0 %v2572, 1
        %v2646 = vpop.permute.xlu0 %2645
        %2647 = vrot.lane.b32.xlu0 %v2576, 1
        %v2648 = vpop.permute.xlu0 %2647
        %2649 = vrot.lane.b32.xlu0 %v2580, 1
        %v2650 = vpop.permute.xlu0 %2649
        %2651 = vrot.lane.b32.xlu0 %v2584, 1
        %v2652 = vpop.permute.xlu0 %2651
        %2653 = vrot.lane.b32.xlu0 %v2588, 1
        %v2654 = vpop.permute.xlu0 %2653
        %2655 = vrot.lane.b32.xlu0 %v2592, 1
        %v2656 = vpop.permute.xlu0 %2655
        %v2657 = vsel %vm842, %v2626, %v2642
        %v2658 = vsel %vm842, %v2628, %v2644
        %v2659 = vsel %vm842, %v2630, %v2646
        %v2660 = vsel %vm842, %v2632, %v2648
        %v2661 = vsel %vm842, %v2634, %v2650
        %v2662 = vsel %vm842, %v2636, %v2652
        %v2663 = vsel %vm842, %v2638, %v2654
        %v2664 = vsel %vm842, %v2640, %v2656
        %v2665 = vsel %vm842, %v2610, %v2626
        %v2666 = vsel %vm842, %v2612, %v2628
        %v2667 = vsel %vm842, %v2614, %v2630
        %v2668 = vsel %vm842, %v2616, %v2632
        %v2669 = vsel %vm842, %v2618, %v2634
        %v2670 = vsel %vm842, %v2620, %v2636
        %v2671 = vsel %vm842, %v2622, %v2638
        %v2672 = vsel %vm842, %v2624, %v2640
        %v2673 = vsel %vm842, %v2594, %v2610
        %v2674 = vsel %vm842, %v2596, %v2612
        %v2675 = vsel %vm842, %v2598, %v2614
        %v2676 = vsel %vm842, %v2600, %v2616
        %v2677 = vsel %vm842, %v2602, %v2618
        %v2678 = vsel %vm842, %v2604, %v2620
        %v2679 = vsel %vm842, %v2606, %v2622
        %v2680 = vsel %vm842, %v2608, %v2624
        %v2681 = vsel %vm842, %v2642, %v2594
        %v2682 = vsel %vm842, %v2644, %v2596
        %v2683 = vsel %vm842, %v2646, %v2598
        %v2684 = vsel %vm842, %v2648, %v2600
        %v2685 = vsel %vm842, %v2650, %v2602
        %v2686 = vsel %vm842, %v2652, %v2604
        %v2687 = vsel %vm842, %v2654, %v2606
        %v2688 = vsel %vm842, %v2656, %v2608
        %v2689 = vmul.f32 %v2681, %v762
        %v2690 = vmul.f32 %v2673, %v763
        %v2691 = vmul.f32 %v2665, %v764
        %v2692 = vmul.f32 %v2657, %v765
        %v2693 = vmul.f32 %v2682, %v762
        %v2694 = vmul.f32 %v2674, %v763
        %v2695 = vmul.f32 %v2666, %v764
        %v2696 = vmul.f32 %v2658, %v765
        %v2697 = vmul.f32 %v2683, %v762
        %v2698 = vmul.f32 %v2675, %v763
        %v2699 = vmul.f32 %v2667, %v764
        %v2700 = vmul.f32 %v2659, %v765
        %v2701 = vmul.f32 %v2684, %v762
        %v2702 = vmul.f32 %v2676, %v763
        %v2703 = vmul.f32 %v2668, %v764
        %v2704 = vmul.f32 %v2660, %v765
        %v2705 = vmul.f32 %v2685, %v762
        %v2706 = vmul.f32 %v2677, %v763
        %v2707 = vmul.f32 %v2669, %v764
        %v2708 = vmul.f32 %v2661, %v765
        %v2709 = vmul.f32 %v2686, %v762
        %v2710 = vmul.f32 %v2678, %v763
        %v2711 = vmul.f32 %v2670, %v764
        %v2712 = vmul.f32 %v2662, %v765
        %v2713 = vmul.f32 %v2687, %v762
        %v2714 = vmul.f32 %v2679, %v763
        %v2715 = vmul.f32 %v2671, %v764
        %v2716 = vmul.f32 %v2663, %v765
        %v2717 = vmul.f32 %v2688, %v762
        %v2718 = vmul.f32 %v2680, %v763
        %v2719 = vmul.f32 %v2672, %v764
        %v2720 = vmul.f32 %v2664, %v765
        %v2721 = vpack.c.bf16 %v2693, %v2689
        %v2722 = vpack.c.bf16 %v2694, %v2690
        %v2723 = vpack.c.bf16 %v2695, %v2691
        %v2724 = vpack.c.bf16 %v2696, %v2692
        %v2725 = vpack.c.bf16 %v2701, %v2697
        %v2726 = vpack.c.bf16 %v2702, %v2698
        %v2727 = vpack.c.bf16 %v2703, %v2699
        %v2728 = vpack.c.bf16 %v2704, %v2700
        %v2729 = vpack.c.bf16 %v2709, %v2705
        %v2730 = vpack.c.bf16 %v2710, %v2706
        %v2731 = vpack.c.bf16 %v2711, %v2707
        %v2732 = vpack.c.bf16 %v2712, %v2708
        %v2733 = vpack.c.bf16 %v2717, %v2713
        %v2734 = vpack.c.bf16 %v2718, %v2714
        %v2735 = vpack.c.bf16 %v2719, %v2715
        %v2736 = vpack.c.bf16 %v2720, %v2716
        %2737 = vrot.lane.b32.xlu0 %v2561, 127
        %v2738 = vpop.permute.xlu0 %2737
        %2739 = vrot.lane.b32.xlu0 %v2565, 127
        %v2740 = vpop.permute.xlu0 %2739
        %2741 = vrot.lane.b32.xlu0 %v2569, 127
        %v2742 = vpop.permute.xlu0 %2741
        %2743 = vrot.lane.b32.xlu0 %v2573, 127
        %v2744 = vpop.permute.xlu0 %2743
        %2745 = vrot.lane.b32.xlu0 %v2577, 127
        %v2746 = vpop.permute.xlu0 %2745
        %2747 = vrot.lane.b32.xlu0 %v2581, 127
        %v2748 = vpop.permute.xlu0 %2747
        %2749 = vrot.lane.b32.xlu0 %v2585, 127
        %v2750 = vpop.permute.xlu0 %2749
        %2751 = vrot.lane.b32.xlu0 %v2589, 127
        %v2752 = vpop.permute.xlu0 %2751
        %2753 = vrot.lane.b32.xlu0 %v2562, 127
        %v2754 = vpop.permute.xlu0 %2753
        %2755 = vrot.lane.b32.xlu0 %v2566, 127
        %v2756 = vpop.permute.xlu0 %2755
        %2757 = vrot.lane.b32.xlu0 %v2570, 127
        %v2758 = vpop.permute.xlu0 %2757
        %2759 = vrot.lane.b32.xlu0 %v2574, 127
        %v2760 = vpop.permute.xlu0 %2759
        %2761 = vrot.lane.b32.xlu0 %v2578, 127
        %v2762 = vpop.permute.xlu0 %2761
        %2763 = vrot.lane.b32.xlu0 %v2582, 127
        %v2764 = vpop.permute.xlu0 %2763
        %2765 = vrot.lane.b32.xlu0 %v2586, 127
        %v2766 = vpop.permute.xlu0 %2765
        %2767 = vrot.lane.b32.xlu0 %v2590, 127
        %v2768 = vpop.permute.xlu0 %2767
        %2769 = vrot.lane.b32.xlu0 %v2563, 127
        %v2770 = vpop.permute.xlu0 %2769
        %2771 = vrot.lane.b32.xlu0 %v2567, 127
        %v2772 = vpop.permute.xlu0 %2771
        %2773 = vrot.lane.b32.xlu0 %v2571, 127
        %v2774 = vpop.permute.xlu0 %2773
        %2775 = vrot.lane.b32.xlu0 %v2575, 127
        %v2776 = vpop.permute.xlu0 %2775
        %2777 = vrot.lane.b32.xlu0 %v2579, 127
        %v2778 = vpop.permute.xlu0 %2777
        %2779 = vrot.lane.b32.xlu0 %v2583, 127
        %v2780 = vpop.permute.xlu0 %2779
        %2781 = vrot.lane.b32.xlu0 %v2587, 127
        %v2782 = vpop.permute.xlu0 %2781
        %2783 = vrot.lane.b32.xlu0 %v2591, 127
        %v2784 = vpop.permute.xlu0 %2783
        %2785 = vrot.lane.b32.xlu0 %v2564, 127
        %v2786 = vpop.permute.xlu0 %2785
        %2787 = vrot.lane.b32.xlu0 %v2568, 127
        %v2788 = vpop.permute.xlu0 %2787
        %2789 = vrot.lane.b32.xlu0 %v2572, 127
        %v2790 = vpop.permute.xlu0 %2789
        %2791 = vrot.lane.b32.xlu0 %v2576, 127
        %v2792 = vpop.permute.xlu0 %2791
        %2793 = vrot.lane.b32.xlu0 %v2580, 127
        %v2794 = vpop.permute.xlu0 %2793
        %2795 = vrot.lane.b32.xlu0 %v2584, 127
        %v2796 = vpop.permute.xlu0 %2795
        %2797 = vrot.lane.b32.xlu0 %v2588, 127
        %v2798 = vpop.permute.xlu0 %2797
        %2799 = vrot.lane.b32.xlu0 %v2592, 127
        %v2800 = vpop.permute.xlu0 %2799
        %v2801 = vsel %vm1183, %v2770, %v2786
        %v2802 = vsel %vm1183, %v2772, %v2788
        %v2803 = vsel %vm1183, %v2774, %v2790
        %v2804 = vsel %vm1183, %v2776, %v2792
        %v2805 = vsel %vm1183, %v2778, %v2794
        %v2806 = vsel %vm1183, %v2780, %v2796
        %v2807 = vsel %vm1183, %v2782, %v2798
        %v2808 = vsel %vm1183, %v2784, %v2800
        %v2809 = vsel %vm1183, %v2754, %v2770
        %v2810 = vsel %vm1183, %v2756, %v2772
        %v2811 = vsel %vm1183, %v2758, %v2774
        %v2812 = vsel %vm1183, %v2760, %v2776
        %v2813 = vsel %vm1183, %v2762, %v2778
        %v2814 = vsel %vm1183, %v2764, %v2780
        %v2815 = vsel %vm1183, %v2766, %v2782
        %v2816 = vsel %vm1183, %v2768, %v2784
        %v2817 = vsel %vm1183, %v2738, %v2754
        %v2818 = vsel %vm1183, %v2740, %v2756
        %v2819 = vsel %vm1183, %v2742, %v2758
        %v2820 = vsel %vm1183, %v2744, %v2760
        %v2821 = vsel %vm1183, %v2746, %v2762
        %v2822 = vsel %vm1183, %v2748, %v2764
        %v2823 = vsel %vm1183, %v2750, %v2766
        %v2824 = vsel %vm1183, %v2752, %v2768
        %v2825 = vsel %vm1183, %v2786, %v2738
        %v2826 = vsel %vm1183, %v2788, %v2740
        %v2827 = vsel %vm1183, %v2790, %v2742
        %v2828 = vsel %vm1183, %v2792, %v2744
        %v2829 = vsel %vm1183, %v2794, %v2746
        %v2830 = vsel %vm1183, %v2796, %v2748
        %v2831 = vsel %vm1183, %v2798, %v2750
        %v2832 = vsel %vm1183, %v2800, %v2752
        %v2833 = vmul.f32 %v2817, %v774
        %v2834 = vmul.f32 %v2809, %v775
        %v2835 = vmul.f32 %v2801, %v776
        %v2836 = vmul.f32 %v2825, %v777
        %v2837 = vmul.f32 %v2818, %v774
        %v2838 = vmul.f32 %v2810, %v775
        %v2839 = vmul.f32 %v2802, %v776
        %v2840 = vmul.f32 %v2826, %v777
        %v2841 = vmul.f32 %v2819, %v774
        %v2842 = vmul.f32 %v2811, %v775
        %v2843 = vmul.f32 %v2803, %v776
        %v2844 = vmul.f32 %v2827, %v777
        %v2845 = vmul.f32 %v2820, %v774
        %v2846 = vmul.f32 %v2812, %v775
        %v2847 = vmul.f32 %v2804, %v776
        %v2848 = vmul.f32 %v2828, %v777
        %v2849 = vmul.f32 %v2821, %v774
        %v2850 = vmul.f32 %v2813, %v775
        %v2851 = vmul.f32 %v2805, %v776
        %v2852 = vmul.f32 %v2829, %v777
        %v2853 = vmul.f32 %v2822, %v774
        %v2854 = vmul.f32 %v2814, %v775
        %v2855 = vmul.f32 %v2806, %v776
        %v2856 = vmul.f32 %v2830, %v777
        %v2857 = vmul.f32 %v2823, %v774
        %v2858 = vmul.f32 %v2815, %v775
        %v2859 = vmul.f32 %v2807, %v776
        %v2860 = vmul.f32 %v2831, %v777
        %v2861 = vmul.f32 %v2824, %v774
        %v2862 = vmul.f32 %v2816, %v775
        %v2863 = vmul.f32 %v2808, %v776
        %v2864 = vmul.f32 %v2832, %v777
        %v2865 = vpack.c.bf16 %v2837, %v2833
        %v2866 = vpack.c.bf16 %v2838, %v2834
        %v2867 = vpack.c.bf16 %v2839, %v2835
        %v2868 = vpack.c.bf16 %v2840, %v2836
        %v2869 = vpack.c.bf16 %v2845, %v2841
        %v2870 = vpack.c.bf16 %v2846, %v2842
        %v2871 = vpack.c.bf16 %v2847, %v2843
        %v2872 = vpack.c.bf16 %v2848, %v2844
        %v2873 = vpack.c.bf16 %v2853, %v2849
        %v2874 = vpack.c.bf16 %v2854, %v2850
        %v2875 = vpack.c.bf16 %v2855, %v2851
        %v2876 = vpack.c.bf16 %v2856, %v2852
        %v2877 = vpack.c.bf16 %v2861, %v2857
        %v2878 = vpack.c.bf16 %v2862, %v2858
        %v2879 = vpack.c.bf16 %v2863, %v2859
        %v2880 = vpack.c.bf16 %v2864, %v2860
        %v2881 = vpack.c.bf16 %v2565, %v2561
        %v2882 = vpack.c.bf16 %v2566, %v2562
        %v2883 = vpack.c.bf16 %v2567, %v2563
        %v2884 = vpack.c.bf16 %v2568, %v2564
        %v2885 = vpack.c.bf16 %v2573, %v2569
        %v2886 = vpack.c.bf16 %v2574, %v2570
        %v2887 = vpack.c.bf16 %v2575, %v2571
        %v2888 = vpack.c.bf16 %v2576, %v2572
        %v2889 = vpack.c.bf16 %v2581, %v2577
        %v2890 = vpack.c.bf16 %v2582, %v2578
        %v2891 = vpack.c.bf16 %v2583, %v2579
        %v2892 = vpack.c.bf16 %v2584, %v2580
        %v2893 = vpack.c.bf16 %v2589, %v2585
        %v2894 = vpack.c.bf16 %v2590, %v2586
        %v2895 = vpack.c.bf16 %v2591, %v2587
        %v2896 = vpack.c.bf16 %v2592, %v2588
        %s2897 = scalar_lea.vmem [#allocation5], 192
        %v2898 = vld [vmem:[%s2897] sm:$0xff]
        %v2899 = vld [vmem:[%s2897 + $0x8] sm:$0xff]
        %v2900 = vld [vmem:[%s2897 + $0x10] sm:$0xff]
        %v2901 = vld [vmem:[%s2897 + $0x18] sm:$0xff]
        %v2902 = vld [vmem:[%s2897 + $0x20] sm:$0xff]
        %v2903 = vld [vmem:[%s2897 + $0x28] sm:$0xff]
        %v2904 = vld [vmem:[%s2897 + $0x30] sm:$0xff]
        %v2905 = vld [vmem:[%s2897 + $0x38] sm:$0xff]
        %v2914 = vunpack.c.l.b16 %v2898
        %v2915 = vunpack.c.h.b16 %v2898
        %v2916 = vunpack.c.l.b16 %v2899
        %v2917 = vunpack.c.h.b16 %v2899
        %v2918 = vunpack.c.l.b16 %v2900
        %v2919 = vunpack.c.h.b16 %v2900
        %v2920 = vunpack.c.l.b16 %v2901
        %v2921 = vunpack.c.h.b16 %v2901
        %v2922 = vunpack.c.l.b16 %v2902
        %v2923 = vunpack.c.h.b16 %v2902
        %v2924 = vunpack.c.l.b16 %v2903
        %v2925 = vunpack.c.h.b16 %v2903
        %v2926 = vunpack.c.l.b16 %v2904
        %v2927 = vunpack.c.h.b16 %v2904
        %v2928 = vunpack.c.l.b16 %v2905
        %v2929 = vunpack.c.h.b16 %v2905
        %v2930 = vpack.c.b16 %v2916, %v2914
        %v2931 = vpack.c.b16 %v2917, %v2915
        %v2932 = vpack.c.b16 %v2920, %v2918
        %v2933 = vpack.c.b16 %v2921, %v2919
        %v2934 = vpack.c.b16 %v2924, %v2922
        %v2935 = vpack.c.b16 %v2925, %v2923
        %v2936 = vpack.c.b16 %v2928, %v2926
        %v2937 = vpack.c.b16 %v2929, %v2927
        %v2943 = vsel %vm1324, %v2931, 0
        %v2946 = vsel %vm1324, %v2933, 0
        %v2949 = vsel %vm1324, %v2935, 0
        %v2952 = vsel %vm1324, %v2937, 0
        %2954 = vmatprep.subr.bf16.mxu0 %v2722
        %2955 = vmatpush1.bf16.msra.mxu0 %v2721
        %2956 = vmatprep.subr.bf16.mxu0 %v2726
        %2957 = vmatpush1.bf16.msra.mxu0 %v2725
        %2958 = vmatprep.subr.bf16.mxu0 %v2730
        %2959 = vmatpush1.bf16.msra.mxu0 %v2729
        %2960 = vmatprep.subr.bf16.mxu0 %v2734
        %2961 = vmatpush1.bf16.msra.mxu0 %v2733
        %2962 = vmatprep.subr.bf16.mxu0 %v2882
        %2963 = vmatpush1.bf16.msra.mxu0 %v2881
        %2964 = vmatprep.subr.bf16.mxu0 %v2886
        %2965 = vmatpush1.bf16.msra.mxu0 %v2885
        %2966 = vmatprep.subr.bf16.mxu0 %v2890
        %2967 = vmatpush1.bf16.msra.mxu0 %v2889
        %2968 = vmatprep.subr.bf16.mxu0 %v2894
        %2969 = vmatpush1.bf16.msra.mxu0 %v2893
        %2970 = vmatprep.subr.bf16.mxu0 %v2866
        %2971 = vmatpush1.bf16.msra.mxu0 %v2865
        %2972 = vmatprep.subr.bf16.mxu0 %v2870
        %2973 = vmatpush1.bf16.msra.mxu0 %v2869
        %2974 = vmatprep.subr.bf16.mxu0 %v2874
        %2975 = vmatpush1.bf16.msra.mxu0 %v2873
        %2976 = vmatprep.subr.bf16.mxu0 %v2878
        %2977 = vmatpush1.bf16.msra.mxu0 %v2877
        %2978 = vmatprep.subr.bf16.mxu0 %v974
        %2979 = vmatpush1.bf16.msra.mxu0 %v974
        %2980 = vmatprep.subr.bf16.mxu0 0
        %2981 = vmatpush1.bf16.msra.mxu0 0
        %2982 = vmatprep.subr.bf16.mxu0 0
        %2983 = vmatpush1.bf16.msra.mxu0 0
        %2984 = vmatprep.subr.bf16.mxu0 0
        %2985 = vmatpush1.bf16.msra.mxu0 0
        %2986 = vmatprep.mubr.bf16.mxu0 %v2943
        %2987 = vmatmul.mubr.bf16.gmra.mrb[0].mxu0 %v2930
        %v2988 = vpop.f32.mrb[0].mxu0
        %v2989 = vadd.f32 %v2022, %v2988
        %v2990 = vpop.f32.mrb[0].mxu0
        %v2991 = vadd.f32 %v2023, %v2990
        %v2992 = vpop.f32.mrb[0].mxu0
        %v2993 = vadd.f32 %v2026, %v2992
        %v2994 = vpop.f32.mrb[0].mxu0
        %v2995 = vadd.f32 %v2027, %v2994
        %2996 = vmatprep.mubr.bf16.mxu0 %v2946
        %2997 = vmatmul.mubr.bf16.gmra.mrb[0].mxu0 %v2932
        %v2998 = vpop.f32.mrb[0].mxu0
        %v2999 = vadd.f32 %v2030, %v2998
        %v3000 = vpop.f32.mrb[0].mxu0
        %v3001 = vadd.f32 %v2031, %v3000
        %v3002 = vpop.f32.mrb[0].mxu0
        %v3003 = vadd.f32 %v2034, %v3002
        %v3004 = vpop.f32.mrb[0].mxu0
        %v3005 = vadd.f32 %v2035, %v3004
        %3006 = vmatprep.mubr.bf16.mxu0 %v2949
        %3007 = vmatmul.mubr.bf16.gmra.mrb[0].mxu0 %v2934
        %v3008 = vpop.f32.mrb[0].mxu0
        %v3009 = vadd.f32 %v2038, %v3008
        %v3010 = vpop.f32.mrb[0].mxu0
        %v3011 = vadd.f32 %v2039, %v3010
        %v3012 = vpop.f32.mrb[0].mxu0
        %v3013 = vadd.f32 %v2042, %v3012
        %v3014 = vpop.f32.mrb[0].mxu0
        %v3015 = vadd.f32 %v2043, %v3014
        %3016 = vmatprep.mubr.bf16.mxu0 %v2952
        %3017 = vmatmul.mubr.bf16.gmra.mrb[0].mxu0 %v2936
        %v3018 = vpop.f32.mrb[0].mxu0
        %v3019 = vadd.f32 %v2046, %v3018
        %v3020 = vpop.f32.mrb[0].mxu0
        %v3021 = vadd.f32 %v2047, %v3020
        %v3022 = vpop.f32.mrb[0].mxu0
        %v3023 = vadd.f32 %v2050, %v3022
        %v3024 = vpop.f32.mrb[0].mxu0
        %v3025 = vadd.f32 %v2051, %v3024
        %3026 = vdwg.mxu0
        %3027 = vmatprep.subr.bf16.mxu0 %v2724
        %3028 = vmatpush1.bf16.msra.mxu0 %v2723
        %3029 = vmatprep.subr.bf16.mxu0 %v2728
        %3030 = vmatpush1.bf16.msra.mxu0 %v2727
        %3031 = vmatprep.subr.bf16.mxu0 %v2732
        %3032 = vmatpush1.bf16.msra.mxu0 %v2731
        %3033 = vmatprep.subr.bf16.mxu0 %v2736
        %3034 = vmatpush1.bf16.msra.mxu0 %v2735
        %3035 = vmatprep.subr.bf16.mxu0 %v2884
        %3036 = vmatpush1.bf16.msra.mxu0 %v2883
        %3037 = vmatprep.subr.bf16.mxu0 %v2888
        %3038 = vmatpush1.bf16.msra.mxu0 %v2887
        %3039 = vmatprep.subr.bf16.mxu0 %v2892
        %3040 = vmatpush1.bf16.msra.mxu0 %v2891
        %3041 = vmatprep.subr.bf16.mxu0 %v2896
        %3042 = vmatpush1.bf16.msra.mxu0 %v2895
        %3043 = vmatprep.subr.bf16.mxu0 %v2868
        %3044 = vmatpush1.bf16.msra.mxu0 %v2867
        %3045 = vmatprep.subr.bf16.mxu0 %v2872
        %3046 = vmatpush1.bf16.msra.mxu0 %v2871
        %3047 = vmatprep.subr.bf16.mxu0 %v2876
        %3048 = vmatpush1.bf16.msra.mxu0 %v2875
        %3049 = vmatprep.subr.bf16.mxu0 %v2880
        %3050 = vmatpush1.bf16.msra.mxu0 %v2879
        %3051 = vmatprep.subr.bf16.mxu0 %v974
        %3052 = vmatpush1.bf16.msra.mxu0 %v974
        %3053 = vmatprep.subr.bf16.mxu0 0
        %3054 = vmatpush1.bf16.msra.mxu0 0
        %3055 = vmatprep.subr.bf16.mxu0 0
        %3056 = vmatpush1.bf16.msra.mxu0 0
        %3057 = vmatprep.subr.bf16.mxu0 0
        %3058 = vmatpush1.bf16.msra.mxu0 0
        %3059 = vmatprep.mubr.bf16.mxu0 %v2943
        %3060 = vmatmul.mubr.bf16.gmra.mrb[0].mxu0 %v2930
        %v3061 = vpop.f32.mrb[0].mxu0
        %v3062 = vadd.f32 %v2024, %v3061
        %v3063 = vpop.f32.mrb[0].mxu0
        %v3064 = vadd.f32 %v2025, %v3063
        %v3065 = vpop.f32.mrb[0].mxu0
        %v3066 = vadd.f32 %v2028, %v3065
        %v3067 = vpop.f32.mrb[0].mxu0
        %v3068 = vadd.f32 %v2029, %v3067
        %3069 = vmatprep.mubr.bf16.mxu0 %v2946
        %3070 = vmatmul.mubr.bf16.gmra.mrb[0].mxu0 %v2932
        %v3071 = vpop.f32.mrb[0].mxu0
        %v3072 = vadd.f32 %v2032, %v3071
        %v3073 = vpop.f32.mrb[0].mxu0
        %v3074 = vadd.f32 %v2033, %v3073
        %v3075 = vpop.f32.mrb[0].mxu0
        %v3076 = vadd.f32 %v2036, %v3075
        %v3077 = vpop.f32.mrb[0].mxu0
        %v3078 = vadd.f32 %v2037, %v3077
        %3079 = vmatprep.mubr.bf16.mxu0 %v2949
        %3080 = vmatmul.mubr.bf16.gmra.mrb[0].mxu0 %v2934
        %v3081 = vpop.f32.mrb[0].mxu0
        %v3082 = vadd.f32 %v2040, %v3081
        %v3083 = vpop.f32.mrb[0].mxu0
        %v3084 = vadd.f32 %v2041, %v3083
        %v3085 = vpop.f32.mrb[0].mxu0
        %v3086 = vadd.f32 %v2044, %v3085
        %v3087 = vpop.f32.mrb[0].mxu0
        %v3088 = vadd.f32 %v2045, %v3087
        %3089 = vmatprep.mubr.bf16.mxu0 %v2952
        %3090 = vmatmul.mubr.bf16.gmra.mrb[0].mxu0 %v2936
        %v3091 = vpop.f32.mrb[0].mxu0
        %v3092 = vadd.f32 %v2048, %v3091
        %v3093 = vpop.f32.mrb[0].mxu0
        %v3094 = vadd.f32 %v2049, %v3093
        %v3095 = vpop.f32.mrb[0].mxu0
        %v3096 = vadd.f32 %v2052, %v3095
        %v3097 = vpop.f32.mrb[0].mxu0
        %v3098 = vadd.f32 %v2053, %v3097
        %3099 = vdwg.mxu0
        %v3100 = vmax.f32 %v2989, 0.0
        %v3101 = vmax.f32 %v2991, 0.0
        %v3102 = vmax.f32 %v3062, 0.0
        %v3103 = vmax.f32 %v3064, 0.0
        %v3104 = vmax.f32 %v2993, 0.0
        %v3105 = vmax.f32 %v2995, 0.0
        %v3106 = vmax.f32 %v3066, 0.0
        %v3107 = vmax.f32 %v3068, 0.0
        %v3108 = vmax.f32 %v2999, 0.0
        %v3109 = vmax.f32 %v3001, 0.0
        %v3110 = vmax.f32 %v3072, 0.0
        %v3111 = vmax.f32 %v3074, 0.0
        %v3112 = vmax.f32 %v3003, 0.0
        %v3113 = vmax.f32 %v3005, 0.0
        %v3114 = vmax.f32 %v3076, 0.0
        %v3115 = vmax.f32 %v3078, 0.0
        %v3116 = vmax.f32 %v3009, 0.0
        %v3117 = vmax.f32 %v3011, 0.0
        %v3118 = vmax.f32 %v3082, 0.0
        %v3119 = vmax.f32 %v3084, 0.0
        %v3120 = vmax.f32 %v3013, 0.0
        %v3121 = vmax.f32 %v3015, 0.0
        %v3122 = vmax.f32 %v3086, 0.0
        %v3123 = vmax.f32 %v3088, 0.0
        %v3124 = vmax.f32 %v3019, 0.0
        %v3125 = vmax.f32 %v3021, 0.0
        %v3126 = vmax.f32 %v3092, 0.0
        %v3127 = vmax.f32 %v3094, 0.0
        %v3128 = vmax.f32 %v3023, 0.0
        %v3129 = vmax.f32 %v3025, 0.0
        %v3130 = vmax.f32 %v3096, 0.0
        %v3131 = vmax.f32 %v3098, 0.0
        %3132 = vrot.lane.b32.xlu0 %v3100, 1
        %v3133 = vpop.permute.xlu0 %3132
        %3134 = vrot.lane.b32.xlu0 %v3104, 1
        %v3135 = vpop.permute.xlu0 %3134
        %3136 = vrot.lane.b32.xlu0 %v3108, 1
        %v3137 = vpop.permute.xlu0 %3136
        %3138 = vrot.lane.b32.xlu0 %v3112, 1
        %v3139 = vpop.permute.xlu0 %3138
        %3140 = vrot.lane.b32.xlu0 %v3116, 1
        %v3141 = vpop.permute.xlu0 %3140
        %3142 = vrot.lane.b32.xlu0 %v3120, 1
        %v3143 = vpop.permute.xlu0 %3142
        %3144 = vrot.lane.b32.xlu0 %v3124, 1
        %v3145 = vpop.permute.xlu0 %3144
        %3146 = vrot.lane.b32.xlu0 %v3128, 1
        %v3147 = vpop.permute.xlu0 %3146
        %3148 = vrot.lane.b32.xlu0 %v3101, 1
        %v3149 = vpop.permute.xlu0 %3148
        %3150 = vrot.lane.b32.xlu0 %v3105, 1
        %v3151 = vpop.permute.xlu0 %3150
        %3152 = vrot.lane.b32.xlu0 %v3109, 1
        %v3153 = vpop.permute.xlu0 %3152
        %3154 = vrot.lane.b32.xlu0 %v3113, 1
        %v3155 = vpop.permute.xlu0 %3154
        %3156 = vrot.lane.b32.xlu0 %v3117, 1
        %v3157 = vpop.permute.xlu0 %3156
        %3158 = vrot.lane.b32.xlu0 %v3121, 1
        %v3159 = vpop.permute.xlu0 %3158
        %3160 = vrot.lane.b32.xlu0 %v3125, 1
        %v3161 = vpop.permute.xlu0 %3160
        %3162 = vrot.lane.b32.xlu0 %v3129, 1
        %v3163 = vpop.permute.xlu0 %3162
        %3164 = vrot.lane.b32.xlu0 %v3102, 1
        %v3165 = vpop.permute.xlu0 %3164
        %3166 = vrot.lane.b32.xlu0 %v3106, 1
        %v3167 = vpop.permute.xlu0 %3166
        %3168 = vrot.lane.b32.xlu0 %v3110, 1
        %v3169 = vpop.permute.xlu0 %3168
        %3170 = vrot.lane.b32.xlu0 %v3114, 1
        %v3171 = vpop.permute.xlu0 %3170
        %3172 = vrot.lane.b32.xlu0 %v3118, 1
        %v3173 = vpop.permute.xlu0 %3172
        %3174 = vrot.lane.b32.xlu0 %v3122, 1
        %v3175 = vpop.permute.xlu0 %3174
        %3176 = vrot.lane.b32.xlu0 %v3126, 1
        %v3177 = vpop.permute.xlu0 %3176
        %3178 = vrot.lane.b32.xlu0 %v3130, 1
        %v3179 = vpop.permute.xlu0 %3178
        %3180 = vrot.lane.b32.xlu0 %v3103, 1
        %v3181 = vpop.permute.xlu0 %3180
        %3182 = vrot.lane.b32.xlu0 %v3107, 1
        %v3183 = vpop.permute.xlu0 %3182
        %3184 = vrot.lane.b32.xlu0 %v3111, 1
        %v3185 = vpop.permute.xlu0 %3184
        %3186 = vrot.lane.b32.xlu0 %v3115, 1
        %v3187 = vpop.permute.xlu0 %3186
        %3188 = vrot.lane.b32.xlu0 %v3119, 1
        %v3189 = vpop.permute.xlu0 %3188
        %3190 = vrot.lane.b32.xlu0 %v3123, 1
        %v3191 = vpop.permute.xlu0 %3190
        %3192 = vrot.lane.b32.xlu0 %v3127, 1
        %v3193 = vpop.permute.xlu0 %3192
        %3194 = vrot.lane.b32.xlu0 %v3131, 1
        %v3195 = vpop.permute.xlu0 %3194
        %v3196 = vsel %vm842, %v3165, %v3181
        %v3197 = vsel %vm842, %v3167, %v3183
        %v3198 = vsel %vm842, %v3169, %v3185
        %v3199 = vsel %vm842, %v3171, %v3187
        %v3200 = vsel %vm842, %v3173, %v3189
        %v3201 = vsel %vm842, %v3175, %v3191
        %v3202 = vsel %vm842, %v3177, %v3193
        %v3203 = vsel %vm842, %v3179, %v3195
        %v3204 = vsel %vm842, %v3149, %v3165
        %v3205 = vsel %vm842, %v3151, %v3167
        %v3206 = vsel %vm842, %v3153, %v3169
        %v3207 = vsel %vm842, %v3155, %v3171
        %v3208 = vsel %vm842, %v3157, %v3173
        %v3209 = vsel %vm842, %v3159, %v3175
        %v3210 = vsel %vm842, %v3161, %v3177
        %v3211 = vsel %vm842, %v3163, %v3179
        %v3212 = vsel %vm842, %v3133, %v3149
        %v3213 = vsel %vm842, %v3135, %v3151
        %v3214 = vsel %vm842, %v3137, %v3153
        %v3215 = vsel %vm842, %v3139, %v3155
        %v3216 = vsel %vm842, %v3141, %v3157
        %v3217 = vsel %vm842, %v3143, %v3159
        %v3218 = vsel %vm842, %v3145, %v3161
        %v3219 = vsel %vm842, %v3147, %v3163
        %v3220 = vsel %vm842, %v3181, %v3133
        %v3221 = vsel %vm842, %v3183, %v3135
        %v3222 = vsel %vm842, %v3185, %v3137
        %v3223 = vsel %vm842, %v3187, %v3139
        %v3224 = vsel %vm842, %v3189, %v3141
        %v3225 = vsel %vm842, %v3191, %v3143
        %v3226 = vsel %vm842, %v3193, %v3145
        %v3227 = vsel %vm842, %v3195, %v3147
        %v3228 = vmul.f32 %v3220, %v762
        %v3229 = vmul.f32 %v3212, %v763
        %v3230 = vmul.f32 %v3204, %v764
        %v3231 = vmul.f32 %v3196, %v765
        %v3232 = vmul.f32 %v3221, %v762
        %v3233 = vmul.f32 %v3213, %v763
        %v3234 = vmul.f32 %v3205, %v764
        %v3235 = vmul.f32 %v3197, %v765
        %v3236 = vmul.f32 %v3222, %v762
        %v3237 = vmul.f32 %v3214, %v763
        %v3238 = vmul.f32 %v3206, %v764
        %v3239 = vmul.f32 %v3198, %v765
        %v3240 = vmul.f32 %v3223, %v762
        %v3241 = vmul.f32 %v3215, %v763
        %v3242 = vmul.f32 %v3207, %v764
        %v3243 = vmul.f32 %v3199, %v765
        %v3244 = vmul.f32 %v3224, %v762
        %v3245 = vmul.f32 %v3216, %v763
        %v3246 = vmul.f32 %v3208, %v764
        %v3247 = vmul.f32 %v3200, %v765
        %v3248 = vmul.f32 %v3225, %v762
        %v3249 = vmul.f32 %v3217, %v763
        %v3250 = vmul.f32 %v3209, %v764
        %v3251 = vmul.f32 %v3201, %v765
        %v3252 = vmul.f32 %v3226, %v762
        %v3253 = vmul.f32 %v3218, %v763
        %v3254 = vmul.f32 %v3210, %v764
        %v3255 = vmul.f32 %v3202, %v765
        %v3256 = vmul.f32 %v3227, %v762
        %v3257 = vmul.f32 %v3219, %v763
        %v3258 = vmul.f32 %v3211, %v764
        %v3259 = vmul.f32 %v3203, %v765
        %v3260 = vpack.c.bf16 %v3232, %v3228
        %v3261 = vpack.c.bf16 %v3233, %v3229
        %v3262 = vpack.c.bf16 %v3234, %v3230
        %v3263 = vpack.c.bf16 %v3235, %v3231
        %v3264 = vpack.c.bf16 %v3240, %v3236
        %v3265 = vpack.c.bf16 %v3241, %v3237
        %v3266 = vpack.c.bf16 %v3242, %v3238
        %v3267 = vpack.c.bf16 %v3243, %v3239
        %v3268 = vpack.c.bf16 %v3248, %v3244
        %v3269 = vpack.c.bf16 %v3249, %v3245
        %v3270 = vpack.c.bf16 %v3250, %v3246
        %v3271 = vpack.c.bf16 %v3251, %v3247
        %v3272 = vpack.c.bf16 %v3256, %v3252
        %v3273 = vpack.c.bf16 %v3257, %v3253
        %v3274 = vpack.c.bf16 %v3258, %v3254
        %v3275 = vpack.c.bf16 %v3259, %v3255
        %3276 = vrot.lane.b32.xlu0 %v3100, 127
        %v3277 = vpop.permute.xlu0 %3276
        %3278 = vrot.lane.b32.xlu0 %v3104, 127
        %v3279 = vpop.permute.xlu0 %3278
        %3280 = vrot.lane.b32.xlu0 %v3108, 127
        %v3281 = vpop.permute.xlu0 %3280
        %3282 = vrot.lane.b32.xlu0 %v3112, 127
        %v3283 = vpop.permute.xlu0 %3282
        %3284 = vrot.lane.b32.xlu0 %v3116, 127
        %v3285 = vpop.permute.xlu0 %3284
        %3286 = vrot.lane.b32.xlu0 %v3120, 127
        %v3287 = vpop.permute.xlu0 %3286
        %3288 = vrot.lane.b32.xlu0 %v3124, 127
        %v3289 = vpop.permute.xlu0 %3288
        %3290 = vrot.lane.b32.xlu0 %v3128, 127
        %v3291 = vpop.permute.xlu0 %3290
        %3292 = vrot.lane.b32.xlu0 %v3101, 127
        %v3293 = vpop.permute.xlu0 %3292
        %3294 = vrot.lane.b32.xlu0 %v3105, 127
        %v3295 = vpop.permute.xlu0 %3294
        %3296 = vrot.lane.b32.xlu0 %v3109, 127
        %v3297 = vpop.permute.xlu0 %3296
        %3298 = vrot.lane.b32.xlu0 %v3113, 127
        %v3299 = vpop.permute.xlu0 %3298
        %3300 = vrot.lane.b32.xlu0 %v3117, 127
        %v3301 = vpop.permute.xlu0 %3300
        %3302 = vrot.lane.b32.xlu0 %v3121, 127
        %v3303 = vpop.permute.xlu0 %3302
        %3304 = vrot.lane.b32.xlu0 %v3125, 127
        %v3305 = vpop.permute.xlu0 %3304
        %3306 = vrot.lane.b32.xlu0 %v3129, 127
        %v3307 = vpop.permute.xlu0 %3306
        %3308 = vrot.lane.b32.xlu0 %v3102, 127
        %v3309 = vpop.permute.xlu0 %3308
        %3310 = vrot.lane.b32.xlu0 %v3106, 127
        %v3311 = vpop.permute.xlu0 %3310
        %3312 = vrot.lane.b32.xlu0 %v3110, 127
        %v3313 = vpop.permute.xlu0 %3312
        %3314 = vrot.lane.b32.xlu0 %v3114, 127
        %v3315 = vpop.permute.xlu0 %3314
        %3316 = vrot.lane.b32.xlu0 %v3118, 127
        %v3317 = vpop.permute.xlu0 %3316
        %3318 = vrot.lane.b32.xlu0 %v3122, 127
        %v3319 = vpop.permute.xlu0 %3318
        %3320 = vrot.lane.b32.xlu0 %v3126, 127
        %v3321 = vpop.permute.xlu0 %3320
        %3322 = vrot.lane.b32.xlu0 %v3130, 127
        %v3323 = vpop.permute.xlu0 %3322
        %3324 = vrot.lane.b32.xlu0 %v3103, 127
        %v3325 = vpop.permute.xlu0 %3324
        %3326 = vrot.lane.b32.xlu0 %v3107, 127
        %v3327 = vpop.permute.xlu0 %3326
        %3328 = vrot.lane.b32.xlu0 %v3111, 127
        %v3329 = vpop.permute.xlu0 %3328
        %3330 = vrot.lane.b32.xlu0 %v3115, 127
        %v3331 = vpop.permute.xlu0 %3330
        %3332 = vrot.lane.b32.xlu0 %v3119, 127
        %v3333 = vpop.permute.xlu0 %3332
        %3334 = vrot.lane.b32.xlu0 %v3123, 127
        %v3335 = vpop.permute.xlu0 %3334
        %3336 = vrot.lane.b32.xlu0 %v3127, 127
        %v3337 = vpop.permute.xlu0 %3336
        %3338 = vrot.lane.b32.xlu0 %v3131, 127
        %v3339 = vpop.permute.xlu0 %3338
        %v3340 = vsel %vm1183, %v3309, %v3325
        %v3341 = vsel %vm1183, %v3311, %v3327
        %v3342 = vsel %vm1183, %v3313, %v3329
        %v3343 = vsel %vm1183, %v3315, %v3331
        %v3344 = vsel %vm1183, %v3317, %v3333
        %v3345 = vsel %vm1183, %v3319, %v3335
        %v3346 = vsel %vm1183, %v3321, %v3337
        %v3347 = vsel %vm1183, %v3323, %v3339
        %v3348 = vsel %vm1183, %v3293, %v3309
        %v3349 = vsel %vm1183, %v3295, %v3311
        %v3350 = vsel %vm1183, %v3297, %v3313
        %v3351 = vsel %vm1183, %v3299, %v3315
        %v3352 = vsel %vm1183, %v3301, %v3317
        %v3353 = vsel %vm1183, %v3303, %v3319
        %v3354 = vsel %vm1183, %v3305, %v3321
        %v3355 = vsel %vm1183, %v3307, %v3323
        %v3356 = vsel %vm1183, %v3277, %v3293
        %v3357 = vsel %vm1183, %v3279, %v3295
        %v3358 = vsel %vm1183, %v3281, %v3297
        %v3359 = vsel %vm1183, %v3283, %v3299
        %v3360 = vsel %vm1183, %v3285, %v3301
        %v3361 = vsel %vm1183, %v3287, %v3303
        %v3362 = vsel %vm1183, %v3289, %v3305
        %v3363 = vsel %vm1183, %v3291, %v3307
        %v3364 = vsel %vm1183, %v3325, %v3277
        %v3365 = vsel %vm1183, %v3327, %v3279
        %v3366 = vsel %vm1183, %v3329, %v3281
        %v3367 = vsel %vm1183, %v3331, %v3283
        %v3368 = vsel %vm1183, %v3333, %v3285
        %v3369 = vsel %vm1183, %v3335, %v3287
        %v3370 = vsel %vm1183, %v3337, %v3289
        %v3371 = vsel %vm1183, %v3339, %v3291
        %v3372 = vmul.f32 %v3356, %v774
        %v3373 = vmul.f32 %v3348, %v775
        %v3374 = vmul.f32 %v3340, %v776
        %v3375 = vmul.f32 %v3364, %v777
        %v3376 = vmul.f32 %v3357, %v774
        %v3377 = vmul.f32 %v3349, %v775
        %v3378 = vmul.f32 %v3341, %v776
        %v3379 = vmul.f32 %v3365, %v777
        %v3380 = vmul.f32 %v3358, %v774
        %v3381 = vmul.f32 %v3350, %v775
        %v3382 = vmul.f32 %v3342, %v776
        %v3383 = vmul.f32 %v3366, %v777
        %v3384 = vmul.f32 %v3359, %v774
        %v3385 = vmul.f32 %v3351, %v775
        %v3386 = vmul.f32 %v3343, %v776
        %v3387 = vmul.f32 %v3367, %v777
        %v3388 = vmul.f32 %v3360, %v774
        %v3389 = vmul.f32 %v3352, %v775
        %v3390 = vmul.f32 %v3344, %v776
        %v3391 = vmul.f32 %v3368, %v777
        %v3392 = vmul.f32 %v3361, %v774
        %v3393 = vmul.f32 %v3353, %v775
        %v3394 = vmul.f32 %v3345, %v776
        %v3395 = vmul.f32 %v3369, %v777
        %v3396 = vmul.f32 %v3362, %v774
        %v3397 = vmul.f32 %v3354, %v775
        %v3398 = vmul.f32 %v3346, %v776
        %v3399 = vmul.f32 %v3370, %v777
        %v3400 = vmul.f32 %v3363, %v774
        %v3401 = vmul.f32 %v3355, %v775
        %v3402 = vmul.f32 %v3347, %v776
        %v3403 = vmul.f32 %v3371, %v777
        %v3404 = vpack.c.bf16 %v3376, %v3372
        %v3405 = vpack.c.bf16 %v3377, %v3373
        %v3406 = vpack.c.bf16 %v3378, %v3374
        %v3407 = vpack.c.bf16 %v3379, %v3375
        %v3408 = vpack.c.bf16 %v3384, %v3380
        %v3409 = vpack.c.bf16 %v3385, %v3381
        %v3410 = vpack.c.bf16 %v3386, %v3382
        %v3411 = vpack.c.bf16 %v3387, %v3383
        %v3412 = vpack.c.bf16 %v3392, %v3388
        %v3413 = vpack.c.bf16 %v3393, %v3389
        %v3414 = vpack.c.bf16 %v3394, %v3390
        %v3415 = vpack.c.bf16 %v3395, %v3391
        %v3416 = vpack.c.bf16 %v3400, %v3396
        %v3417 = vpack.c.bf16 %v3401, %v3397
        %v3418 = vpack.c.bf16 %v3402, %v3398
        %v3419 = vpack.c.bf16 %v3403, %v3399
        %v3420 = vpack.c.bf16 %v3104, %v3100
        %v3421 = vpack.c.bf16 %v3105, %v3101
        %v3422 = vpack.c.bf16 %v3106, %v3102
        %v3423 = vpack.c.bf16 %v3107, %v3103
        %v3424 = vpack.c.bf16 %v3112, %v3108
        %v3425 = vpack.c.bf16 %v3113, %v3109
        %v3426 = vpack.c.bf16 %v3114, %v3110
        %v3427 = vpack.c.bf16 %v3115, %v3111
        %v3428 = vpack.c.bf16 %v3120, %v3116
        %v3429 = vpack.c.bf16 %v3121, %v3117
        %v3430 = vpack.c.bf16 %v3122, %v3118
        %v3431 = vpack.c.bf16 %v3123, %v3119
        %v3432 = vpack.c.bf16 %v3128, %v3124
        %v3433 = vpack.c.bf16 %v3129, %v3125
        %v3434 = vpack.c.bf16 %v3130, %v3126
        %v3435 = vpack.c.bf16 %v3131, %v3127
        %s3436 = scalar_lea.vmem [#allocation5], 256
        %v3437 = vld [vmem:[%s3436] sm:$0xff]
        %v3438 = vld [vmem:[%s3436 + $0x8] sm:$0xff]
        %v3439 = vld [vmem:[%s3436 + $0x10] sm:$0xff]
        %v3440 = vld [vmem:[%s3436 + $0x18] sm:$0xff]
        %v3441 = vld [vmem:[%s3436 + $0x20] sm:$0xff]
        %v3442 = vld [vmem:[%s3436 + $0x28] sm:$0xff]
        %v3443 = vld [vmem:[%s3436 + $0x30] sm:$0xff]
        %v3444 = vld [vmem:[%s3436 + $0x38] sm:$0xff]
        %v3453 = vunpack.c.l.b16 %v3437
        %v3454 = vunpack.c.h.b16 %v3437
        %v3455 = vunpack.c.l.b16 %v3438
        %v3456 = vunpack.c.h.b16 %v3438
        %v3457 = vunpack.c.l.b16 %v3439
        %v3458 = vunpack.c.h.b16 %v3439
        %v3459 = vunpack.c.l.b16 %v3440
        %v3460 = vunpack.c.h.b16 %v3440
        %v3461 = vunpack.c.l.b16 %v3441
        %v3462 = vunpack.c.h.b16 %v3441
        %v3463 = vunpack.c.l.b16 %v3442
        %v3464 = vunpack.c.h.b16 %v3442
        %v3465 = vunpack.c.l.b16 %v3443
        %v3466 = vunpack.c.h.b16 %v3443
        %v3467 = vunpack.c.l.b16 %v3444
        %v3468 = vunpack.c.h.b16 %v3444
        %v3469 = vpack.c.b16 %v3455, %v3453
        %v3470 = vpack.c.b16 %v3456, %v3454
        %v3471 = vpack.c.b16 %v3459, %v3457
        %v3472 = vpack.c.b16 %v3460, %v3458
        %v3473 = vpack.c.b16 %v3463, %v3461
        %v3474 = vpack.c.b16 %v3464, %v3462
        %v3475 = vpack.c.b16 %v3467, %v3465
        %v3476 = vpack.c.b16 %v3468, %v3466
        %v3482 = vsel %vm1324, %v3470, 0
        %v3485 = vsel %vm1324, %v3472, 0
        %v3488 = vsel %vm1324, %v3474, 0
        %v3491 = vsel %vm1324, %v3476, 0
        %3493 = vmatprep.subr.bf16.mxu0 %v3261
        %3494 = vmatpush1.bf16.msra.mxu0 %v3260
        %3495 = vmatprep.subr.bf16.mxu0 %v3265
        %3496 = vmatpush1.bf16.msra.mxu0 %v3264
        %3497 = vmatprep.subr.bf16.mxu0 %v3269
        %3498 = vmatpush1.bf16.msra.mxu0 %v3268
        %3499 = vmatprep.subr.bf16.mxu0 %v3273
        %3500 = vmatpush1.bf16.msra.mxu0 %v3272
        %3501 = vmatprep.subr.bf16.mxu0 %v3421
        %3502 = vmatpush1.bf16.msra.mxu0 %v3420
        %3503 = vmatprep.subr.bf16.mxu0 %v3425
        %3504 = vmatpush1.bf16.msra.mxu0 %v3424
        %3505 = vmatprep.subr.bf16.mxu0 %v3429
        %3506 = vmatpush1.bf16.msra.mxu0 %v3428
        %3507 = vmatprep.subr.bf16.mxu0 %v3433
        %3508 = vmatpush1.bf16.msra.mxu0 %v3432
        %3509 = vmatprep.subr.bf16.mxu0 %v3405
        %3510 = vmatpush1.bf16.msra.mxu0 %v3404
        %3511 = vmatprep.subr.bf16.mxu0 %v3409
        %3512 = vmatpush1.bf16.msra.mxu0 %v3408
        %3513 = vmatprep.subr.bf16.mxu0 %v3413
        %3514 = vmatpush1.bf16.msra.mxu0 %v3412
        %3515 = vmatprep.subr.bf16.mxu0 %v3417
        %3516 = vmatpush1.bf16.msra.mxu0 %v3416
        %3517 = vmatprep.subr.bf16.mxu0 %v974
        %3518 = vmatpush1.bf16.msra.mxu0 %v974
        %3519 = vmatprep.subr.bf16.mxu0 0
        %3520 = vmatpush1.bf16.msra.mxu0 0
        %3521 = vmatprep.subr.bf16.mxu0 0
        %3522 = vmatpush1.bf16.msra.mxu0 0
        %3523 = vmatprep.subr.bf16.mxu0 0
        %3524 = vmatpush1.bf16.msra.mxu0 0
        %3525 = vmatprep.mubr.bf16.mxu0 %v3482
        %3526 = vmatmul.mubr.bf16.gmra.mrb[0].mxu0 %v3469
        %v3527 = vpop.f32.mrb[0].mxu0
        %v3528 = vadd.f32 0.0, %v3527
        %v3529 = vpop.f32.mrb[0].mxu0
        %v3530 = vadd.f32 0.0, %v3529
        %v3531 = vpop.f32.mrb[0].mxu0
        %v3532 = vadd.f32 0.0, %v3531
        %v3533 = vpop.f32.mrb[0].mxu0
        %v3534 = vadd.f32 0.0, %v3533
        %3535 = vmatprep.mubr.bf16.mxu0 %v3485
        %3536 = vmatmul.mubr.bf16.gmra.mrb[0].mxu0 %v3471
        %v3537 = vpop.f32.mrb[0].mxu0
        %v3538 = vadd.f32 0.0, %v3537
        %v3539 = vpop.f32.mrb[0].mxu0
        %v3540 = vadd.f32 0.0, %v3539
        %v3541 = vpop.f32.mrb[0].mxu0
        %v3542 = vadd.f32 0.0, %v3541
        %v3543 = vpop.f32.mrb[0].mxu0
        %v3544 = vadd.f32 0.0, %v3543
        %3545 = vmatprep.mubr.bf16.mxu0 %v3488
        %3546 = vmatmul.mubr.bf16.gmra.mrb[0].mxu0 %v3473
        %v3547 = vpop.f32.mrb[0].mxu0
        %v3548 = vadd.f32 0.0, %v3547
        %v3549 = vpop.f32.mrb[0].mxu0
        %v3550 = vadd.f32 0.0, %v3549
        %v3551 = vpop.f32.mrb[0].mxu0
        %v3552 = vadd.f32 0.0, %v3551
        %v3553 = vpop.f32.mrb[0].mxu0
        %v3554 = vadd.f32 0.0, %v3553
        %3555 = vmatprep.mubr.bf16.mxu0 %v3491
        %3556 = vmatmul.mubr.bf16.gmra.mrb[0].mxu0 %v3475
        %v3557 = vpop.f32.mrb[0].mxu0
        %v3558 = vadd.f32 0.0, %v3557
        %v3559 = vpop.f32.mrb[0].mxu0
        %v3560 = vadd.f32 0.0, %v3559
        %v3561 = vpop.f32.mrb[0].mxu0
        %v3562 = vadd.f32 0.0, %v3561
        %v3563 = vpop.f32.mrb[0].mxu0
        %v3564 = vadd.f32 0.0, %v3563
        %3565 = vdwg.mxu0
        %3566 = vmatprep.subr.bf16.mxu0 %v3263
        %3567 = vmatpush1.bf16.msra.mxu0 %v3262
        %3568 = vmatprep.subr.bf16.mxu0 %v3267
        %3569 = vmatpush1.bf16.msra.mxu0 %v3266
        %3570 = vmatprep.subr.bf16.mxu0 %v3271
        %3571 = vmatpush1.bf16.msra.mxu0 %v3270
        %3572 = vmatprep.subr.bf16.mxu0 %v3275
        %3573 = vmatpush1.bf16.msra.mxu0 %v3274
        %3574 = vmatprep.subr.bf16.mxu0 %v3423
        %3575 = vmatpush1.bf16.msra.mxu0 %v3422
        %3576 = vmatprep.subr.bf16.mxu0 %v3427
        %3577 = vmatpush1.bf16.msra.mxu0 %v3426
        %3578 = vmatprep.subr.bf16.mxu0 %v3431
        %3579 = vmatpush1.bf16.msra.mxu0 %v3430
        %3580 = vmatprep.subr.bf16.mxu0 %v3435
        %3581 = vmatpush1.bf16.msra.mxu0 %v3434
        %3582 = vmatprep.subr.bf16.mxu0 %v3407
        %3583 = vmatpush1.bf16.msra.mxu0 %v3406
        %3584 = vmatprep.subr.bf16.mxu0 %v3411
        %3585 = vmatpush1.bf16.msra.mxu0 %v3410
        %3586 = vmatprep.subr.bf16.mxu0 %v3415
        %3587 = vmatpush1.bf16.msra.mxu0 %v3414
        %3588 = vmatprep.subr.bf16.mxu0 %v3419
        %3589 = vmatpush1.bf16.msra.mxu0 %v3418
        %3590 = vmatprep.subr.bf16.mxu0 %v974
        %3591 = vmatpush1.bf16.msra.mxu0 %v974
        %3592 = vmatprep.subr.bf16.mxu0 0
        %3593 = vmatpush1.bf16.msra.mxu0 0
        %3594 = vmatprep.subr.bf16.mxu0 0
        %3595 = vmatpush1.bf16.msra.mxu0 0
        %3596 = vmatprep.subr.bf16.mxu0 0
        %3597 = vmatpush1.bf16.msra.mxu0 0
        %3598 = vmatprep.mubr.bf16.mxu0 %v3482
        %3599 = vmatmul.mubr.bf16.gmra.mrb[0].mxu0 %v3469
        %v3600 = vpop.f32.mrb[0].mxu0
        %v3601 = vadd.f32 0.0, %v3600
        %v3602 = vpop.f32.mrb[0].mxu0
        %v3603 = vadd.f32 0.0, %v3602
        %v3604 = vpop.f32.mrb[0].mxu0
        %v3605 = vadd.f32 0.0, %v3604
        %v3606 = vpop.f32.mrb[0].mxu0
        %v3607 = vadd.f32 0.0, %v3606
        %3608 = vmatprep.mubr.bf16.mxu0 %v3485
        %3609 = vmatmul.mubr.bf16.gmra.mrb[0].mxu0 %v3471
        %v3610 = vpop.f32.mrb[0].mxu0
        %v3611 = vadd.f32 0.0, %v3610
        %v3612 = vpop.f32.mrb[0].mxu0
        %v3613 = vadd.f32 0.0, %v3612
        %v3614 = vpop.f32.mrb[0].mxu0
        %v3615 = vadd.f32 0.0, %v3614
        %v3616 = vpop.f32.mrb[0].mxu0
        %v3617 = vadd.f32 0.0, %v3616
        %3618 = vmatprep.mubr.bf16.mxu0 %v3488
        %3619 = vmatmul.mubr.bf16.gmra.mrb[0].mxu0 %v3473
        %v3620 = vpop.f32.mrb[0].mxu0
        %v3621 = vadd.f32 0.0, %v3620
        %v3622 = vpop.f32.mrb[0].mxu0
        %v3623 = vadd.f32 0.0, %v3622
        %v3624 = vpop.f32.mrb[0].mxu0
        %v3625 = vadd.f32 0.0, %v3624
        %v3626 = vpop.f32.mrb[0].mxu0
        %v3627 = vadd.f32 0.0, %v3626
        %3628 = vmatprep.mubr.bf16.mxu0 %v3491
        %3629 = vmatmul.mubr.bf16.gmra.mrb[0].mxu0 %v3475
        %v3630 = vpop.f32.mrb[0].mxu0
        %v3631 = vadd.f32 0.0, %v3630
        %v3632 = vpop.f32.mrb[0].mxu0
        %v3633 = vadd.f32 0.0, %v3632
        %v3634 = vpop.f32.mrb[0].mxu0
        %v3635 = vadd.f32 0.0, %v3634
        %v3636 = vpop.f32.mrb[0].mxu0
        %v3637 = vadd.f32 0.0, %v3636
        %3638 = vdwg.mxu0
        %v3639 = vmax.f32 %v3528, 0.0
        %v3640 = vmax.f32 %v3530, 0.0
        %v3641 = vmax.f32 %v3601, 0.0
        %v3642 = vmax.f32 %v3603, 0.0
        %v3643 = vmax.f32 %v3532, 0.0
        %v3644 = vmax.f32 %v3534, 0.0
        %v3645 = vmax.f32 %v3605, 0.0
        %v3646 = vmax.f32 %v3607, 0.0
        %v3647 = vmax.f32 %v3538, 0.0
        %v3648 = vmax.f32 %v3540, 0.0
        %v3649 = vmax.f32 %v3611, 0.0
        %v3650 = vmax.f32 %v3613, 0.0
        %v3651 = vmax.f32 %v3542, 0.0
        %v3652 = vmax.f32 %v3544, 0.0
        %v3653 = vmax.f32 %v3615, 0.0
        %v3654 = vmax.f32 %v3617, 0.0
        %v3655 = vmax.f32 %v3548, 0.0
        %v3656 = vmax.f32 %v3550, 0.0
        %v3657 = vmax.f32 %v3621, 0.0
        %v3658 = vmax.f32 %v3623, 0.0
        %v3659 = vmax.f32 %v3552, 0.0
        %v3660 = vmax.f32 %v3554, 0.0
        %v3661 = vmax.f32 %v3625, 0.0
        %v3662 = vmax.f32 %v3627, 0.0
        %v3663 = vmax.f32 %v3558, 0.0
        %v3664 = vmax.f32 %v3560, 0.0
        %v3665 = vmax.f32 %v3631, 0.0
        %v3666 = vmax.f32 %v3633, 0.0
        %v3667 = vmax.f32 %v3562, 0.0
        %v3668 = vmax.f32 %v3564, 0.0
        %v3669 = vmax.f32 %v3635, 0.0
        %v3670 = vmax.f32 %v3637, 0.0
        %3671 = vrot.lane.b32.xlu0 %v3639, 1
        %v3672 = vpop.permute.xlu0 %3671
        %3673 = vrot.lane.b32.xlu0 %v3643, 1
        %v3674 = vpop.permute.xlu0 %3673
        %3675 = vrot.lane.b32.xlu0 %v3647, 1
        %v3676 = vpop.permute.xlu0 %3675
        %3677 = vrot.lane.b32.xlu0 %v3651, 1
        %v3678 = vpop.permute.xlu0 %3677
        %3679 = vrot.lane.b32.xlu0 %v3655, 1
        %v3680 = vpop.permute.xlu0 %3679
        %3681 = vrot.lane.b32.xlu0 %v3659, 1
        %v3682 = vpop.permute.xlu0 %3681
        %3683 = vrot.lane.b32.xlu0 %v3663, 1
        %v3684 = vpop.permute.xlu0 %3683
        %3685 = vrot.lane.b32.xlu0 %v3667, 1
        %v3686 = vpop.permute.xlu0 %3685
        %3687 = vrot.lane.b32.xlu0 %v3640, 1
        %v3688 = vpop.permute.xlu0 %3687
        %3689 = vrot.lane.b32.xlu0 %v3644, 1
        %v3690 = vpop.permute.xlu0 %3689
        %3691 = vrot.lane.b32.xlu0 %v3648, 1
        %v3692 = vpop.permute.xlu0 %3691
        %3693 = vrot.lane.b32.xlu0 %v3652, 1
        %v3694 = vpop.permute.xlu0 %3693
        %3695 = vrot.lane.b32.xlu0 %v3656, 1
        %v3696 = vpop.permute.xlu0 %3695
        %3697 = vrot.lane.b32.xlu0 %v3660, 1
        %v3698 = vpop.permute.xlu0 %3697
        %3699 = vrot.lane.b32.xlu0 %v3664, 1
        %v3700 = vpop.permute.xlu0 %3699
        %3701 = vrot.lane.b32.xlu0 %v3668, 1
        %v3702 = vpop.permute.xlu0 %3701
        %3703 = vrot.lane.b32.xlu0 %v3641, 1
        %v3704 = vpop.permute.xlu0 %3703
        %3705 = vrot.lane.b32.xlu0 %v3645, 1
        %v3706 = vpop.permute.xlu0 %3705
        %3707 = vrot.lane.b32.xlu0 %v3649, 1
        %v3708 = vpop.permute.xlu0 %3707
        %3709 = vrot.lane.b32.xlu0 %v3653, 1
        %v3710 = vpop.permute.xlu0 %3709
        %3711 = vrot.lane.b32.xlu0 %v3657, 1
        %v3712 = vpop.permute.xlu0 %3711
        %3713 = vrot.lane.b32.xlu0 %v3661, 1
        %v3714 = vpop.permute.xlu0 %3713
        %3715 = vrot.lane.b32.xlu0 %v3665, 1
        %v3716 = vpop.permute.xlu0 %3715
        %3717 = vrot.lane.b32.xlu0 %v3669, 1
        %v3718 = vpop.permute.xlu0 %3717
        %3719 = vrot.lane.b32.xlu0 %v3642, 1
        %v3720 = vpop.permute.xlu0 %3719
        %3721 = vrot.lane.b32.xlu0 %v3646, 1
        %v3722 = vpop.permute.xlu0 %3721
        %3723 = vrot.lane.b32.xlu0 %v3650, 1
        %v3724 = vpop.permute.xlu0 %3723
        %3725 = vrot.lane.b32.xlu0 %v3654, 1
        %v3726 = vpop.permute.xlu0 %3725
        %3727 = vrot.lane.b32.xlu0 %v3658, 1
        %v3728 = vpop.permute.xlu0 %3727
        %3729 = vrot.lane.b32.xlu0 %v3662, 1
        %v3730 = vpop.permute.xlu0 %3729
        %3731 = vrot.lane.b32.xlu0 %v3666, 1
        %v3732 = vpop.permute.xlu0 %3731
        %3733 = vrot.lane.b32.xlu0 %v3670, 1
        %v3734 = vpop.permute.xlu0 %3733
        %v3735 = vsel %vm842, %v3704, %v3720
        %v3736 = vsel %vm842, %v3706, %v3722
        %v3737 = vsel %vm842, %v3708, %v3724
        %v3738 = vsel %vm842, %v3710, %v3726
        %v3739 = vsel %vm842, %v3712, %v3728
        %v3740 = vsel %vm842, %v3714, %v3730
        %v3741 = vsel %vm842, %v3716, %v3732
        %v3742 = vsel %vm842, %v3718, %v3734
        %v3743 = vsel %vm842, %v3688, %v3704
        %v3744 = vsel %vm842, %v3690, %v3706
        %v3745 = vsel %vm842, %v3692, %v3708
        %v3746 = vsel %vm842, %v3694, %v3710
        %v3747 = vsel %vm842, %v3696, %v3712
        %v3748 = vsel %vm842, %v3698, %v3714
        %v3749 = vsel %vm842, %v3700, %v3716
        %v3750 = vsel %vm842, %v3702, %v3718
        %v3751 = vsel %vm842, %v3672, %v3688
        %v3752 = vsel %vm842, %v3674, %v3690
        %v3753 = vsel %vm842, %v3676, %v3692
        %v3754 = vsel %vm842, %v3678, %v3694
        %v3755 = vsel %vm842, %v3680, %v3696
        %v3756 = vsel %vm842, %v3682, %v3698
        %v3757 = vsel %vm842, %v3684, %v3700
        %v3758 = vsel %vm842, %v3686, %v3702
        %v3759 = vsel %vm842, %v3720, %v3672
        %v3760 = vsel %vm842, %v3722, %v3674
        %v3761 = vsel %vm842, %v3724, %v3676
        %v3762 = vsel %vm842, %v3726, %v3678
        %v3763 = vsel %vm842, %v3728, %v3680
        %v3764 = vsel %vm842, %v3730, %v3682
        %v3765 = vsel %vm842, %v3732, %v3684
        %v3766 = vsel %vm842, %v3734, %v3686
        %v3767 = vmul.f32 %v3759, %v762
        %v3768 = vmul.f32 %v3751, %v763
        %v3769 = vmul.f32 %v3743, %v764
        %v3770 = vmul.f32 %v3735, %v765
        %v3771 = vmul.f32 %v3760, %v762
        %v3772 = vmul.f32 %v3752, %v763
        %v3773 = vmul.f32 %v3744, %v764
        %v3774 = vmul.f32 %v3736, %v765
        %v3775 = vmul.f32 %v3761, %v762
        %v3776 = vmul.f32 %v3753, %v763
        %v3777 = vmul.f32 %v3745, %v764
        %v3778 = vmul.f32 %v3737, %v765
        %v3779 = vmul.f32 %v3762, %v762
        %v3780 = vmul.f32 %v3754, %v763
        %v3781 = vmul.f32 %v3746, %v764
        %v3782 = vmul.f32 %v3738, %v765
        %v3783 = vmul.f32 %v3763, %v762
        %v3784 = vmul.f32 %v3755, %v763
        %v3785 = vmul.f32 %v3747, %v764
        %v3786 = vmul.f32 %v3739, %v765
        %v3787 = vmul.f32 %v3764, %v762
        %v3788 = vmul.f32 %v3756, %v763
        %v3789 = vmul.f32 %v3748, %v764
        %v3790 = vmul.f32 %v3740, %v765
        %v3791 = vmul.f32 %v3765, %v762
        %v3792 = vmul.f32 %v3757, %v763
        %v3793 = vmul.f32 %v3749, %v764
        %v3794 = vmul.f32 %v3741, %v765
        %v3795 = vmul.f32 %v3766, %v762
        %v3796 = vmul.f32 %v3758, %v763
        %v3797 = vmul.f32 %v3750, %v764
        %v3798 = vmul.f32 %v3742, %v765
        %v3799 = vpack.c.bf16 %v3771, %v3767
        %v3800 = vpack.c.bf16 %v3772, %v3768
        %v3801 = vpack.c.bf16 %v3773, %v3769
        %v3802 = vpack.c.bf16 %v3774, %v3770
        %v3803 = vpack.c.bf16 %v3779, %v3775
        %v3804 = vpack.c.bf16 %v3780, %v3776
        %v3805 = vpack.c.bf16 %v3781, %v3777
        %v3806 = vpack.c.bf16 %v3782, %v3778
        %v3807 = vpack.c.bf16 %v3787, %v3783
        %v3808 = vpack.c.bf16 %v3788, %v3784
        %v3809 = vpack.c.bf16 %v3789, %v3785
        %v3810 = vpack.c.bf16 %v3790, %v3786
        %v3811 = vpack.c.bf16 %v3795, %v3791
        %v3812 = vpack.c.bf16 %v3796, %v3792
        %v3813 = vpack.c.bf16 %v3797, %v3793
        %v3814 = vpack.c.bf16 %v3798, %v3794
        %3815 = vrot.lane.b32.xlu0 %v3639, 127
        %v3816 = vpop.permute.xlu0 %3815
        %3817 = vrot.lane.b32.xlu0 %v3643, 127
        %v3818 = vpop.permute.xlu0 %3817
        %3819 = vrot.lane.b32.xlu0 %v3647, 127
        %v3820 = vpop.permute.xlu0 %3819
        %3821 = vrot.lane.b32.xlu0 %v3651, 127
        %v3822 = vpop.permute.xlu0 %3821
        %3823 = vrot.lane.b32.xlu0 %v3655, 127
        %v3824 = vpop.permute.xlu0 %3823
        %3825 = vrot.lane.b32.xlu0 %v3659, 127
        %v3826 = vpop.permute.xlu0 %3825
        %3827 = vrot.lane.b32.xlu0 %v3663, 127
        %v3828 = vpop.permute.xlu0 %3827
        %3829 = vrot.lane.b32.xlu0 %v3667, 127
        %v3830 = vpop.permute.xlu0 %3829
        %3831 = vrot.lane.b32.xlu0 %v3640, 127
        %v3832 = vpop.permute.xlu0 %3831
        %3833 = vrot.lane.b32.xlu0 %v3644, 127
        %v3834 = vpop.permute.xlu0 %3833
        %3835 = vrot.lane.b32.xlu0 %v3648, 127
        %v3836 = vpop.permute.xlu0 %3835
        %3837 = vrot.lane.b32.xlu0 %v3652, 127
        %v3838 = vpop.permute.xlu0 %3837
        %3839 = vrot.lane.b32.xlu0 %v3656, 127
        %v3840 = vpop.permute.xlu0 %3839
        %3841 = vrot.lane.b32.xlu0 %v3660, 127
        %v3842 = vpop.permute.xlu0 %3841
        %3843 = vrot.lane.b32.xlu0 %v3664, 127
        %v3844 = vpop.permute.xlu0 %3843
        %3845 = vrot.lane.b32.xlu0 %v3668, 127
        %v3846 = vpop.permute.xlu0 %3845
        %3847 = vrot.lane.b32.xlu0 %v3641, 127
        %v3848 = vpop.permute.xlu0 %3847
        %3849 = vrot.lane.b32.xlu0 %v3645, 127
        %v3850 = vpop.permute.xlu0 %3849
        %3851 = vrot.lane.b32.xlu0 %v3649, 127
        %v3852 = vpop.permute.xlu0 %3851
        %3853 = vrot.lane.b32.xlu0 %v3653, 127
        %v3854 = vpop.permute.xlu0 %3853
        %3855 = vrot.lane.b32.xlu0 %v3657, 127
        %v3856 = vpop.permute.xlu0 %3855
        %3857 = vrot.lane.b32.xlu0 %v3661, 127
        %v3858 = vpop.permute.xlu0 %3857
        %3859 = vrot.lane.b32.xlu0 %v3665, 127
        %v3860 = vpop.permute.xlu0 %3859
        %3861 = vrot.lane.b32.xlu0 %v3669, 127
        %v3862 = vpop.permute.xlu0 %3861
        %3863 = vrot.lane.b32.xlu0 %v3642, 127
        %v3864 = vpop.permute.xlu0 %3863
        %3865 = vrot.lane.b32.xlu0 %v3646, 127
        %v3866 = vpop.permute.xlu0 %3865
        %3867 = vrot.lane.b32.xlu0 %v3650, 127
        %v3868 = vpop.permute.xlu0 %3867
        %3869 = vrot.lane.b32.xlu0 %v3654, 127
        %v3870 = vpop.permute.xlu0 %3869
        %3871 = vrot.lane.b32.xlu0 %v3658, 127
        %v3872 = vpop.permute.xlu0 %3871
        %3873 = vrot.lane.b32.xlu0 %v3662, 127
        %v3874 = vpop.permute.xlu0 %3873
        %3875 = vrot.lane.b32.xlu0 %v3666, 127
        %v3876 = vpop.permute.xlu0 %3875
        %3877 = vrot.lane.b32.xlu0 %v3670, 127
        %v3878 = vpop.permute.xlu0 %3877
        %v3879 = vsel %vm1183, %v3848, %v3864
        %v3880 = vsel %vm1183, %v3850, %v3866
        %v3881 = vsel %vm1183, %v3852, %v3868
        %v3882 = vsel %vm1183, %v3854, %v3870
        %v3883 = vsel %vm1183, %v3856, %v3872
        %v3884 = vsel %vm1183, %v3858, %v3874
        %v3885 = vsel %vm1183, %v3860, %v3876
        %v3886 = vsel %vm1183, %v3862, %v3878
        %v3887 = vsel %vm1183, %v3832, %v3848
        %v3888 = vsel %vm1183, %v3834, %v3850
        %v3889 = vsel %vm1183, %v3836, %v3852
        %v3890 = vsel %vm1183, %v3838, %v3854
        %v3891 = vsel %vm1183, %v3840, %v3856
        %v3892 = vsel %vm1183, %v3842, %v3858
        %v3893 = vsel %vm1183, %v3844, %v3860
        %v3894 = vsel %vm1183, %v3846, %v3862
        %v3895 = vsel %vm1183, %v3816, %v3832
        %v3896 = vsel %vm1183, %v3818, %v3834
        %v3897 = vsel %vm1183, %v3820, %v3836
        %v3898 = vsel %vm1183, %v3822, %v3838
        %v3899 = vsel %vm1183, %v3824, %v3840
        %v3900 = vsel %vm1183, %v3826, %v3842
        %v3901 = vsel %vm1183, %v3828, %v3844
        %v3902 = vsel %vm1183, %v3830, %v3846
        %v3903 = vsel %vm1183, %v3864, %v3816
        %v3904 = vsel %vm1183, %v3866, %v3818
        %v3905 = vsel %vm1183, %v3868, %v3820
        %v3906 = vsel %vm1183, %v3870, %v3822
        %v3907 = vsel %vm1183, %v3872, %v3824
        %v3908 = vsel %vm1183, %v3874, %v3826
        %v3909 = vsel %vm1183, %v3876, %v3828
        %v3910 = vsel %vm1183, %v3878, %v3830
        %v3911 = vmul.f32 %v3895, %v774
        %v3912 = vmul.f32 %v3887, %v775
        %v3913 = vmul.f32 %v3879, %v776
        %v3914 = vmul.f32 %v3903, %v777
        %v3915 = vmul.f32 %v3896, %v774
        %v3916 = vmul.f32 %v3888, %v775
        %v3917 = vmul.f32 %v3880, %v776
        %v3918 = vmul.f32 %v3904, %v777
        %v3919 = vmul.f32 %v3897, %v774
        %v3920 = vmul.f32 %v3889, %v775
        %v3921 = vmul.f32 %v3881, %v776
        %v3922 = vmul.f32 %v3905, %v777
        %v3923 = vmul.f32 %v3898, %v774
        %v3924 = vmul.f32 %v3890, %v775
        %v3925 = vmul.f32 %v3882, %v776
        %v3926 = vmul.f32 %v3906, %v777
        %v3927 = vmul.f32 %v3899, %v774
        %v3928 = vmul.f32 %v3891, %v775
        %v3929 = vmul.f32 %v3883, %v776
        %v3930 = vmul.f32 %v3907, %v777
        %v3931 = vmul.f32 %v3900, %v774
        %v3932 = vmul.f32 %v3892, %v775
        %v3933 = vmul.f32 %v3884, %v776
        %v3934 = vmul.f32 %v3908, %v777
        %v3935 = vmul.f32 %v3901, %v774
        %v3936 = vmul.f32 %v3893, %v775
        %v3937 = vmul.f32 %v3885, %v776
        %v3938 = vmul.f32 %v3909, %v777
        %v3939 = vmul.f32 %v3902, %v774
        %v3940 = vmul.f32 %v3894, %v775
        %v3941 = vmul.f32 %v3886, %v776
        %v3942 = vmul.f32 %v3910, %v777
        %v3943 = vpack.c.bf16 %v3915, %v3911
        %v3944 = vpack.c.bf16 %v3916, %v3912
        %v3945 = vpack.c.bf16 %v3917, %v3913
        %v3946 = vpack.c.bf16 %v3918, %v3914
        %v3947 = vpack.c.bf16 %v3923, %v3919
        %v3948 = vpack.c.bf16 %v3924, %v3920
        %v3949 = vpack.c.bf16 %v3925, %v3921
        %v3950 = vpack.c.bf16 %v3926, %v3922
        %v3951 = vpack.c.bf16 %v3931, %v3927
        %v3952 = vpack.c.bf16 %v3932, %v3928
        %v3953 = vpack.c.bf16 %v3933, %v3929
        %v3954 = vpack.c.bf16 %v3934, %v3930
        %v3955 = vpack.c.bf16 %v3939, %v3935
        %v3956 = vpack.c.bf16 %v3940, %v3936
        %v3957 = vpack.c.bf16 %v3941, %v3937
        %v3958 = vpack.c.bf16 %v3942, %v3938
        %v3959 = vpack.c.bf16 %v3643, %v3639
        %v3960 = vpack.c.bf16 %v3644, %v3640
        %v3961 = vpack.c.bf16 %v3645, %v3641
        %v3962 = vpack.c.bf16 %v3646, %v3642
        %v3963 = vpack.c.bf16 %v3651, %v3647
        %v3964 = vpack.c.bf16 %v3652, %v3648
        %v3965 = vpack.c.bf16 %v3653, %v3649
        %v3966 = vpack.c.bf16 %v3654, %v3650
        %v3967 = vpack.c.bf16 %v3659, %v3655
        %v3968 = vpack.c.bf16 %v3660, %v3656
        %v3969 = vpack.c.bf16 %v3661, %v3657
        %v3970 = vpack.c.bf16 %v3662, %v3658
        %v3971 = vpack.c.bf16 %v3667, %v3663
        %v3972 = vpack.c.bf16 %v3668, %v3664
        %v3973 = vpack.c.bf16 %v3669, %v3665
        %v3974 = vpack.c.bf16 %v3670, %v3666
        %s3975 = scalar_lea.vmem [#allocation5], 320
        %v3976 = vld [vmem:[%s3975] sm:$0xff]
        %v3977 = vld [vmem:[%s3975 + $0x8] sm:$0xff]
        %v3978 = vld [vmem:[%s3975 + $0x10] sm:$0xff]
        %v3979 = vld [vmem:[%s3975 + $0x18] sm:$0xff]
        %v3980 = vld [vmem:[%s3975 + $0x20] sm:$0xff]
        %v3981 = vld [vmem:[%s3975 + $0x28] sm:$0xff]
        %v3982 = vld [vmem:[%s3975 + $0x30] sm:$0xff]
        %v3983 = vld [vmem:[%s3975 + $0x38] sm:$0xff]
        %v3992 = vunpack.c.l.b16 %v3976
        %v3993 = vunpack.c.h.b16 %v3976
        %v3994 = vunpack.c.l.b16 %v3977
        %v3995 = vunpack.c.h.b16 %v3977
        %v3996 = vunpack.c.l.b16 %v3978
        %v3997 = vunpack.c.h.b16 %v3978
        %v3998 = vunpack.c.l.b16 %v3979
        %v3999 = vunpack.c.h.b16 %v3979
        %v4000 = vunpack.c.l.b16 %v3980
        %v4001 = vunpack.c.h.b16 %v3980
        %v4002 = vunpack.c.l.b16 %v3981
        %v4003 = vunpack.c.h.b16 %v3981
        %v4004 = vunpack.c.l.b16 %v3982
        %v4005 = vunpack.c.h.b16 %v3982
        %v4006 = vunpack.c.l.b16 %v3983
        %v4007 = vunpack.c.h.b16 %v3983
        %v4008 = vpack.c.b16 %v3994, %v3992
        %v4009 = vpack.c.b16 %v3995, %v3993
        %v4010 = vpack.c.b16 %v3998, %v3996
        %v4011 = vpack.c.b16 %v3999, %v3997
        %v4012 = vpack.c.b16 %v4002, %v4000
        %v4013 = vpack.c.b16 %v4003, %v4001
        %v4014 = vpack.c.b16 %v4006, %v4004
        %v4015 = vpack.c.b16 %v4007, %v4005
        %v4021 = vsel %vm1324, %v4009, 0
        %v4024 = vsel %vm1324, %v4011, 0
        %v4027 = vsel %vm1324, %v4013, 0
        %v4030 = vsel %vm1324, %v4015, 0
        %4032 = vmatprep.subr.bf16.mxu0 %v3800
        %4033 = vmatpush1.bf16.msra.mxu0 %v3799
        %4034 = vmatprep.subr.bf16.mxu0 %v3804
        %4035 = vmatpush1.bf16.msra.mxu0 %v3803
        %4036 = vmatprep.subr.bf16.mxu0 %v3808
        %4037 = vmatpush1.bf16.msra.mxu0 %v3807
        %4038 = vmatprep.subr.bf16.mxu0 %v3812
        %4039 = vmatpush1.bf16.msra.mxu0 %v3811
        %4040 = vmatprep.subr.bf16.mxu0 %v3960
        %4041 = vmatpush1.bf16.msra.mxu0 %v3959
        %4042 = vmatprep.subr.bf16.mxu0 %v3964
        %4043 = vmatpush1.bf16.msra.mxu0 %v3963
        %4044 = vmatprep.subr.bf16.mxu0 %v3968
        %4045 = vmatpush1.bf16.msra.mxu0 %v3967
        %4046 = vmatprep.subr.bf16.mxu0 %v3972
        %4047 = vmatpush1.bf16.msra.mxu0 %v3971
        %4048 = vmatprep.subr.bf16.mxu0 %v3944
        %4049 = vmatpush1.bf16.msra.mxu0 %v3943
        %4050 = vmatprep.subr.bf16.mxu0 %v3948
        %4051 = vmatpush1.bf16.msra.mxu0 %v3947
        %4052 = vmatprep.subr.bf16.mxu0 %v3952
        %4053 = vmatpush1.bf16.msra.mxu0 %v3951
        %4054 = vmatprep.subr.bf16.mxu0 %v3956
        %4055 = vmatpush1.bf16.msra.mxu0 %v3955
        %4056 = vmatprep.subr.bf16.mxu0 %v974
        %4057 = vmatpush1.bf16.msra.mxu0 %v974
        %4058 = vmatprep.subr.bf16.mxu0 0
        %4059 = vmatpush1.bf16.msra.mxu0 0
        %4060 = vmatprep.subr.bf16.mxu0 0
        %4061 = vmatpush1.bf16.msra.mxu0 0
        %4062 = vmatprep.subr.bf16.mxu0 0
        %4063 = vmatpush1.bf16.msra.mxu0 0
        %4064 = vmatprep.mubr.bf16.mxu0 %v4021
        %4065 = vmatmul.mubr.bf16.gmra.mrb[0].mxu0 %v4008
        %v4066 = vpop.f32.mrb[0].mxu0
        %v4067 = vadd.f32 %v3100, %v4066
        %v4068 = vpop.f32.mrb[0].mxu0
        %v4069 = vadd.f32 %v3101, %v4068
        %v4070 = vpop.f32.mrb[0].mxu0
        %v4071 = vadd.f32 %v3104, %v4070
        %v4072 = vpop.f32.mrb[0].mxu0
        %v4073 = vadd.f32 %v3105, %v4072
        %4074 = vmatprep.mubr.bf16.mxu0 %v4024
        %4075 = vmatmul.mubr.bf16.gmra.mrb[0].mxu0 %v4010
        %v4076 = vpop.f32.mrb[0].mxu0
        %v4077 = vadd.f32 %v3108, %v4076
        %v4078 = vpop.f32.mrb[0].mxu0
        %v4079 = vadd.f32 %v3109, %v4078
        %v4080 = vpop.f32.mrb[0].mxu0
        %v4081 = vadd.f32 %v3112, %v4080
        %v4082 = vpop.f32.mrb[0].mxu0
        %v4083 = vadd.f32 %v3113, %v4082
        %4084 = vmatprep.mubr.bf16.mxu0 %v4027
        %4085 = vmatmul.mubr.bf16.gmra.mrb[0].mxu0 %v4012
        %v4086 = vpop.f32.mrb[0].mxu0
        %v4087 = vadd.f32 %v3116, %v4086
        %v4088 = vpop.f32.mrb[0].mxu0
        %v4089 = vadd.f32 %v3117, %v4088
        %v4090 = vpop.f32.mrb[0].mxu0
        %v4091 = vadd.f32 %v3120, %v4090
        %v4092 = vpop.f32.mrb[0].mxu0
        %v4093 = vadd.f32 %v3121, %v4092
        %4094 = vmatprep.mubr.bf16.mxu0 %v4030
        %4095 = vmatmul.mubr.bf16.gmra.mrb[0].mxu0 %v4014
        %v4096 = vpop.f32.mrb[0].mxu0
        %v4097 = vadd.f32 %v3124, %v4096
        %v4098 = vpop.f32.mrb[0].mxu0
        %v4099 = vadd.f32 %v3125, %v4098
        %v4100 = vpop.f32.mrb[0].mxu0
        %v4101 = vadd.f32 %v3128, %v4100
        %v4102 = vpop.f32.mrb[0].mxu0
        %v4103 = vadd.f32 %v3129, %v4102
        %4104 = vdwg.mxu0
        %4105 = vmatprep.subr.bf16.mxu0 %v3802
        %4106 = vmatpush1.bf16.msra.mxu0 %v3801
        %4107 = vmatprep.subr.bf16.mxu0 %v3806
        %4108 = vmatpush1.bf16.msra.mxu0 %v3805
        %4109 = vmatprep.subr.bf16.mxu0 %v3810
        %4110 = vmatpush1.bf16.msra.mxu0 %v3809
        %4111 = vmatprep.subr.bf16.mxu0 %v3814
        %4112 = vmatpush1.bf16.msra.mxu0 %v3813
        %4113 = vmatprep.subr.bf16.mxu0 %v3962
        %4114 = vmatpush1.bf16.msra.mxu0 %v3961
        %4115 = vmatprep.subr.bf16.mxu0 %v3966
        %4116 = vmatpush1.bf16.msra.mxu0 %v3965
        %4117 = vmatprep.subr.bf16.mxu0 %v3970
        %4118 = vmatpush1.bf16.msra.mxu0 %v3969
        %4119 = vmatprep.subr.bf16.mxu0 %v3974
        %4120 = vmatpush1.bf16.msra.mxu0 %v3973
        %4121 = vmatprep.subr.bf16.mxu0 %v3946
        %4122 = vmatpush1.bf16.msra.mxu0 %v3945
        %4123 = vmatprep.subr.bf16.mxu0 %v3950
        %4124 = vmatpush1.bf16.msra.mxu0 %v3949
        %4125 = vmatprep.subr.bf16.mxu0 %v3954
        %4126 = vmatpush1.bf16.msra.mxu0 %v3953
        %4127 = vmatprep.subr.bf16.mxu0 %v3958
        %4128 = vmatpush1.bf16.msra.mxu0 %v3957
        %4129 = vmatprep.subr.bf16.mxu0 %v974
        %4130 = vmatpush1.bf16.msra.mxu0 %v974
        %4131 = vmatprep.subr.bf16.mxu0 0
        %4132 = vmatpush1.bf16.msra.mxu0 0
        %4133 = vmatprep.subr.bf16.mxu0 0
        %4134 = vmatpush1.bf16.msra.mxu0 0
        %4135 = vmatprep.subr.bf16.mxu0 0
        %4136 = vmatpush1.bf16.msra.mxu0 0
        %4137 = vmatprep.mubr.bf16.mxu0 %v4021
        %4138 = vmatmul.mubr.bf16.gmra.mrb[0].mxu0 %v4008
        %v4139 = vpop.f32.mrb[0].mxu0
        %v4140 = vadd.f32 %v3102, %v4139
        %v4141 = vpop.f32.mrb[0].mxu0
        %v4142 = vadd.f32 %v3103, %v4141
        %v4143 = vpop.f32.mrb[0].mxu0
        %v4144 = vadd.f32 %v3106, %v4143
        %v4145 = vpop.f32.mrb[0].mxu0
        %v4146 = vadd.f32 %v3107, %v4145
        %4147 = vmatprep.mubr.bf16.mxu0 %v4024
        %4148 = vmatmul.mubr.bf16.gmra.mrb[0].mxu0 %v4010
        %v4149 = vpop.f32.mrb[0].mxu0
        %v4150 = vadd.f32 %v3110, %v4149
        %v4151 = vpop.f32.mrb[0].mxu0
        %v4152 = vadd.f32 %v3111, %v4151
        %v4153 = vpop.f32.mrb[0].mxu0
        %v4154 = vadd.f32 %v3114, %v4153
        %v4155 = vpop.f32.mrb[0].mxu0
        %v4156 = vadd.f32 %v3115, %v4155
        %4157 = vmatprep.mubr.bf16.mxu0 %v4027
        %4158 = vmatmul.mubr.bf16.gmra.mrb[0].mxu0 %v4012
        %v4159 = vpop.f32.mrb[0].mxu0
        %v4160 = vadd.f32 %v3118, %v4159
        %v4161 = vpop.f32.mrb[0].mxu0
        %v4162 = vadd.f32 %v3119, %v4161
        %v4163 = vpop.f32.mrb[0].mxu0
        %v4164 = vadd.f32 %v3122, %v4163
        %v4165 = vpop.f32.mrb[0].mxu0
        %v4166 = vadd.f32 %v3123, %v4165
        %4167 = vmatprep.mubr.bf16.mxu0 %v4030
        %4168 = vmatmul.mubr.bf16.gmra.mrb[0].mxu0 %v4014
        %v4169 = vpop.f32.mrb[0].mxu0
        %v4170 = vadd.f32 %v3126, %v4169
        %v4171 = vpop.f32.mrb[0].mxu0
        %v4172 = vadd.f32 %v3127, %v4171
        %v4173 = vpop.f32.mrb[0].mxu0
        %v4174 = vadd.f32 %v3130, %v4173
        %v4175 = vpop.f32.mrb[0].mxu0
        %v4176 = vadd.f32 %v3131, %v4175
        %4177 = vdwg.mxu0
        %v4178 = vmax.f32 %v4067, 0.0
        %v4179 = vmax.f32 %v4069, 0.0
        %v4180 = vmax.f32 %v4140, 0.0
        %v4181 = vmax.f32 %v4142, 0.0
        %v4182 = vmax.f32 %v4071, 0.0
        %v4183 = vmax.f32 %v4073, 0.0
        %v4184 = vmax.f32 %v4144, 0.0
        %v4185 = vmax.f32 %v4146, 0.0
        %v4186 = vmax.f32 %v4077, 0.0
        %v4187 = vmax.f32 %v4079, 0.0
        %v4188 = vmax.f32 %v4150, 0.0
        %v4189 = vmax.f32 %v4152, 0.0
        %v4190 = vmax.f32 %v4081, 0.0
        %v4191 = vmax.f32 %v4083, 0.0
        %v4192 = vmax.f32 %v4154, 0.0
        %v4193 = vmax.f32 %v4156, 0.0
        %v4194 = vmax.f32 %v4087, 0.0
        %v4195 = vmax.f32 %v4089, 0.0
        %v4196 = vmax.f32 %v4160, 0.0
        %v4197 = vmax.f32 %v4162, 0.0
        %v4198 = vmax.f32 %v4091, 0.0
        %v4199 = vmax.f32 %v4093, 0.0
        %v4200 = vmax.f32 %v4164, 0.0
        %v4201 = vmax.f32 %v4166, 0.0
        %v4202 = vmax.f32 %v4097, 0.0
        %v4203 = vmax.f32 %v4099, 0.0
        %v4204 = vmax.f32 %v4170, 0.0
        %v4205 = vmax.f32 %v4172, 0.0
        %v4206 = vmax.f32 %v4101, 0.0
        %v4207 = vmax.f32 %v4103, 0.0
        %v4208 = vmax.f32 %v4174, 0.0
        %v4209 = vmax.f32 %v4176, 0.0
        %4210 = vst [vmem:[%s244] sm:$0xff] %v4178
        %4211 = vst [vmem:[%s244 + $0x8] sm:$0xff] %v4179
        %4212 = vst [vmem:[%s244 + $0x10] sm:$0xff] %v4180
        %4213 = vst [vmem:[%s244 + $0x18] sm:$0xff] %v4181
        %4214 = vst [vmem:[%s244 + $0x20] sm:$0xff] %v4182
        %4215 = vst [vmem:[%s244 + $0x28] sm:$0xff] %v4183
        %4216 = vst [vmem:[%s244 + $0x30] sm:$0xff] %v4184
        %4217 = vst [vmem:[%s244 + $0x38] sm:$0xff] %v4185
        %4218 = vst [vmem:[%s244 + $0x40] sm:$0xff] %v4186
        %4219 = vst [vmem:[%s244 + $0x48] sm:$0xff] %v4187
        %4220 = vst [vmem:[%s244 + $0x50] sm:$0xff] %v4188
        %4221 = vst [vmem:[%s244 + $0x58] sm:$0xff] %v4189
        %4222 = vst [vmem:[%s244 + $0x60] sm:$0xff] %v4190
        %4223 = vst [vmem:[%s244 + $0x68] sm:$0xff] %v4191
        %4224 = vst [vmem:[%s244 + $0x70] sm:$0xff] %v4192
        %4225 = vst [vmem:[%s244 + $0x78] sm:$0xff] %v4193
        %4226 = vst [vmem:[%s244 + $0x80] sm:$0xff] %v4194
        %4227 = vst [vmem:[%s244 + $0x88] sm:$0xff] %v4195
        %4228 = vst [vmem:[%s244 + $0x90] sm:$0xff] %v4196
        %4229 = vst [vmem:[%s244 + $0x98] sm:$0xff] %v4197
        %4230 = vst [vmem:[%s244 + $0xa0] sm:$0xff] %v4198
        %4231 = vst [vmem:[%s244 + $0xa8] sm:$0xff] %v4199
        %4232 = vst [vmem:[%s244 + $0xb0] sm:$0xff] %v4200
        %4233 = vst [vmem:[%s244 + $0xb8] sm:$0xff] %v4201
        %4234 = vst [vmem:[%s244 + $0xc0] sm:$0xff] %v4202
        %4235 = vst [vmem:[%s244 + $0xc8] sm:$0xff] %v4203
        %4236 = vst [vmem:[%s244 + $0xd0] sm:$0xff] %v4204
        %4237 = vst [vmem:[%s244 + $0xd8] sm:$0xff] %v4205
        %4238 = vst [vmem:[%s244 + $0xe0] sm:$0xff] %v4206
        %4239 = vst [vmem:[%s244 + $0xe8] sm:$0xff] %v4207
        %4240 = vst [vmem:[%s244 + $0xf0] sm:$0xff] %v4208
        %4241 = vst [vmem:[%s244 + $0xf8] sm:$0xff] %v4209
        %s4242 = sand.u32 %s124, 1
        %s4243 = scalar_lea.sflag [#allocation4], %s4242
        %s4244 = sand.u32 %s124, 1
        %s4245 = smul.addr %s4244, 256
        %s4246 = scalar_lea.vmem [#allocation7], %s4245
        // Predicated region
        $region45: #{tpu_custom_call.1} parent=35 // pred_check
          %p4247 = pneg %p134
        $region46: #{tpu_custom_call.1} parent=35 // pred_check_branch
          %4249 = sbr.rel (%p4247) target = $region48
        $region47: #{tpu_custom_call.1} parent=35 // pred_region
          %s4250 = smul.u32 4, %s22
          %s4252 = ssub.s32 4096, 4096
          %4253 = vsyncadd %s4243, %s4252
          %s4254 = smul.addr %s4250, 128
          %s4255 = scalar_lea.hbm %s4, %s4254
          %s4256 = sshll.u32 %s4246, 4
          %s4257 = int_to_ptr.vmem [resolvable:$true] %s4256
          %4262 = dma.vmem_to_hbm [thread:$0]  %s4257, 4096, %s4255, %s4243, 512, 1024, 32
        $region48: #{tpu_custom_call.1} parent=35 // pred_fallthru
          _
      $region36: #{tpu_custom_call.1} parent=5 // pred_fallthru
        _
      %p4263 = scmp.le.s32.totalorder 2, %s17
      // Predicated region
      $region49: #{tpu_custom_call.1} parent=5 // pred_check
        %p4264 = pneg %p4263
      $region50: #{tpu_custom_call.1} parent=5 // pred_check_branch
        %4266 = sbr.rel (%p4264) target = $region52
      $region51: #{tpu_custom_call.1} parent=5 // pred_region
        %s4267 = ssub.s32 %s17, 2
        // Predicated region
        $region53: #{tpu_custom_call.1} parent=51 // pred_check
          %p4268 = pneg %p140
        $region54: #{tpu_custom_call.1} parent=51 // pred_check_branch
          %4270 = sbr.rel (%p4268) target = $region56
        $region55: #{tpu_custom_call.1} parent=51 // pred_region
          %s4271 = sand.u32 %s125, 1
          %s4272 = scalar_lea.sflag [#allocation4], %s4271
          %s4273 = sand.u32 %s125, 1
          %s4274 = smul.addr %s4273, 256
          %s4275 = scalar_lea.vmem [#allocation7], %s4274
          %4276 = dma.done %s4272, 4096
        $region56: #{tpu_custom_call.1} parent=51 // pred_fallthru
          _
      $region52: #{tpu_custom_call.1} parent=5 // pred_fallthru
        _
    $region6: #{tpu_custom_call.1} parent=1 // loop_footer
      %s21 = sadd.s32 1, %s17
    $region7: #{tpu_custom_call.1} parent=1 // loop_footer_branch
      %16 = sbr.rel target = $region3
    $region8: #{tpu_custom_call.1} parent=1 // loop_exit
      _
    %4277 = vsyncpa [#allocation3], 1
    %s4278 = scalar_lea.sflag [#allocation3], 1
    %4279 = vsyncpa %s4278, 1
    %4280 = vsyncpa [#allocation6], 1
    %4281 = vsyncpa [#allocation4], 1
    %s4282 = scalar_lea.sflag [#allocation4], 1
    %4283 = vsyncpa %s4282, 1

</llo_original>
